<compile_context>
chip_gen: v6e
topology: v6e:2x2x1
jax: 0.10.0
libtpu: 0.0.40
codegen_flags: <defaults>
</compile_context>

<pallas_src>
import functools

import jax
import jax.numpy as jnp
from jax.experimental import pallas as pl
from jax.experimental.pallas import tpu as pltpu


_TM = 512      # target activation M tile for the 1x1 matmul kernels
_LANES = 128


def _vmem_limit_bytes(block_bytes):
    # ~2x for double buffering + headroom; >= default scoped limit, v7x-safe cap.
    return int(min(64 * 2**20, max(32 * 2**20, 4 * block_bytes)))


# --------------------------------------------------------------------------
# Weight-resident 1x1-conv matmul kernels (+ BN shift, optional residual/ReLU)
# --------------------------------------------------------------------------
def _mm_bn_act_kernel(x_ref, w_ref, b_ref, o_ref, *, relu):
    # x_ref: (tm, K) bf16   w_ref: (K, N) bf16 (resident)   b_ref: (1, N) f32
    y = jnp.dot(x_ref[...], w_ref[...], preferred_element_type=jnp.float32)
    y = y + b_ref[...]
    if relu:
        y = jnp.maximum(y, 0.0)
    o_ref[...] = y.astype(o_ref.dtype)


def _mm_bn_res_relu_kernel(x_ref, w_ref, b_ref, r_ref, o_ref):
    # Final 1x1 conv of the bottleneck: matmul + BN shift + residual add + ReLU.
    y = jnp.dot(x_ref[...], w_ref[...], preferred_element_type=jnp.float32)
    y = y + b_ref[...] + r_ref[...].astype(jnp.float32)
    o_ref[...] = jnp.maximum(y, 0.0).astype(o_ref.dtype)


def _pick_tm(m):
    """Largest power-of-two M tile <= _TM that still leaves >=2 grid blocks."""
    tm = min(_TM, m)
    if m >= 16:
        tm = min(tm, 1 << ((m // 2).bit_length() - 1))
    return max(tm, 8)


def matmul_bn_act(x, w, shift, *, relu, residual=None, alias_residual=False):
    """y = relu?(x @ w + shift [+ residual]) as a weight-resident Pallas kernel.

    x: (M, K) activations, w: (K, N) bf16 (BN scale pre-folded), shift: (1, N)
    f32.  Weight / shift use full-extent blocks with a constant index_map (read
    from HBM once, VMEM-resident); only (tm, K) activation tiles stream.
    """
    m, k = x.shape
    kw_, n = w.shape
    assert k == kw_
    mp = -(-m // 8) * 8
    tm = _pick_tm(mp)
    mp = -(-mp // tm) * tm

    xb = x.astype(jnp.bfloat16)
    if mp != m:
        xb = jnp.pad(xb, ((0, mp - m), (0, 0)))

    in_specs = [
        pl.BlockSpec((tm, k), lambda i: (i, 0)),   # activation tiles stream
        pl.BlockSpec((k, n), lambda i: (0, 0)),    # weight: VMEM-resident
        pl.BlockSpec((1, n), lambda i: (0, 0)),    # BN shift: VMEM-resident
    ]
    args = [xb, w, shift]
    aliases = {}
    if residual is None:
        kernel = functools.partial(_mm_bn_act_kernel, relu=relu)
    else:
        rb = residual.astype(jnp.bfloat16)
        if mp != m:
            rb = jnp.pad(rb, ((0, mp - m), (0, 0)))
        in_specs.append(pl.BlockSpec((tm, n), lambda i: (i, 0)))
        args.append(rb)
        kernel = _mm_bn_res_relu_kernel
        if alias_residual:
            aliases = {3: 0}   # donate the residual HBM buffer to the output

    block_bytes = ((tm * k + k * n + tm * n) * 2 + n * 4
                   + (tm * n * 2 if residual is not None else 0))
    out = pl.pallas_call(
        kernel,
        out_shape=jax.ShapeDtypeStruct((mp, n), jnp.bfloat16),
        grid=(mp // tm,),
        in_specs=in_specs,
        out_specs=pl.BlockSpec((tm, n), lambda i: (i, 0)),
        compiler_params=pltpu.CompilerParams(
            dimension_semantics=("parallel",),
            vmem_limit_bytes=_vmem_limit_bytes(block_bytes)),
        input_output_aliases=aliases,
    )(*args)
    return out if mp == m else out[:m]


# --------------------------------------------------------------------------
# Grouped 3x3 conv kernel: 9 taps folded in-kernel, no im2col in HBM
# --------------------------------------------------------------------------
def _conv3x3_kernel(x_ref, w_ref, b_ref, o_ref, *, taps, m2):
    # x_ref: (s*s, 1, Hq*Wq, Cblk) bf16 polyphase-split padded activation
    # w_ref: (1, 9, Cblk, Nblk)   bf16 per-super-group block-diagonal weight
    # b_ref: (1, 1, Nblk) f32     o_ref: (1, M2, Nblk) bf16
    acc = None
    for t, (phase, off) in enumerate(taps):
        a = x_ref[phase, 0, pl.ds(off, m2), :]      # contiguous static slice
        p = jnp.dot(a, w_ref[0, t], preferred_element_type=jnp.float32)
        acc = p if acc is None else acc + p
    y = acc + b_ref[0]
    o_ref[0] = jnp.maximum(y, 0.0).astype(o_ref.dtype)


def grouped_conv3x3_bn_relu(x, w_g, shift_g, *, stride):
    """3x3 grouped conv (padding=1, stride) + BN shift + ReLU.

    x: (N, H, W, Cb) bf16; w_g: (ng, 9, Cblk, Nblk) bf16 (BN scale folded,
    block-diagonal per super-group); shift_g: (ng, 1, Nblk) f32.
    Returns (N, Ho, Wo, Cb) bf16.
    """
    n, h, w, cb = x.shape
    ng, _, cblk, nblk = w_g.shape
    s = stride
    ho = (h + 2 - 3) // s + 1
    wo = (w + 2 - 3) // s + 1
    qmax = 2 // s                       # max quotient offset of a 3x3 tap
    hq = ho + qmax + 1                  # +1 row: flattened-slice overflow slack
    wq = wo + qmax
    # Pad once (top/left = 1, bottom/right up to the polyphase grid) and
    # phase-split so that every tap becomes a contiguous slice of a VMEM block.
    xp = jnp.pad(x, ((0, 0), (1, hq * s - h - 1), (1, wq * s - w - 1), (0, 0)))
    if s > 1:
        xp = xp.reshape(n, hq, s, wq, s, cb).transpose(2, 4, 0, 1, 3, 5)
    xp = xp.reshape(s * s, n, hq * wq, cb)

    m2 = ho * wq                        # wo valid + (wq - wo) garbage cols / row
    taps = tuple(((di % s) * s + (dj % s), (di // s) * wq + (dj // s))
                 for di in range(3) for dj in range(3))
    kernel = functools.partial(_conv3x3_kernel, taps=taps, m2=m2)

    block_bytes = ((s * s * hq * wq * cblk + 9 * cblk * nblk + m2 * nblk) * 2
                   + nblk * 4 + m2 * nblk * 4)
    out = pl.pallas_call(
        kernel,
        out_shape=jax.ShapeDtypeStruct((n, m2, ng * nblk), jnp.bfloat16),
        grid=(n, ng),
        in_specs=[
            pl.BlockSpec((s * s, 1, hq * wq, cblk), lambda b, j: (0, b, 0, j)),
            pl.BlockSpec((1, 9, cblk, nblk), lambda b, j: (j, 0, 0, 0)),
            pl.BlockSpec((1, 1, nblk), lambda b, j: (j, 0, 0)),
        ],
        out_specs=pl.BlockSpec((1, m2, nblk), lambda b, j: (b, 0, j)),
        compiler_params=pltpu.CompilerParams(
            dimension_semantics=("parallel", "parallel"),
            vmem_limit_bytes=_vmem_limit_bytes(block_bytes)),
    )(xp, w_g, shift_g)
    # Drop the (wq - wo) garbage columns produced by the flattened tap slices.
    return out.reshape(n, ho, wq, ng * nblk)[:, :, :wo, :]


# --------------------------------------------------------------------------
# Parameter construction: BN folding, bf16 cast, kernel-friendly weight layout
# --------------------------------------------------------------------------
def make_conv_bn(key, cin, cout, k, groups):
    kw_, kg, kb, km, kv = jax.random.split(key, 5)
    return dict(
        w=0.1 * jax.random.normal(kw_, (cout, cin // groups, k, k), jnp.float32),
        gamma=1.0 + 0.1 * jax.random.normal(kg, (cout,), jnp.float32),
        beta=0.1 * jax.random.normal(kb, (cout,), jnp.float32),
        mean=0.1 * jax.random.normal(km, (cout,), jnp.float32),
        var=1.0 + 0.5 * jax.random.uniform(kv, (cout,), jnp.float32),
    )


def _bn_scale_shift(p, eps=1e-5):
    scale = p["gamma"] * jax.lax.rsqrt(p["var"] + eps)
    return scale, p["beta"] - p["mean"] * scale


def _fold_1x1(p):
    scale, shift = _bn_scale_shift(p)
    w = p["w"][:, :, 0, 0].T * scale[None, :]          # (Cin, Cout), scale folded
    return w.astype(jnp.bfloat16), shift.reshape(1, -1).astype(jnp.float32)


def _pick_supergroup(groups, cg, cgo, lane=_LANES):
    """Fewest groups per weight block that keeps channel blocks lane-dense."""
    want = min(groups, -(-lane // cgo))
    for sg in range(want, groups + 1):
        if groups % sg:
            continue
        if sg == groups or ((sg * cg) % lane == 0 and (sg * cgo) % lane == 0):
            return sg
    return groups


def _fold_grouped_3x3(p, groups):
    cout, cg, kh, kw = p["w"].shape
    cgo = cout // groups
    sg = _pick_supergroup(groups, cg, cgo)
    ng = groups // sg
    scale, shift = _bn_scale_shift(p)
    # (Cout, cg, kh, kw) -> (ng, kh, kw, sg, cg, cgo)
    wg = p["w"].reshape(ng, sg, cgo, cg, kh, kw).transpose(0, 4, 5, 1, 3, 2)
    eye = jnp.eye(sg, dtype=wg.dtype)
    # block-diagonal only over the sg groups packed inside one super-group block
    wbd = jnp.einsum("nhwgci,gG->nhwgcGi", wg, eye)
    wbd = wbd.reshape(ng, kh * kw, sg * cg, sg * cgo)
    wbd = wbd * scale.reshape(ng, 1, 1, sg * cgo)
    return (wbd.astype(jnp.bfloat16),
            shift.reshape(ng, 1, sg * cgo).astype(jnp.float32))


def make_bottleneck_params(key, cin, cout, stride, bottleneck_width, cardinality,
                           reduction=4):
    cb = int(cout // reduction * (bottleneck_width / 64)) * cardinality
    k1, k2, k3, kr = jax.random.split(key, 4)
    raw = dict(conv1=make_conv_bn(k1, cin, cb, 1, 1),
               conv2=make_conv_bn(k2, cb, cb, 3, cardinality),
               conv3=make_conv_bn(k3, cb, cout, 1, 1))
    if cin != cout or stride != 1:
        raw["res"] = make_conv_bn(kr, cin, cout, 1, 1)

    folded = {}
    folded["w1"], folded["b1"] = _fold_1x1(raw["conv1"])
    folded["w2"], folded["b2"] = _fold_grouped_3x3(raw["conv2"], cardinality)
    folded["w3"], folded["b3"] = _fold_1x1(raw["conv3"])
    if "res" in raw:
        folded["wr"], folded["br"] = _fold_1x1(raw["res"])
    return raw, folded


# --------------------------------------------------------------------------
# Forward pass (ResNextBottleNeckLayer)
# --------------------------------------------------------------------------
def bottleneck_forward(x_nchw, params, *, stride):
    x = jnp.transpose(x_nchw, (0, 2, 3, 1)).astype(jnp.bfloat16)   # NHWC, bf16
    n, h, w, cin = x.shape
    cb = params["w1"].shape[1]
    cout = params["w3"].shape[1]

    # conv1: 1x1 conv + BN + ReLU (weight-resident matmul)
    h1 = matmul_bn_act(x.reshape(n * h * w, cin), params["w1"], params["b1"],
                       relu=True).reshape(n, h, w, cb)

    # conv2: 3x3 grouped conv (stride) + BN + ReLU, taps + groups in-kernel
    h2 = grouped_conv3x3_bn_relu(h1, params["w2"], params["b2"], stride=stride)
    ho, wo = h2.shape[1], h2.shape[2]

    # residual branch: 1x1 stride-s conv + BN (no activation), or identity
    if "wr" in params:
        xs = x[:, ::stride, ::stride, :]   # TODO(synk): fold into BlockSpec
        res = matmul_bn_act(xs.reshape(n * ho * wo, cin), params["wr"],
                            params["br"], relu=False)
        alias = True                       # fresh buffer, dead afterwards: donate
    else:
        res = x.reshape(n * h * w, cin)
        alias = False                      # identity residual is the layer input

    # conv3: 1x1 conv + BN fused with residual add + final ReLU
    out = matmul_bn_act(h2.reshape(n * ho * wo, cb), params["w3"], params["b3"],
                        relu=True, residual=res, alias_residual=alias)
    out = out.reshape(n, ho, wo, cout).astype(jnp.float32)
    return jnp.transpose(out, (0, 3, 1, 2))            # NHWC -> NCHW


# --------------------------------------------------------------------------
# Pure-JAX f32 reference (numerical validation of the Pallas path)
# --------------------------------------------------------------------------
def _ref_conv_bn(x, p, *, stride, groups, relu, eps=1e-5):
    kh = p["w"].shape[-1]
    w_hwio = jnp.transpose(p["w"], (2, 3, 1, 0))   # (kh, kw, Cin/g, Cout)
    y = jax.lax.conv_general_dilated(
        x, w_hwio, window_strides=(stride, stride),
        padding=[(kh // 2, kh // 2)] * 2,
        dimension_numbers=("NHWC", "HWIO", "NHWC"),
        feature_group_count=groups)
    scale = p["gamma"] / jnp.sqrt(p["var"] + eps)
    y = y * scale + (p["beta"] - p["mean"] * scale)
    return jnp.maximum(y, 0.0) if relu else y


def ref_bottleneck(x_nchw, raw, *, stride, cardinality):
    x = jnp.transpose(x_nchw, (0, 2, 3, 1)).astype(jnp.float32)
    h = _ref_conv_bn(x, raw["conv1"], stride=1, groups=1, relu=True)
    h = _ref_conv_bn(h, raw["conv2"], stride=stride, groups=cardinality, relu=True)
    h = _ref_conv_bn(h, raw["conv3"], stride=1, groups=1, relu=False)
    if "res" in raw:
        r = _ref_conv_bn(x, raw["res"], stride=stride, groups=1, relu=False)
    else:
        r = x
    y = jnp.maximum(h + r, 0.0)
    return jnp.transpose(y, (0, 3, 1, 2))


# --------------------------------------------------------------------------
# Demo
# --------------------------------------------------------------------------
if __name__ == "__main__":
    B, CIN, H, W = 2, 4, 16, 16
    COUT, STRIDE, CARDINALITY, BOTTLENECK_WIDTH, REDUCTION = 16, 2, 2, 64, 4

    key = jax.random.PRNGKey(0)
    k_params, k_x = jax.random.split(key)
    raw, params = make_bottleneck_params(
        k_params, CIN, COUT, STRIDE, BOTTLENECK_WIDTH, CARDINALITY, REDUCTION)
    x = jax.random.normal(k_x, (B, CIN, H, W), jnp.float32)   # NCHW like PyTorch

    fwd = jax.jit(functools.partial(bottleneck_forward, stride=STRIDE))
    out = jax.block_until_ready(fwd(x, params))

    assert out.shape == (B, COUT, H // STRIDE, W // STRIDE), out.shape
    assert bool(jnp.all(jnp.isfinite(out)))
    assert bool(jnp.all(out >= 0.0))   # final op is ReLU

    # Compare against a pure-JAX f32 reference of the same module (bf16 tolerance).
    ref = ref_bottleneck(x, raw, stride=STRIDE, cardinality=CARDINALITY)
    max_err = float(jnp.max(jnp.abs(out - ref)))
    assert max_err < 1e-1, f"max abs error {max_err}"

    print("KERNEL_OK")
</pallas_src>

<mosaic_0001>
module attributes {stable_mosaic.version = 11 : i64} {
  func.func @_mm_bn_act_kernel(%arg0: i32, %arg1: memref<256x4xbf16, #tpu.memory_space<vmem>>, %arg2: memref<4x8xbf16, #tpu.memory_space<vmem>>, %arg3: memref<1x8xf32, #tpu.memory_space<vmem>>, %arg4: memref<256x8xbf16, #tpu.memory_space<vmem>>) attributes {dimension_semantics = [#tpu.dimension_semantics<parallel>], iteration_bounds = array<i64: 2>, scalar_prefetch = 0 : i64, scratch_operands = 0 : i64, tpu.core_type = #tpu.core_type<tc>, window_params = [{transform_indices = @transform_0, window_bounds = array<i64: 256, 4>}, {pipeline_mode = #tpu.pipeline_mode<synchronous>, transform_indices = @transform_1, window_bounds = array<i64: 4, 8>}, {pipeline_mode = #tpu.pipeline_mode<synchronous>, transform_indices = @transform_2, window_bounds = array<i64: 1, 8>}, {transform_indices = @transform_3, window_bounds = array<i64: 256, 8>}]} {
    %c0 = arith.constant 0 : index
    %c0_0 = arith.constant 0 : index
    %0 = vector.load %arg1[%c0, %c0_0] : memref<256x4xbf16, #tpu.memory_space<vmem>>, vector<256x4xbf16>
    %c0_1 = arith.constant 0 : index
    %c0_2 = arith.constant 0 : index
    %1 = vector.load %arg2[%c0_1, %c0_2] : memref<4x8xbf16, #tpu.memory_space<vmem>>, vector<4x8xbf16>
    %cst = arith.constant dense<0.000000e+00> : vector<256x8xf32>
    %2 = tpu.matmul %0, %1, %cst {dimension_numbers = #tpu.dot_dimension_numbers<[1], [0], [0], [1], [0, 0, 1, 1], [], []>} : vector<256x4xbf16>, vector<4x8xbf16>, vector<256x8xf32> -> vector<256x8xf32>
    %c0_3 = arith.constant 0 : index
    %c0_4 = arith.constant 0 : index
    %3 = vector.load %arg3[%c0_3, %c0_4] : memref<1x8xf32, #tpu.memory_space<vmem>>, vector<1x8xf32>
    %4 = vector.broadcast %3 : vector<1x8xf32> to vector<256x8xf32>
    %5 = arith.addf %2, %4 : vector<256x8xf32>
    %cst_5 = arith.constant 0.000000e+00 : f32
    %6 = vector.broadcast %cst_5 : f32 to vector<256x8xf32>
    %7 = arith.maximumf %5, %6 : vector<256x8xf32>
    %8 = arith.truncf %7 : vector<256x8xf32> to vector<256x8xbf16>
    %c0_6 = arith.constant 0 : index
    %c0_7 = arith.constant 0 : index
    %9 = vector.load %arg4[%c0_6, %c0_7] : memref<256x8xbf16, #tpu.memory_space<vmem>>, vector<256x8xbf16>
    tpu.vector_store %arg4[%c0_6, %c0_7], %8 {strides = array<i32>} : memref<256x8xbf16, #tpu.memory_space<vmem>>, vector<256x8xbf16>,
    return
  }
  func.func @transform_0(%arg0: i32) -> (i32, i32) {
    %c0_i32 = arith.constant 0 : i32
    %c0_i32_0 = arith.constant 0 : i32
    return %arg0, %c0_i32 : i32, i32
  }
  func.func @transform_1(%arg0: i32) -> (i32, i32) {
    %c0_i32 = arith.constant 0 : i32
    %c0_i32_0 = arith.constant 0 : i32
    %c0_i32_1 = arith.constant 0 : i32
    return %c0_i32, %c0_i32_0 : i32, i32
  }
  func.func @transform_2(%arg0: i32) -> (i32, i32) {
    %c0_i32 = arith.constant 0 : i32
    %c0_i32_0 = arith.constant 0 : i32
    %c0_i32_1 = arith.constant 0 : i32
    return %c0_i32, %c0_i32_0 : i32, i32
  }
  func.func @transform_3(%arg0: i32) -> (i32, i32) {
    %c0_i32 = arith.constant 0 : i32
    %c0_i32_0 = arith.constant 0 : i32
    return %arg0, %c0_i32 : i32, i32
  }
}

module attributes {stable_mosaic.version = 11 : i64} {
  func.func @_conv3x3_kernel(%arg0: i32, %arg1: i32, %arg2: memref<4x1x90x8xbf16, #tpu.memory_space<vmem>>, %arg3: memref<1x9x8x8xbf16, #tpu.memory_space<vmem>>, %arg4: memref<1x1x8xf32, #tpu.memory_space<vmem>>, %arg5: memref<1x72x8xbf16, #tpu.memory_space<vmem>>) attributes {dimension_semantics = [#tpu.dimension_semantics<parallel>, #tpu.dimension_semantics<parallel>], iteration_bounds = array<i64: 2, 1>, scalar_prefetch = 0 : i64, scratch_operands = 0 : i64, tpu.core_type = #tpu.core_type<tc>, window_params = [{transform_indices = @transform_0, window_bounds = array<i64: 4, 1, 90, 8>}, {transform_indices = @transform_1, window_bounds = array<i64: 1, 9, 8, 8>}, {transform_indices = @transform_2, window_bounds = array<i64: 1, 1, 8>}, {transform_indices = @transform_3, window_bounds = array<i64: 1, 72, 8>}]} {
    %c0 = arith.constant 0 : index
    %c0_0 = arith.constant 0 : index
    %c0_1 = arith.constant 0 : index
    %c0_2 = arith.constant 0 : index
    %0 = vector.load %arg2[%c0, %c0_0, %c0_1, %c0_2] : memref<4x1x90x8xbf16, #tpu.memory_space<vmem>>, vector<1x1x72x8xbf16>
    %1 = vector.shape_cast %0 : vector<1x1x72x8xbf16> to vector<72x8xbf16>
    %c0_3 = arith.constant 0 : index
    %c0_4 = arith.constant 0 : index
    %c0_5 = arith.constant 0 : index
    %c0_6 = arith.constant 0 : index
    %2 = vector.load %arg3[%c0_3, %c0_4, %c0_5, %c0_6] : memref<1x9x8x8xbf16, #tpu.memory_space<vmem>>, vector<1x1x8x8xbf16>
    %3 = vector.shape_cast %2 : vector<1x1x8x8xbf16> to vector<8x8xbf16>
    %cst = arith.constant dense<0.000000e+00> : vector<72x8xf32>
    %4 = tpu.matmul %1, %3, %cst {dimension_numbers = #tpu.dot_dimension_numbers<[1], [0], [0], [1], [0, 0, 1, 1], [], []>} : vector<72x8xbf16>, vector<8x8xbf16>, vector<72x8xf32> -> vector<72x8xf32>
    %c1 = arith.constant 1 : index
    %c0_7 = arith.constant 0 : index
    %c0_8 = arith.constant 0 : index
    %c0_9 = arith.constant 0 : index
    %5 = vector.load %arg2[%c1, %c0_7, %c0_8, %c0_9] : memref<4x1x90x8xbf16, #tpu.memory_space<vmem>>, vector<1x1x72x8xbf16>
    %6 = vector.shape_cast %5 : vector<1x1x72x8xbf16> to vector<72x8xbf16>
    %c0_10 = arith.constant 0 : index
    %c1_11 = arith.constant 1 : index
    %c0_12 = arith.constant 0 : index
    %c0_13 = arith.constant 0 : index
    %7 = vector.load %arg3[%c0_10, %c1_11, %c0_12, %c0_13] : memref<1x9x8x8xbf16, #tpu.memory_space<vmem>>, vector<1x1x8x8xbf16>
    %8 = vector.shape_cast %7 : vector<1x1x8x8xbf16> to vector<8x8xbf16>
    %cst_14 = arith.constant dense<0.000000e+00> : vector<72x8xf32>
    %9 = tpu.matmul %6, %8, %cst_14 {dimension_numbers = #tpu.dot_dimension_numbers<[1], [0], [0], [1], [0, 0, 1, 1], [], []>} : vector<72x8xbf16>, vector<8x8xbf16>, vector<72x8xf32> -> vector<72x8xf32>
    %10 = arith.addf %4, %9 : vector<72x8xf32>
    %c0_15 = arith.constant 0 : index
    %c0_16 = arith.constant 0 : index
    %c1_17 = arith.constant 1 : index
    %c0_18 = arith.constant 0 : index
    %11 = vector.load %arg2[%c0_15, %c0_16, %c1_17, %c0_18] : memref<4x1x90x8xbf16, #tpu.memory_space<vmem>>, vector<1x1x72x8xbf16>
    %12 = vector.shape_cast %11 : vector<1x1x72x8xbf16> to vector<72x8xbf16>
    %c0_19 = arith.constant 0 : index
    %c2 = arith.constant 2 : index
    %c0_20 = arith.constant 0 : index
    %c0_21 = arith.constant 0 : index
    %13 = vector.load %arg3[%c0_19, %c2, %c0_20, %c0_21] : memref<1x9x8x8xbf16, #tpu.memory_space<vmem>>, vector<1x1x8x8xbf16>
    %14 = vector.shape_cast %13 : vector<1x1x8x8xbf16> to vector<8x8xbf16>
    %cst_22 = arith.constant dense<0.000000e+00> : vector<72x8xf32>
    %15 = tpu.matmul %12, %14, %cst_22 {dimension_numbers = #tpu.dot_dimension_numbers<[1], [0], [0], [1], [0, 0, 1, 1], [], []>} : vector<72x8xbf16>, vector<8x8xbf16>, vector<72x8xf32> -> vector<72x8xf32>
    %16 = arith.addf %10, %15 : vector<72x8xf32>
    %c2_23 = arith.constant 2 : index
    %c0_24 = arith.constant 0 : index
    %c0_25 = arith.constant 0 : index
    %c0_26 = arith.constant 0 : index
    %17 = vector.load %arg2[%c2_23, %c0_24, %c0_25, %c0_26] : memref<4x1x90x8xbf16, #tpu.memory_space<vmem>>, vector<1x1x72x8xbf16>
    %18 = vector.shape_cast %17 : vector<1x1x72x8xbf16> to vector<72x8xbf16>
    %c0_27 = arith.constant 0 : index
    %c3 = arith.constant 3 : index
    %c0_28 = arith.constant 0 : index
    %c0_29 = arith.constant 0 : index
    %19 = vector.load %arg3[%c0_27, %c3, %c0_28, %c0_29] : memref<1x9x8x8xbf16, #tpu.memory_space<vmem>>, vector<1x1x8x8xbf16>
    %20 = vector.shape_cast %19 : vector<1x1x8x8xbf16> to vector<8x8xbf16>
    %cst_30 = arith.constant dense<0.000000e+00> : vector<72x8xf32>
    %21 = tpu.matmul %18, %20, %cst_30 {dimension_numbers = #tpu.dot_dimension_numbers<[1], [0], [0], [1], [0, 0, 1, 1], [], []>} : vector<72x8xbf16>, vector<8x8xbf16>, vector<72x8xf32> -> vector<72x8xf32>
    %22 = arith.addf %16, %21 : vector<72x8xf32>
    %c3_31 = arith.constant 3 : index
    %c0_32 = arith.constant 0 : index
    %c0_33 = arith.constant 0 : index
    %c0_34 = arith.constant 0 : index
    %23 = vector.load %arg2[%c3_31, %c0_32, %c0_33, %c0_34] : memref<4x1x90x8xbf16, #tpu.memory_space<vmem>>, vector<1x1x72x8xbf16>
    %24 = vector.shape_cast %23 : vector<1x1x72x8xbf16> to vector<72x8xbf16>
    %c0_35 = arith.constant 0 : index
    %c4 = arith.constant 4 : index
    %c0_36 = arith.constant 0 : index
    %c0_37 = arith.constant 0 : index
    %25 = vector.load %arg3[%c0_35, %c4, %c0_36, %c0_37] : memref<1x9x8x8xbf16, #tpu.memory_space<vmem>>, vector<1x1x8x8xbf16>
    %26 = vector.shape_cast %25 : vector<1x1x8x8xbf16> to vector<8x8xbf16>
    %cst_38 = arith.constant dense<0.000000e+00> : vector<72x8xf32>
    %27 = tpu.matmul %24, %26, %cst_38 {dimension_numbers = #tpu.dot_dimension_numbers<[1], [0], [0], [1], [0, 0, 1, 1], [], []>} : vector<72x8xbf16>, vector<8x8xbf16>, vector<72x8xf32> -> vector<72x8xf32>
    %28 = arith.addf %22, %27 : vector<72x8xf32>
    %c2_39 = arith.constant 2 : index
    %c0_40 = arith.constant 0 : index
    %c1_41 = arith.constant 1 : index
    %c0_42 = arith.constant 0 : index
    %29 = vector.load %arg2[%c2_39, %c0_40, %c1_41, %c0_42] : memref<4x1x90x8xbf16, #tpu.memory_space<vmem>>, vector<1x1x72x8xbf16>
    %30 = vector.shape_cast %29 : vector<1x1x72x8xbf16> to vector<72x8xbf16>
    %c0_43 = arith.constant 0 : index
    %c5 = arith.constant 5 : index
    %c0_44 = arith.constant 0 : index
    %c0_45 = arith.constant 0 : index
    %31 = vector.load %arg3[%c0_43, %c5, %c0_44, %c0_45] : memref<1x9x8x8xbf16, #tpu.memory_space<vmem>>, vector<1x1x8x8xbf16>
    %32 = vector.shape_cast %31 : vector<1x1x8x8xbf16> to vector<8x8xbf16>
    %cst_46 = arith.constant dense<0.000000e+00> : vector<72x8xf32>
    %33 = tpu.matmul %30, %32, %cst_46 {dimension_numbers = #tpu.dot_dimension_numbers<[1], [0], [0], [1], [0, 0, 1, 1], [], []>} : vector<72x8xbf16>, vector<8x8xbf16>, vector<72x8xf32> -> vector<72x8xf32>
    %34 = arith.addf %28, %33 : vector<72x8xf32>
    %c0_47 = arith.constant 0 : index
    %c0_48 = arith.constant 0 : index
    %c9 = arith.constant 9 : index
    %c0_49 = arith.constant 0 : index
    %35 = vector.load %arg2[%c0_47, %c0_48, %c9, %c0_49] : memref<4x1x90x8xbf16, #tpu.memory_space<vmem>>, vector<1x1x72x8xbf16>
    %36 = vector.shape_cast %35 : vector<1x1x72x8xbf16> to vector<72x8xbf16>
    %c0_50 = arith.constant 0 : index
    %c6 = arith.constant 6 : index
    %c0_51 = arith.constant 0 : index
    %c0_52 = arith.constant 0 : index
    %37 = vector.load %arg3[%c0_50, %c6, %c0_51, %c0_52] : memref<1x9x8x8xbf16, #tpu.memory_space<vmem>>, vector<1x1x8x8xbf16>
    %38 = vector.shape_cast %37 : vector<1x1x8x8xbf16> to vector<8x8xbf16>
    %cst_53 = arith.constant dense<0.000000e+00> : vector<72x8xf32>
    %39 = tpu.matmul %36, %38, %cst_53 {dimension_numbers = #tpu.dot_dimension_numbers<[1], [0], [0], [1], [0, 0, 1, 1], [], []>} : vector<72x8xbf16>, vector<8x8xbf16>, vector<72x8xf32> -> vector<72x8xf32>
    %40 = arith.addf %34, %39 : vector<72x8xf32>
    %c1_54 = arith.constant 1 : index
    %c0_55 = arith.constant 0 : index
    %c9_56 = arith.constant 9 : index
    %c0_57 = arith.constant 0 : index
    %41 = vector.load %arg2[%c1_54, %c0_55, %c9_56, %c0_57] : memref<4x1x90x8xbf16, #tpu.memory_space<vmem>>, vector<1x1x72x8xbf16>
    %42 = vector.shape_cast %41 : vector<1x1x72x8xbf16> to vector<72x8xbf16>
    %c0_58 = arith.constant 0 : index
    %c7 = arith.constant 7 : index
    %c0_59 = arith.constant 0 : index
    %c0_60 = arith.constant 0 : index
    %43 = vector.load %arg3[%c0_58, %c7, %c0_59, %c0_60] : memref<1x9x8x8xbf16, #tpu.memory_space<vmem>>, vector<1x1x8x8xbf16>
    %44 = vector.shape_cast %43 : vector<1x1x8x8xbf16> to vector<8x8xbf16>
    %cst_61 = arith.constant dense<0.000000e+00> : vector<72x8xf32>
    %45 = tpu.matmul %42, %44, %cst_61 {dimension_numbers = #tpu.dot_dimension_numbers<[1], [0], [0], [1], [0, 0, 1, 1], [], []>} : vector<72x8xbf16>, vector<8x8xbf16>, vector<72x8xf32> -> vector<72x8xf32>
    %46 = arith.addf %40, %45 : vector<72x8xf32>
    %c0_62 = arith.constant 0 : index
    %c0_63 = arith.constant 0 : index
    %c10 = arith.constant 10 : index
    %c0_64 = arith.constant 0 : index
    %47 = vector.load %arg2[%c0_62, %c0_63, %c10, %c0_64] : memref<4x1x90x8xbf16, #tpu.memory_space<vmem>>, vector<1x1x72x8xbf16>
    %48 = vector.shape_cast %47 : vector<1x1x72x8xbf16> to vector<72x8xbf16>
    %c0_65 = arith.constant 0 : index
    %c8 = arith.constant 8 : index
    %c0_66 = arith.constant 0 : index
    %c0_67 = arith.constant 0 : index
    %49 = vector.load %arg3[%c0_65, %c8, %c0_66, %c0_67] : memref<1x9x8x8xbf16, #tpu.memory_space<vmem>>, vector<1x1x8x8xbf16>
    %50 = vector.shape_cast %49 : vector<1x1x8x8xbf16> to vector<8x8xbf16>
    %cst_68 = arith.constant dense<0.000000e+00> : vector<72x8xf32>
    %51 = tpu.matmul %48, %50, %cst_68 {dimension_numbers = #tpu.dot_dimension_numbers<[1], [0], [0], [1], [0, 0, 1, 1], [], []>} : vector<72x8xbf16>, vector<8x8xbf16>, vector<72x8xf32> -> vector<72x8xf32>
    %52 = arith.addf %46, %51 : vector<72x8xf32>
    %c0_69 = arith.constant 0 : index
    %c0_70 = arith.constant 0 : index
    %c0_71 = arith.constant 0 : index
    %53 = vector.load %arg4[%c0_69, %c0_70, %c0_71] : memref<1x1x8xf32, #tpu.memory_space<vmem>>, vector<1x1x8xf32>
    %54 = vector.shape_cast %53 : vector<1x1x8xf32> to vector<1x8xf32>
    %55 = vector.broadcast %54 : vector<1x8xf32> to vector<72x8xf32>
    %56 = arith.addf %52, %55 : vector<72x8xf32>
    %cst_72 = arith.constant 0.000000e+00 : f32
    %57 = vector.broadcast %cst_72 : f32 to vector<72x8xf32>
    %58 = arith.maximumf %56, %57 : vector<72x8xf32>
    %59 = arith.truncf %58 : vector<72x8xf32> to vector<72x8xbf16>
    %c0_73 = arith.constant 0 : index
    %c0_74 = arith.constant 0 : index
    %c0_75 = arith.constant 0 : index
    %60 = vector.load %arg5[%c0_73, %c0_74, %c0_75] : memref<1x72x8xbf16, #tpu.memory_space<vmem>>, vector<1x72x8xbf16>
    %61 = vector.shape_cast %60 : vector<1x72x8xbf16> to vector<72x8xbf16>
    %62 = vector.shape_cast %59 : vector<72x8xbf16> to vector<1x72x8xbf16>
    tpu.vector_store %arg5[%c0_73, %c0_74, %c0_75], %62 {strides = array<i32>} : memref<1x72x8xbf16, #tpu.memory_space<vmem>>, vector<1x72x8xbf16>,
    return
  }
  func.func @transform_0(%arg0: i32, %arg1: i32) -> (i32, i32, i32, i32) {
    %c0_i32 = arith.constant 0 : i32
    %c0_i32_0 = arith.constant 0 : i32
    %c0_i32_1 = arith.constant 0 : i32
    return %c0_i32, %arg0, %c0_i32_0, %arg1 : i32, i32, i32, i32
  }
  func.func @transform_1(%arg0: i32, %arg1: i32) -> (i32, i32, i32, i32) {
    %c0_i32 = arith.constant 0 : i32
    %c0_i32_0 = arith.constant 0 : i32
    %c0_i32_1 = arith.constant 0 : i32
    %c0_i32_2 = arith.constant 0 : i32
    return %arg1, %c0_i32, %c0_i32_0, %c0_i32_1 : i32, i32, i32, i32
  }
  func.func @transform_2(%arg0: i32, %arg1: i32) -> (i32, i32, i32) {
    %c0_i32 = arith.constant 0 : i32
    %c0_i32_0 = arith.constant 0 : i32
    %c0_i32_1 = arith.constant 0 : i32
    return %arg1, %c0_i32, %c0_i32_0 : i32, i32, i32
  }
  func.func @transform_3(%arg0: i32, %arg1: i32) -> (i32, i32, i32) {
    %c0_i32 = arith.constant 0 : i32
    %c0_i32_0 = arith.constant 0 : i32
    return %arg0, %c0_i32, %arg1 : i32, i32, i32
  }
}

module attributes {stable_mosaic.version = 11 : i64} {
  func.func @_mm_bn_res_relu_kernel(%arg0: i32, %arg1: memref<64x8xbf16, #tpu.memory_space<vmem>>, %arg2: memref<8x16xbf16, #tpu.memory_space<vmem>>, %arg3: memref<1x16xf32, #tpu.memory_space<vmem>>, %arg4: memref<64x16xbf16, #tpu.memory_space<vmem>>, %arg5: memref<64x16xbf16, #tpu.memory_space<vmem>>) attributes {dimension_semantics = [#tpu.dimension_semantics<parallel>], iteration_bounds = array<i64: 2>, scalar_prefetch = 0 : i64, scratch_operands = 0 : i64, tpu.core_type = #tpu.core_type<tc>, window_params = [{transform_indices = @transform_0, window_bounds = array<i64: 64, 8>}, {pipeline_mode = #tpu.pipeline_mode<synchronous>, transform_indices = @transform_1, window_bounds = array<i64: 8, 16>}, {pipeline_mode = #tpu.pipeline_mode<synchronous>, transform_indices = @transform_2, window_bounds = array<i64: 1, 16>}, {transform_indices = @transform_3, window_bounds = array<i64: 64, 16>}, {transform_indices = @transform_4, window_bounds = array<i64: 64, 16>}]} {
    %c0 = arith.constant 0 : index
    %c0_0 = arith.constant 0 : index
    %0 = vector.load %arg1[%c0, %c0_0] : memref<64x8xbf16, #tpu.memory_space<vmem>>, vector<64x8xbf16>
    %c0_1 = arith.constant 0 : index
    %c0_2 = arith.constant 0 : index
    %1 = vector.load %arg2[%c0_1, %c0_2] : memref<8x16xbf16, #tpu.memory_space<vmem>>, vector<8x16xbf16>
    %cst = arith.constant dense<0.000000e+00> : vector<64x16xf32>
    %2 = tpu.matmul %0, %1, %cst {dimension_numbers = #tpu.dot_dimension_numbers<[1], [0], [0], [1], [0, 0, 1, 1], [], []>} : vector<64x8xbf16>, vector<8x16xbf16>, vector<64x16xf32> -> vector<64x16xf32>
    %c0_3 = arith.constant 0 : index
    %c0_4 = arith.constant 0 : index
    %3 = vector.load %arg3[%c0_3, %c0_4] : memref<1x16xf32, #tpu.memory_space<vmem>>, vector<1x16xf32>
    %4 = vector.broadcast %3 : vector<1x16xf32> to vector<64x16xf32>
    %5 = arith.addf %2, %4 : vector<64x16xf32>
    %c0_5 = arith.constant 0 : index
    %c0_6 = arith.constant 0 : index
    %6 = vector.load %arg4[%c0_5, %c0_6] : memref<64x16xbf16, #tpu.memory_space<vmem>>, vector<64x16xbf16>
    %7 = arith.extf %6 : vector<64x16xbf16> to vector<64x16xf32>
    %8 = arith.addf %5, %7 : vector<64x16xf32>
    %cst_7 = arith.constant 0.000000e+00 : f32
    %9 = vector.broadcast %cst_7 : f32 to vector<64x16xf32>
    %10 = arith.maximumf %8, %9 : vector<64x16xf32>
    %11 = arith.truncf %10 : vector<64x16xf32> to vector<64x16xbf16>
    %c0_8 = arith.constant 0 : index
    %c0_9 = arith.constant 0 : index
    %12 = vector.load %arg5[%c0_8, %c0_9] : memref<64x16xbf16, #tpu.memory_space<vmem>>, vector<64x16xbf16>
    tpu.vector_store %arg5[%c0_8, %c0_9], %11 {strides = array<i32>} : memref<64x16xbf16, #tpu.memory_space<vmem>>, vector<64x16xbf16>,
    return
  }
  func.func @transform_0(%arg0: i32) -> (i32, i32) {
    %c0_i32 = arith.constant 0 : i32
    %c0_i32_0 = arith.constant 0 : i32
    return %arg0, %c0_i32 : i32, i32
  }
  func.func @transform_1(%arg0: i32) -> (i32, i32) {
    %c0_i32 = arith.constant 0 : i32
    %c0_i32_0 = arith.constant 0 : i32
    %c0_i32_1 = arith.constant 0 : i32
    return %c0_i32, %c0_i32_0 : i32, i32
  }
  func.func @transform_2(%arg0: i32) -> (i32, i32) {
    %c0_i32 = arith.constant 0 : i32
    %c0_i32_0 = arith.constant 0 : i32
    %c0_i32_1 = arith.constant 0 : i32
    return %c0_i32, %c0_i32_0 : i32, i32
  }
  func.func @transform_3(%arg0: i32) -> (i32, i32) {
    %c0_i32 = arith.constant 0 : i32
    %c0_i32_0 = arith.constant 0 : i32
    return %arg0, %c0_i32 : i32, i32
  }
  func.func @transform_4(%arg0: i32) -> (i32, i32) {
    %c0_i32 = arith.constant 0 : i32
    %c0_i32_0 = arith.constant 0 : i32
    return %arg0, %c0_i32 : i32, i32
  }
}

module attributes {stable_mosaic.version = 11 : i64} {
  func.func @_mm_bn_act_kernel(%arg0: i32, %arg1: memref<64x4xbf16, #tpu.memory_space<vmem>>, %arg2: memref<4x16xbf16, #tpu.memory_space<vmem>>, %arg3: memref<1x16xf32, #tpu.memory_space<vmem>>, %arg4: memref<64x16xbf16, #tpu.memory_space<vmem>>) attributes {dimension_semantics = [#tpu.dimension_semantics<parallel>], iteration_bounds = array<i64: 2>, scalar_prefetch = 0 : i64, scratch_operands = 0 : i64, tpu.core_type = #tpu.core_type<tc>, window_params = [{transform_indices = @transform_0, window_bounds = array<i64: 64, 4>}, {pipeline_mode = #tpu.pipeline_mode<synchronous>, transform_indices = @transform_1, window_bounds = array<i64: 4, 16>}, {pipeline_mode = #tpu.pipeline_mode<synchronous>, transform_indices = @transform_2, window_bounds = array<i64: 1, 16>}, {transform_indices = @transform_3, window_bounds = array<i64: 64, 16>}]} {
    %c0 = arith.constant 0 : index
    %c0_0 = arith.constant 0 : index
    %0 = vector.load %arg1[%c0, %c0_0] : memref<64x4xbf16, #tpu.memory_space<vmem>>, vector<64x4xbf16>
    %c0_1 = arith.constant 0 : index
    %c0_2 = arith.constant 0 : index
    %1 = vector.load %arg2[%c0_1, %c0_2] : memref<4x16xbf16, #tpu.memory_space<vmem>>, vector<4x16xbf16>
    %cst = arith.constant dense<0.000000e+00> : vector<64x16xf32>
    %2 = tpu.matmul %0, %1, %cst {dimension_numbers = #tpu.dot_dimension_numbers<[1], [0], [0], [1], [0, 0, 1, 1], [], []>} : vector<64x4xbf16>, vector<4x16xbf16>, vector<64x16xf32> -> vector<64x16xf32>
    %c0_3 = arith.constant 0 : index
    %c0_4 = arith.constant 0 : index
    %3 = vector.load %arg3[%c0_3, %c0_4] : memref<1x16xf32, #tpu.memory_space<vmem>>, vector<1x16xf32>
    %4 = vector.broadcast %3 : vector<1x16xf32> to vector<64x16xf32>
    %5 = arith.addf %2, %4 : vector<64x16xf32>
    %6 = arith.truncf %5 : vector<64x16xf32> to vector<64x16xbf16>
    %c0_5 = arith.constant 0 : index
    %c0_6 = arith.constant 0 : index
    %7 = vector.load %arg4[%c0_5, %c0_6] : memref<64x16xbf16, #tpu.memory_space<vmem>>, vector<64x16xbf16>
    tpu.vector_store %arg4[%c0_5, %c0_6], %6 {strides = array<i32>} : memref<64x16xbf16, #tpu.memory_space<vmem>>, vector<64x16xbf16>,
    return
  }
  func.func @transform_0(%arg0: i32) -> (i32, i32) {
    %c0_i32 = arith.constant 0 : i32
    %c0_i32_0 = arith.constant 0 : i32
    return %arg0, %c0_i32 : i32, i32
  }
  func.func @transform_1(%arg0: i32) -> (i32, i32) {
    %c0_i32 = arith.constant 0 : i32
    %c0_i32_0 = arith.constant 0 : i32
    %c0_i32_1 = arith.constant 0 : i32
    return %c0_i32, %c0_i32_0 : i32, i32
  }
  func.func @transform_2(%arg0: i32) -> (i32, i32) {
    %c0_i32 = arith.constant 0 : i32
    %c0_i32_0 = arith.constant 0 : i32
    %c0_i32_1 = arith.constant 0 : i32
    return %c0_i32, %c0_i32_0 : i32, i32
  }
  func.func @transform_3(%arg0: i32) -> (i32, i32) {
    %c0_i32 = arith.constant 0 : i32
    %c0_i32_0 = arith.constant 0 : i32
    return %arg0, %c0_i32 : i32, i32
  }
}

</mosaic_0001>

<llo_original>
// kernel: bottleneck_forward.4
$region0: #{bottleneck_forward.4}
  #allocation0 [shape = 'u32[]', space=smem, size = 0x4, offset = 0x4, fixed_abs, tag = 'smem constant byte address 0x4 - core index']
  #allocation1 [shape = 'u32[144,128]{1,0:T(1,128)}', space=vmem, size = 0x12000, scoped, tag = 'internal scratch']
  %s0 = inlined_call_operand.vmem [shape: bf16[512,4], index: 0, kind: input, shape index: {}]
  %s1 = inlined_call_operand.vmem [shape: bf16[4,8], index: 1, kind: input, shape index: {}]
  %s2 = inlined_call_operand.vmem [shape: f32[1,8], index: 2, kind: input, shape index: {}]
  %s3 = inlined_call_operand.vmem [shape: bf16[512,8], index: 3, kind: output, shape index: {}]
  %s4 = sld [smem:[#allocation0]]
  $region45: #{bottleneck_forward.4} parent=0
    _
  %s6 = ssub.s32 1, %s4
  %s7 = scalar_select 0, %s6, %s4
  loop: start=0, step=1, limit=4
  $region2: #{bottleneck_forward.4} parent=0 // loop_pre_header
    _
  $region3: #{bottleneck_forward.4} parent=0 // loop_header
    %s9 = sphi 0, %s13
    %p10 = scmp.ge.s32.totalorder %s9, 4
    %s19 = sphi 0, %s21
    %s22 = sphi 0, %s19
    %s23 = sphi 0, %s22
    %s39 = sphi 0, %s23
    %s43 = sphi 0, %s43
    %s45 = sphi 0, %s43
    %s46 = sphi 0, %s45
    %s60 = sphi 0, %s46
    %s64 = sphi 0, %s64
    %s66 = sphi 0, %s64
    %s67 = sphi 0, %s66
    %s81 = sphi 0, %s67
    %s87 = sphi 0, %s89
    %s90 = sphi 0, %s87
    %s91 = sphi 0, %s90
    %s107 = sphi 0, %s91
  $region4: #{bottleneck_forward.4} parent=0 // loop_header_branch
    %12 = sbr.rel (%p10) target = $region8
  $region5: #{bottleneck_forward.4} parent=0 // loop_body
    %s14 = ssub.s32 %s9, 1
    %s15 = ssub.s32 %s9, 2
    %s16 = sadd.s32 %s9, 1
    %s17 = ssub.s32 %s9, %s16
    %p18 = scmp.eq.s32.totalorder %s17, 0
    %s20 = sadd.s32 %s19, 1
    %s21 = scalar_select %p18, %s19, %s20
    %p24 = pneg %p18
    %p25 = scmp.eq.s32.totalorder %s9, 1
    %p26 = por %p24, %p25
    %p27 = scmp.ne.s32.totalorder %s19, %s22
    %p28 = scmp.eq.s32.totalorder %s9, 0
    %p29 = por %p27, %p28
    %p30 = scmp.ne.s32.totalorder %s19, %s22
    %p31 = scmp.eq.s32.totalorder %s14, 1
    %p32 = por %p30, %p31
    %p33 = scmp.ne.s32.totalorder %s22, %s23
    %p34 = scmp.eq.s32.totalorder %s14, 0
    %p35 = por %p33, %p34
    %p36 = scmp.ne.s32.totalorder %s22, %s23
    %p37 = scmp.eq.s32.totalorder %s15, 1
    %p38 = por %p36, %p37
    %p40 = scmp.ne.s32.totalorder %s23, %s39
    %p41 = scmp.eq.s32.totalorder %s15, 0
    %p42 = por %p40, %p41
    %s44 = sadd.s32 %s43, 1
    %p47 = scmp.eq.s32.totalorder %s9, 1
    %p48 = scmp.ne.s32.totalorder %s43, %s45
    %p49 = scmp.eq.s32.totalorder %s9, 0
    %p50 = por %p48, %p49
    %p51 = scmp.ne.s32.totalorder %s43, %s45
    %p52 = scmp.eq.s32.totalorder %s14, 1
    %p53 = por %p51, %p52
    %p54 = scmp.ne.s32.totalorder %s45, %s46
    %p55 = scmp.eq.s32.totalorder %s14, 0
    %p56 = por %p54, %p55
    %p57 = scmp.ne.s32.totalorder %s45, %s46
    %p58 = scmp.eq.s32.totalorder %s15, 1
    %p59 = por %p57, %p58
    %p61 = scmp.ne.s32.totalorder %s46, %s60
    %p62 = scmp.eq.s32.totalorder %s15, 0
    %p63 = por %p61, %p62
    %s65 = sadd.s32 %s64, 1
    %p68 = scmp.eq.s32.totalorder %s9, 1
    %p69 = scmp.ne.s32.totalorder %s64, %s66
    %p70 = scmp.eq.s32.totalorder %s9, 0
    %p71 = por %p69, %p70
    %p72 = scmp.ne.s32.totalorder %s64, %s66
    %p73 = scmp.eq.s32.totalorder %s14, 1
    %p74 = por %p72, %p73
    %p75 = scmp.ne.s32.totalorder %s66, %s67
    %p76 = scmp.eq.s32.totalorder %s14, 0
    %p77 = por %p75, %p76
    %p78 = scmp.ne.s32.totalorder %s66, %s67
    %p79 = scmp.eq.s32.totalorder %s15, 1
    %p80 = por %p78, %p79
    %p82 = scmp.ne.s32.totalorder %s67, %s81
    %p83 = scmp.eq.s32.totalorder %s15, 0
    %p84 = por %p82, %p83
    %s85 = ssub.s32 %s9, %s16
    %p86 = scmp.eq.s32.totalorder %s85, 0
    %s88 = sadd.s32 %s87, 1
    %s89 = scalar_select %p86, %s87, %s88
    %p92 = pneg %p86
    %p93 = scmp.eq.s32.totalorder %s9, 1
    %p94 = por %p92, %p93
    %p95 = scmp.ne.s32.totalorder %s87, %s90
    %p96 = scmp.eq.s32.totalorder %s9, 0
    %p97 = por %p95, %p96
    %p98 = scmp.ne.s32.totalorder %s87, %s90
    %p99 = scmp.eq.s32.totalorder %s14, 1
    %p100 = por %p98, %p99
    %p101 = scmp.ne.s32.totalorder %s90, %s91
    %p102 = scmp.eq.s32.totalorder %s14, 0
    %p103 = por %p101, %p102
    %p104 = scmp.ne.s32.totalorder %s90, %s91
    %p105 = scmp.eq.s32.totalorder %s15, 1
    %p106 = por %p104, %p105
    %p108 = scmp.ne.s32.totalorder %s91, %s107
    %p109 = scmp.eq.s32.totalorder %s15, 0
    %p110 = por %p108, %p109
    %p111 = scmp.le.s32.totalorder 1, %s9
    %p112 = scmp.lt.s32.totalorder %s9, 3
    %p113 = pnand %p111, %p112
    %p114 = pneg %p113
    // Predicated region
    $region9: #{bottleneck_forward.4} parent=5 // pred_check
      _
    $region10: #{bottleneck_forward.4} parent=5 // pred_check_branch
      %116 = sbr.rel (%p113) target = $region12
    $region11: #{bottleneck_forward.4} parent=5 // pred_region
      %s117 = ssub.s32 %s9, 1
      // Predicated region
      $region13: #{bottleneck_forward.4} parent=11 // pred_check
        %p118 = pneg %p56
      $region14: #{bottleneck_forward.4} parent=11 // pred_check_branch
        %120 = sbr.rel (%p118) target = $region16
      $region15: #{bottleneck_forward.4} parent=11 // pred_region
        _
      $region16: #{bottleneck_forward.4} parent=11 // pred_fallthru
        _
      // Predicated region
      $region17: #{bottleneck_forward.4} parent=11 // pred_check
        %p121 = pneg %p77
      $region18: #{bottleneck_forward.4} parent=11 // pred_check_branch
        %123 = sbr.rel (%p121) target = $region20
      $region19: #{bottleneck_forward.4} parent=11 // pred_region
        _
      $region20: #{bottleneck_forward.4} parent=11 // pred_fallthru
        _
    $region12: #{bottleneck_forward.4} parent=5 // pred_fallthru
      _
    %p124 = scmp.lt.s32.totalorder %s9, 2
    // Predicated region
    $region21: #{bottleneck_forward.4} parent=5 // pred_check
      %p125 = pneg %p124
    $region22: #{bottleneck_forward.4} parent=5 // pred_check_branch
      %127 = sbr.rel (%p125) target = $region24
    $region23: #{bottleneck_forward.4} parent=5 // pred_region
      // Predicated region
      $region25: #{bottleneck_forward.4} parent=23 // pred_check
        %p128 = pneg %p29
      $region26: #{bottleneck_forward.4} parent=23 // pred_check_branch
        %130 = sbr.rel (%p128) target = $region28
      $region27: #{bottleneck_forward.4} parent=23 // pred_region
        %s131 = smul.u32 32, %s9
        %p132 = scmp.lt.s32.totalorder %s131, 63
        %s133 = scalar_select %p132, %s131, 63
        %s134 = smul.addr %s133, 4
        %s135 = scalar_lea.vmem %s0, %s134
        %s136 = smul.u32 32, %s9
      $region28: #{bottleneck_forward.4} parent=23 // pred_fallthru
        _
    $region24: #{bottleneck_forward.4} parent=5 // pred_fallthru
      _
    %p137 = scmp.le.s32.totalorder 1, %s9
    %p138 = scmp.lt.s32.totalorder %s9, 3
    %p139 = pnand %p137, %p138
    %p140 = pneg %p139
    // Predicated region
    $region29: #{bottleneck_forward.4} parent=5 // pred_check
      _
    $region30: #{bottleneck_forward.4} parent=5 // pred_check_branch
      %142 = sbr.rel (%p139) target = $region32
    $region31: #{bottleneck_forward.4} parent=5 // pred_region
      %s143 = ssub.s32 %s9, 1
      %s144 = smul.u32 32, %s14
      %p145 = scmp.lt.s32.totalorder %s144, 63
      %s146 = scalar_select %p145, %s144, 63
      %s147 = smul.addr %s146, 4
      %s148 = scalar_lea.vmem %s0, %s147
      %p149 = pneg %p35
      %p150 = pneg %p32
      %p151 = pneg %p56
      %p152 = pneg %p53
      %p153 = pneg %p77
      %p154 = pneg %p74
      %p155 = pneg %p103
      %p156 = pneg %p100
      %s157 = smul.u32 32, %s14
      %p158 = scmp.lt.s32.totalorder %s157, 63
      %s159 = scalar_select %p158, %s157, 63
      %s160 = smul.addr %s159, 4
      %s161 = scalar_lea.vmem %s3, %s160
      %s162 = smul.u32 32, %s14
      %p163 = scmp.lt.s32.totalorder %s162, 63
      %s164 = scalar_select %p163, %s162, 63
      %s165 = smul.addr %s164, 4
      %s166 = scalar_lea.vmem %s0, %s165
      %s167 = smul.u32 32, %s14
      %s168 = smul.u32 32, %s14
      %p169 = scmp.lt.s32.totalorder %s168, 63
      %s170 = scalar_select %p169, %s168, 63
      %s171 = smul.addr %s170, 4
      %s172 = scalar_lea.vmem %s3, %s171
      %s173 = smul.u32 32, %s14
      %v175 = vld [vmem:[%s166] sm:$0xf]
      %v176 = vld [vmem:[%s166 + $0x4] sm:$0xf]
      %v177 = vld [vmem:[%s166 + $0x8] sm:$0xf]
      %v178 = vld [vmem:[%s166 + $0xc] sm:$0xf]
      %v179 = vld [vmem:[%s166 + $0x10] sm:$0xf]
      %v180 = vld [vmem:[%s166 + $0x14] sm:$0xf]
      %v181 = vld [vmem:[%s166 + $0x18] sm:$0xf]
      %v182 = vld [vmem:[%s166 + $0x1c] sm:$0xf]
      %v183 = vld [vmem:[%s166 + $0x20] sm:$0xf]
      %v184 = vld [vmem:[%s166 + $0x24] sm:$0xf]
      %v185 = vld [vmem:[%s166 + $0x28] sm:$0xf]
      %v186 = vld [vmem:[%s166 + $0x2c] sm:$0xf]
      %v187 = vld [vmem:[%s166 + $0x30] sm:$0xf]
      %v188 = vld [vmem:[%s166 + $0x34] sm:$0xf]
      %v189 = vld [vmem:[%s166 + $0x38] sm:$0xf]
      %v190 = vld [vmem:[%s166 + $0x3c] sm:$0xf]
      %v191 = vld [vmem:[%s166 + $0x40] sm:$0xf]
      %v192 = vld [vmem:[%s166 + $0x44] sm:$0xf]
      %v193 = vld [vmem:[%s166 + $0x48] sm:$0xf]
      %v194 = vld [vmem:[%s166 + $0x4c] sm:$0xf]
      %v195 = vld [vmem:[%s166 + $0x50] sm:$0xf]
      %v196 = vld [vmem:[%s166 + $0x54] sm:$0xf]
      %v197 = vld [vmem:[%s166 + $0x58] sm:$0xf]
      %v198 = vld [vmem:[%s166 + $0x5c] sm:$0xf]
      %v199 = vld [vmem:[%s166 + $0x60] sm:$0xf]
      %v200 = vld [vmem:[%s166 + $0x64] sm:$0xf]
      %v201 = vld [vmem:[%s166 + $0x68] sm:$0xf]
      %v202 = vld [vmem:[%s166 + $0x6c] sm:$0xf]
      %v203 = vld [vmem:[%s166 + $0x70] sm:$0xf]
      %v204 = vld [vmem:[%s166 + $0x74] sm:$0xf]
      %v205 = vld [vmem:[%s166 + $0x78] sm:$0xf]
      %v206 = vld [vmem:[%s166 + $0x7c] sm:$0xf]
      %v207 = vld [vmem:[%s1] sm:$0x3]
      %v208 = vld [vmem:[%s2] sm:$0x1]
      %v210 = vlaneseq
      %v211 = vshrl.u32 %v210, 7
      %v212 = vsub.s32 0, %v211
      %v213 = vrot.slane %v208, %v212
      %v247 = vunpack.c.l.b16 %v175
      %v248 = vunpack.c.l.b16 %v176
      %v249 = vunpack.c.l.b16 %v177
      %v250 = vunpack.c.l.b16 %v178
      %v251 = vunpack.c.l.b16 %v179
      %v252 = vunpack.c.l.b16 %v180
      %v253 = vunpack.c.l.b16 %v181
      %v254 = vunpack.c.l.b16 %v182
      %v255 = vunpack.c.l.b16 %v183
      %v256 = vunpack.c.l.b16 %v184
      %v257 = vunpack.c.l.b16 %v185
      %v258 = vunpack.c.l.b16 %v186
      %v259 = vunpack.c.l.b16 %v187
      %v260 = vunpack.c.l.b16 %v188
      %v261 = vunpack.c.l.b16 %v189
      %v262 = vunpack.c.l.b16 %v190
      %v263 = vunpack.c.l.b16 %v191
      %v264 = vunpack.c.l.b16 %v192
      %v265 = vunpack.c.l.b16 %v193
      %v266 = vunpack.c.l.b16 %v194
      %v267 = vunpack.c.l.b16 %v195
      %v268 = vunpack.c.l.b16 %v196
      %v269 = vunpack.c.l.b16 %v197
      %v270 = vunpack.c.l.b16 %v198
      %v271 = vunpack.c.l.b16 %v199
      %v272 = vunpack.c.l.b16 %v200
      %v273 = vunpack.c.l.b16 %v201
      %v274 = vunpack.c.l.b16 %v202
      %v275 = vunpack.c.l.b16 %v203
      %v276 = vunpack.c.l.b16 %v204
      %v277 = vunpack.c.l.b16 %v205
      %v278 = vunpack.c.l.b16 %v206
      %v279 = vpack.c.b16 %v248, %v247
      %v280 = vpack.c.b16 %v250, %v249
      %v281 = vpack.c.b16 %v252, %v251
      %v282 = vpack.c.b16 %v254, %v253
      %v283 = vpack.c.b16 %v256, %v255
      %v284 = vpack.c.b16 %v258, %v257
      %v285 = vpack.c.b16 %v260, %v259
      %v286 = vpack.c.b16 %v262, %v261
      %v287 = vpack.c.b16 %v264, %v263
      %v288 = vpack.c.b16 %v266, %v265
      %v289 = vpack.c.b16 %v268, %v267
      %v290 = vpack.c.b16 %v270, %v269
      %v291 = vpack.c.b16 %v272, %v271
      %v292 = vpack.c.b16 %v274, %v273
      %v293 = vpack.c.b16 %v276, %v275
      %v294 = vpack.c.b16 %v278, %v277
      %vm295 = vcmask 31744
      %v297 = vsel %vm295, %v279, 0
      %v300 = vsel %vm295, %v280, 0
      %v303 = vsel %vm295, %v281, 0
      %v306 = vsel %vm295, %v282, 0
      %v309 = vsel %vm295, %v283, 0
      %v312 = vsel %vm295, %v284, 0
      %v315 = vsel %vm295, %v285, 0
      %v318 = vsel %vm295, %v286, 0
      %v321 = vsel %vm295, %v287, 0
      %v324 = vsel %vm295, %v288, 0
      %v327 = vsel %vm295, %v289, 0
      %v330 = vsel %vm295, %v290, 0
      %v333 = vsel %vm295, %v291, 0
      %v336 = vsel %vm295, %v292, 0
      %v339 = vsel %vm295, %v293, 0
      %v342 = vsel %vm295, %v294, 0
      %vm344 = vcmask 1041408
      %v346 = vsel %vm344, %v207, 0
      %348 = vmatprep.subr.bf16.mxu0 0
      %349 = vmatpush1.bf16.msra.mxu0 0
      %350 = vmatprep.subr.bf16.mxu0 0
      %351 = vmatpush1.bf16.msra.mxu0 0
      %352 = vmatprep.subr.bf16.mxu0 0
      %353 = vmatpush1.bf16.msra.mxu0 0
      %354 = vmatprep.subr.bf16.mxu0 0
      %355 = vmatpush1.bf16.msra.mxu0 0
      %356 = vmatprep.subr.bf16.mxu0 0
      %357 = vmatpush1.bf16.msra.mxu0 0
      %358 = vmatprep.subr.bf16.mxu0 0
      %359 = vmatpush1.bf16.msra.mxu0 0
      %360 = vmatprep.subr.bf16.mxu0 0
      %361 = vmatpush1.bf16.msra.mxu0 0
      %362 = vmatprep.subr.bf16.mxu0 0
      %363 = vmatpush1.bf16.msra.mxu0 %v346
      %364 = vmatprep.subr.bf16.mxu0 0
      %365 = vmatpush2.bf16.msra.mxu0 0
      %366 = vmatprep.subr.bf16.mxu0 0
      %367 = vmatpush2.bf16.msra.mxu0 0
      %368 = vmatprep.subr.bf16.mxu0 0
      %369 = vmatpush2.bf16.msra.mxu0 0
      %370 = vmatprep.subr.bf16.mxu0 0
      %371 = vmatpush2.bf16.msra.mxu0 0
      %372 = vmatprep.subr.bf16.mxu0 0
      %373 = vmatpush2.bf16.msra.mxu0 0
      %374 = vmatprep.subr.bf16.mxu0 0
      %375 = vmatpush2.bf16.msra.mxu0 0
      %376 = vmatprep.subr.bf16.mxu0 0
      %377 = vmatpush2.bf16.msra.mxu0 0
      %378 = vmatprep.subr.bf16.mxu0 0
      %379 = vmatpush2.bf16.msra.mxu0 0
      %380 = vmatprep.mubr.bf16.mxu0 0
      %381 = vmatmul.mubr.bf16.gmra.mxu0 %v297
      %v382 = vpop.f32.mrf.mxu0
      %v383 = vadd.f32 %v213, %v382
      %v384 = vpop.f32.mrf.mxu0
      %v385 = vpop.f32.mrf.mxu0
      %v386 = vadd.f32 %v213, %v385
      %v387 = vpop.f32.mrf.mxu0
      %388 = vmatprep.mubr.bf16.mxu0 0
      %389 = vmatmul.mubr.bf16.gmra.mxu0 %v300
      %v390 = vpop.f32.mrf.mxu0
      %v391 = vadd.f32 %v213, %v390
      %v392 = vpop.f32.mrf.mxu0
      %v393 = vpop.f32.mrf.mxu0
      %v394 = vadd.f32 %v213, %v393
      %v395 = vpop.f32.mrf.mxu0
      %396 = vmatprep.mubr.bf16.mxu0 0
      %397 = vmatmul.mubr.bf16.gmra.mxu0 %v303
      %v398 = vpop.f32.mrf.mxu0
      %v399 = vadd.f32 %v213, %v398
      %v400 = vpop.f32.mrf.mxu0
      %v401 = vpop.f32.mrf.mxu0
      %v402 = vadd.f32 %v213, %v401
      %v403 = vpop.f32.mrf.mxu0
      %404 = vmatprep.mubr.bf16.mxu0 0
      %405 = vmatmul.mubr.bf16.gmra.mxu0 %v306
      %v406 = vpop.f32.mrf.mxu0
      %v407 = vadd.f32 %v213, %v406
      %v408 = vpop.f32.mrf.mxu0
      %v409 = vpop.f32.mrf.mxu0
      %v410 = vadd.f32 %v213, %v409
      %v411 = vpop.f32.mrf.mxu0
      %412 = vmatprep.mubr.bf16.mxu0 0
      %413 = vmatmul.mubr.bf16.gmra.mxu0 %v309
      %v414 = vpop.f32.mrf.mxu0
      %v415 = vadd.f32 %v213, %v414
      %v416 = vpop.f32.mrf.mxu0
      %v417 = vpop.f32.mrf.mxu0
      %v418 = vadd.f32 %v213, %v417
      %v419 = vpop.f32.mrf.mxu0
      %420 = vmatprep.mubr.bf16.mxu0 0
      %421 = vmatmul.mubr.bf16.gmra.mxu0 %v312
      %v422 = vpop.f32.mrf.mxu0
      %v423 = vadd.f32 %v213, %v422
      %v424 = vpop.f32.mrf.mxu0
      %v425 = vpop.f32.mrf.mxu0
      %v426 = vadd.f32 %v213, %v425
      %v427 = vpop.f32.mrf.mxu0
      %428 = vmatprep.mubr.bf16.mxu0 0
      %429 = vmatmul.mubr.bf16.gmra.mxu0 %v315
      %v430 = vpop.f32.mrf.mxu0
      %v431 = vadd.f32 %v213, %v430
      %v432 = vpop.f32.mrf.mxu0
      %v433 = vpop.f32.mrf.mxu0
      %v434 = vadd.f32 %v213, %v433
      %v435 = vpop.f32.mrf.mxu0
      %436 = vmatprep.mubr.bf16.mxu0 0
      %437 = vmatmul.mubr.bf16.gmra.mxu0 %v318
      %v438 = vpop.f32.mrf.mxu0
      %v439 = vadd.f32 %v213, %v438
      %v440 = vpop.f32.mrf.mxu0
      %v441 = vpop.f32.mrf.mxu0
      %v442 = vadd.f32 %v213, %v441
      %v443 = vpop.f32.mrf.mxu0
      %444 = vmatprep.mubr.bf16.mxu0 0
      %445 = vmatmul.mubr.bf16.gmra.mxu0 %v321
      %v446 = vpop.f32.mrf.mxu0
      %v447 = vadd.f32 %v213, %v446
      %v448 = vpop.f32.mrf.mxu0
      %v449 = vpop.f32.mrf.mxu0
      %v450 = vadd.f32 %v213, %v449
      %v451 = vpop.f32.mrf.mxu0
      %452 = vmatprep.mubr.bf16.mxu0 0
      %453 = vmatmul.mubr.bf16.gmra.mxu0 %v324
      %v454 = vpop.f32.mrf.mxu0
      %v455 = vadd.f32 %v213, %v454
      %v456 = vpop.f32.mrf.mxu0
      %v457 = vpop.f32.mrf.mxu0
      %v458 = vadd.f32 %v213, %v457
      %v459 = vpop.f32.mrf.mxu0
      %460 = vmatprep.mubr.bf16.mxu0 0
      %461 = vmatmul.mubr.bf16.gmra.mxu0 %v327
      %v462 = vpop.f32.mrf.mxu0
      %v463 = vadd.f32 %v213, %v462
      %v464 = vpop.f32.mrf.mxu0
      %v465 = vpop.f32.mrf.mxu0
      %v466 = vadd.f32 %v213, %v465
      %v467 = vpop.f32.mrf.mxu0
      %468 = vmatprep.mubr.bf16.mxu0 0
      %469 = vmatmul.mubr.bf16.gmra.mxu0 %v330
      %v470 = vpop.f32.mrf.mxu0
      %v471 = vadd.f32 %v213, %v470
      %v472 = vpop.f32.mrf.mxu0
      %v473 = vpop.f32.mrf.mxu0
      %v474 = vadd.f32 %v213, %v473
      %v475 = vpop.f32.mrf.mxu0
      %476 = vmatprep.mubr.bf16.mxu0 0
      %477 = vmatmul.mubr.bf16.gmra.mxu0 %v333
      %v478 = vpop.f32.mrf.mxu0
      %v479 = vadd.f32 %v213, %v478
      %v480 = vpop.f32.mrf.mxu0
      %v481 = vpop.f32.mrf.mxu0
      %v482 = vadd.f32 %v213, %v481
      %v483 = vpop.f32.mrf.mxu0
      %484 = vmatprep.mubr.bf16.mxu0 0
      %485 = vmatmul.mubr.bf16.gmra.mxu0 %v336
      %v486 = vpop.f32.mrf.mxu0
      %v487 = vadd.f32 %v213, %v486
      %v488 = vpop.f32.mrf.mxu0
      %v489 = vpop.f32.mrf.mxu0
      %v490 = vadd.f32 %v213, %v489
      %v491 = vpop.f32.mrf.mxu0
      %492 = vmatprep.mubr.bf16.mxu0 0
      %493 = vmatmul.mubr.bf16.gmra.mxu0 %v339
      %v494 = vpop.f32.mrf.mxu0
      %v495 = vadd.f32 %v213, %v494
      %v496 = vpop.f32.mrf.mxu0
      %v497 = vpop.f32.mrf.mxu0
      %v498 = vadd.f32 %v213, %v497
      %v499 = vpop.f32.mrf.mxu0
      %500 = vmatprep.mubr.bf16.mxu0 0
      %501 = vmatmul.mubr.bf16.gmra.mxu0 %v342
      %v502 = vpop.f32.mrf.mxu0
      %v503 = vadd.f32 %v213, %v502
      %v504 = vpop.f32.mrf.mxu0
      %v505 = vpop.f32.mrf.mxu0
      %v506 = vadd.f32 %v213, %v505
      %v507 = vpop.f32.mrf.mxu0
      %508 = vdwg.mxu0
      %v509 = vmax.f32 %v383, 0.0
      %v510 = vmax.f32 %v386, 0.0
      %v511 = vmax.f32 %v391, 0.0
      %v512 = vmax.f32 %v394, 0.0
      %v513 = vmax.f32 %v399, 0.0
      %v514 = vmax.f32 %v402, 0.0
      %v515 = vmax.f32 %v407, 0.0
      %v516 = vmax.f32 %v410, 0.0
      %v517 = vmax.f32 %v415, 0.0
      %v518 = vmax.f32 %v418, 0.0
      %v519 = vmax.f32 %v423, 0.0
      %v520 = vmax.f32 %v426, 0.0
      %v521 = vmax.f32 %v431, 0.0
      %v522 = vmax.f32 %v434, 0.0
      %v523 = vmax.f32 %v439, 0.0
      %v524 = vmax.f32 %v442, 0.0
      %v525 = vmax.f32 %v447, 0.0
      %v526 = vmax.f32 %v450, 0.0
      %v527 = vmax.f32 %v455, 0.0
      %v528 = vmax.f32 %v458, 0.0
      %v529 = vmax.f32 %v463, 0.0
      %v530 = vmax.f32 %v466, 0.0
      %v531 = vmax.f32 %v471, 0.0
      %v532 = vmax.f32 %v474, 0.0
      %v533 = vmax.f32 %v479, 0.0
      %v534 = vmax.f32 %v482, 0.0
      %v535 = vmax.f32 %v487, 0.0
      %v536 = vmax.f32 %v490, 0.0
      %v537 = vmax.f32 %v495, 0.0
      %v538 = vmax.f32 %v498, 0.0
      %v539 = vmax.f32 %v503, 0.0
      %v540 = vmax.f32 %v506, 0.0
      %v541 = vpack.c.bf16 %v510, %v509
      %v542 = vpack.c.bf16 %v512, %v511
      %v543 = vpack.c.bf16 %v514, %v513
      %v544 = vpack.c.bf16 %v516, %v515
      %v545 = vpack.c.bf16 %v518, %v517
      %v546 = vpack.c.bf16 %v520, %v519
      %v547 = vpack.c.bf16 %v522, %v521
      %v548 = vpack.c.bf16 %v524, %v523
      %v549 = vpack.c.bf16 %v526, %v525
      %v550 = vpack.c.bf16 %v528, %v527
      %v551 = vpack.c.bf16 %v530, %v529
      %v552 = vpack.c.bf16 %v532, %v531
      %v553 = vpack.c.bf16 %v534, %v533
      %v554 = vpack.c.bf16 %v536, %v535
      %v555 = vpack.c.bf16 %v538, %v537
      %v556 = vpack.c.bf16 %v540, %v539
      %v573 = vunpack.c.l.b16 %v541
      %v574 = vunpack.c.h.b16 %v541
      %v575 = vunpack.c.l.b16 %v542
      %v576 = vunpack.c.h.b16 %v542
      %v577 = vunpack.c.l.b16 %v543
      %v578 = vunpack.c.h.b16 %v543
      %v579 = vunpack.c.l.b16 %v544
      %v580 = vunpack.c.h.b16 %v544
      %v581 = vunpack.c.l.b16 %v545
      %v582 = vunpack.c.h.b16 %v545
      %v583 = vunpack.c.l.b16 %v546
      %v584 = vunpack.c.h.b16 %v546
      %v585 = vunpack.c.l.b16 %v547
      %v586 = vunpack.c.h.b16 %v547
      %v587 = vunpack.c.l.b16 %v548
      %v588 = vunpack.c.h.b16 %v548
      %v589 = vunpack.c.l.b16 %v549
      %v590 = vunpack.c.h.b16 %v549
      %v591 = vunpack.c.l.b16 %v550
      %v592 = vunpack.c.h.b16 %v550
      %v593 = vunpack.c.l.b16 %v551
      %v594 = vunpack.c.h.b16 %v551
      %v595 = vunpack.c.l.b16 %v552
      %v596 = vunpack.c.h.b16 %v552
      %v597 = vunpack.c.l.b16 %v553
      %v598 = vunpack.c.h.b16 %v553
      %v599 = vunpack.c.l.b16 %v554
      %v600 = vunpack.c.h.b16 %v554
      %v601 = vunpack.c.l.b16 %v555
      %v602 = vunpack.c.h.b16 %v555
      %v603 = vunpack.c.l.b16 %v556
      %v604 = vunpack.c.h.b16 %v556
      %v605 = vpack.c.b16 %v573, %v573
      %v606 = vpack.c.b16 %v574, %v574
      %v607 = vpack.c.b16 %v575, %v575
      %v608 = vpack.c.b16 %v576, %v576
      %v609 = vpack.c.b16 %v577, %v577
      %v610 = vpack.c.b16 %v578, %v578
      %v611 = vpack.c.b16 %v579, %v579
      %v612 = vpack.c.b16 %v580, %v580
      %v613 = vpack.c.b16 %v581, %v581
      %v614 = vpack.c.b16 %v582, %v582
      %v615 = vpack.c.b16 %v583, %v583
      %v616 = vpack.c.b16 %v584, %v584
      %v617 = vpack.c.b16 %v585, %v585
      %v618 = vpack.c.b16 %v586, %v586
      %v619 = vpack.c.b16 %v587, %v587
      %v620 = vpack.c.b16 %v588, %v588
      %v621 = vpack.c.b16 %v589, %v589
      %v622 = vpack.c.b16 %v590, %v590
      %v623 = vpack.c.b16 %v591, %v591
      %v624 = vpack.c.b16 %v592, %v592
      %v625 = vpack.c.b16 %v593, %v593
      %v626 = vpack.c.b16 %v594, %v594
      %v627 = vpack.c.b16 %v595, %v595
      %v628 = vpack.c.b16 %v596, %v596
      %v629 = vpack.c.b16 %v597, %v597
      %v630 = vpack.c.b16 %v598, %v598
      %v631 = vpack.c.b16 %v599, %v599
      %v632 = vpack.c.b16 %v600, %v600
      %v633 = vpack.c.b16 %v601, %v601
      %v634 = vpack.c.b16 %v602, %v602
      %v635 = vpack.c.b16 %v603, %v603
      %v636 = vpack.c.b16 %v604, %v604
      %vm669 = vcmask 60416
      %670 = vst.msk [vmem:[%s172] sm:$0xf] %vm669, %v605
      %671 = vst.msk [vmem:[%s172 + $0x4] sm:$0xf] %vm669, %v606
      %672 = vst.msk [vmem:[%s172 + $0x8] sm:$0xf] %vm669, %v607
      %673 = vst.msk [vmem:[%s172 + $0xc] sm:$0xf] %vm669, %v608
      %674 = vst.msk [vmem:[%s172 + $0x10] sm:$0xf] %vm669, %v609
      %675 = vst.msk [vmem:[%s172 + $0x14] sm:$0xf] %vm669, %v610
      %676 = vst.msk [vmem:[%s172 + $0x18] sm:$0xf] %vm669, %v611
      %677 = vst.msk [vmem:[%s172 + $0x1c] sm:$0xf] %vm669, %v612
      %678 = vst.msk [vmem:[%s172 + $0x20] sm:$0xf] %vm669, %v613
      %679 = vst.msk [vmem:[%s172 + $0x24] sm:$0xf] %vm669, %v614
      %680 = vst.msk [vmem:[%s172 + $0x28] sm:$0xf] %vm669, %v615
      %681 = vst.msk [vmem:[%s172 + $0x2c] sm:$0xf] %vm669, %v616
      %682 = vst.msk [vmem:[%s172 + $0x30] sm:$0xf] %vm669, %v617
      %683 = vst.msk [vmem:[%s172 + $0x34] sm:$0xf] %vm669, %v618
      %684 = vst.msk [vmem:[%s172 + $0x38] sm:$0xf] %vm669, %v619
      %685 = vst.msk [vmem:[%s172 + $0x3c] sm:$0xf] %vm669, %v620
      %686 = vst.msk [vmem:[%s172 + $0x40] sm:$0xf] %vm669, %v621
      %687 = vst.msk [vmem:[%s172 + $0x44] sm:$0xf] %vm669, %v622
      %688 = vst.msk [vmem:[%s172 + $0x48] sm:$0xf] %vm669, %v623
      %689 = vst.msk [vmem:[%s172 + $0x4c] sm:$0xf] %vm669, %v624
      %690 = vst.msk [vmem:[%s172 + $0x50] sm:$0xf] %vm669, %v625
      %691 = vst.msk [vmem:[%s172 + $0x54] sm:$0xf] %vm669, %v626
      %692 = vst.msk [vmem:[%s172 + $0x58] sm:$0xf] %vm669, %v627
      %693 = vst.msk [vmem:[%s172 + $0x5c] sm:$0xf] %vm669, %v628
      %694 = vst.msk [vmem:[%s172 + $0x60] sm:$0xf] %vm669, %v629
      %695 = vst.msk [vmem:[%s172 + $0x64] sm:$0xf] %vm669, %v630
      %696 = vst.msk [vmem:[%s172 + $0x68] sm:$0xf] %vm669, %v631
      %697 = vst.msk [vmem:[%s172 + $0x6c] sm:$0xf] %vm669, %v632
      %698 = vst.msk [vmem:[%s172 + $0x70] sm:$0xf] %vm669, %v633
      %699 = vst.msk [vmem:[%s172 + $0x74] sm:$0xf] %vm669, %v634
      %700 = vst.msk [vmem:[%s172 + $0x78] sm:$0xf] %vm669, %v635
      %701 = vst.msk [vmem:[%s172 + $0x7c] sm:$0xf] %vm669, %v636
      %s702 = smul.u32 32, %s14
      %p703 = scmp.lt.s32.totalorder %s702, 63
      %s704 = scalar_select %p703, %s702, 63
      %s705 = smul.addr %s704, 4
      %s706 = scalar_lea.vmem %s3, %s705
      // Predicated region
      $region33: #{bottleneck_forward.4} parent=31 // pred_check
        %p707 = pneg %p100
      $region34: #{bottleneck_forward.4} parent=31 // pred_check_branch
        %709 = sbr.rel (%p707) target = $region36
      $region35: #{bottleneck_forward.4} parent=31 // pred_region
        %s710 = smul.u32 32, %s14
      $region36: #{bottleneck_forward.4} parent=31 // pred_fallthru
        _
    $region32: #{bottleneck_forward.4} parent=5 // pred_fallthru
      _
    %p711 = scmp.le.s32.totalorder 2, %s9
    // Predicated region
    $region37: #{bottleneck_forward.4} parent=5 // pred_check
      %p712 = pneg %p711
    $region38: #{bottleneck_forward.4} parent=5 // pred_check_branch
      %714 = sbr.rel (%p712) target = $region40
    $region39: #{bottleneck_forward.4} parent=5 // pred_region
      %s715 = ssub.s32 %s9, 2
      // Predicated region
      $region41: #{bottleneck_forward.4} parent=39 // pred_check
        %p716 = pneg %p106
      $region42: #{bottleneck_forward.4} parent=39 // pred_check_branch
        %718 = sbr.rel (%p716) target = $region44
      $region43: #{bottleneck_forward.4} parent=39 // pred_region
        %s719 = smul.u32 32, %s15
        %p720 = scmp.lt.s32.totalorder %s719, 63
        %s721 = scalar_select %p720, %s719, 63
        %s722 = smul.addr %s721, 4
        %s723 = scalar_lea.vmem %s3, %s722
      $region44: #{bottleneck_forward.4} parent=39 // pred_fallthru
        _
    $region40: #{bottleneck_forward.4} parent=5 // pred_fallthru
      _
  $region6: #{bottleneck_forward.4} parent=0 // loop_footer
    %s13 = sadd.s32 1, %s9
  $region7: #{bottleneck_forward.4} parent=0 // loop_footer_branch
    %8 = sbr.rel target = $region3
  $region8: #{bottleneck_forward.4} parent=0 // loop_exit
    _

// kernel: bottleneck_forward.7
$region0: #{bottleneck_forward.7}
  #allocation0 [shape = 'u32[]', space=smem, size = 0x4, offset = 0x4, fixed_abs, tag = 'smem constant byte address 0x4 - core index']
  #allocation1 [shape = 'u32[144,128]{1,0:T(1,128)}', space=vmem, size = 0x12000, scoped, tag = 'internal scratch']
  %s0 = inlined_call_operand.vmem [shape: bf16[128,8], index: 0, kind: input, shape index: {}]
  %s1 = inlined_call_operand.vmem [shape: bf16[8,16], index: 1, kind: input, shape index: {}]
  %s2 = inlined_call_operand.vmem [shape: f32[1,16], index: 2, kind: input, shape index: {}]
  %s3 = inlined_call_operand.vmem [shape: bf16[128,16], index: 3, kind: input, shape index: {}, may-alias: {3,4}]
  %s4 = inlined_call_operand.vmem [shape: bf16[128,16], index: 4, kind: output, shape index: {}, may-alias: {3,4}]
  %s5 = sld [smem:[#allocation0]]
  $region49: #{bottleneck_forward.7} parent=0
    _
  %s7 = ssub.s32 1, %s5
  %s8 = scalar_select 0, %s7, %s5
  loop: start=0, step=1, limit=4
  $region2: #{bottleneck_forward.7} parent=0 // loop_pre_header
    _
  $region3: #{bottleneck_forward.7} parent=0 // loop_header
    %s10 = sphi 0, %s14
    %p11 = scmp.ge.s32.totalorder %s10, 4
    %s20 = sphi 0, %s22
    %s23 = sphi 0, %s20
    %s24 = sphi 0, %s23
    %s40 = sphi 0, %s24
    %s44 = sphi 0, %s44
    %s46 = sphi 0, %s44
    %s47 = sphi 0, %s46
    %s61 = sphi 0, %s47
    %s65 = sphi 0, %s65
    %s67 = sphi 0, %s65
    %s68 = sphi 0, %s67
    %s82 = sphi 0, %s68
    %s88 = sphi 0, %s90
    %s91 = sphi 0, %s88
    %s92 = sphi 0, %s91
    %s108 = sphi 0, %s92
    %s114 = sphi 0, %s116
    %s117 = sphi 0, %s114
    %s118 = sphi 0, %s117
    %s134 = sphi 0, %s118
  $region4: #{bottleneck_forward.7} parent=0 // loop_header_branch
    %13 = sbr.rel (%p11) target = $region8
  $region5: #{bottleneck_forward.7} parent=0 // loop_body
    %s15 = ssub.s32 %s10, 1
    %s16 = ssub.s32 %s10, 2
    %s17 = sadd.s32 %s10, 1
    %s18 = ssub.s32 %s10, %s17
    %p19 = scmp.eq.s32.totalorder %s18, 0
    %s21 = sadd.s32 %s20, 1
    %s22 = scalar_select %p19, %s20, %s21
    %p25 = pneg %p19
    %p26 = scmp.eq.s32.totalorder %s10, 1
    %p27 = por %p25, %p26
    %p28 = scmp.ne.s32.totalorder %s20, %s23
    %p29 = scmp.eq.s32.totalorder %s10, 0
    %p30 = por %p28, %p29
    %p31 = scmp.ne.s32.totalorder %s20, %s23
    %p32 = scmp.eq.s32.totalorder %s15, 1
    %p33 = por %p31, %p32
    %p34 = scmp.ne.s32.totalorder %s23, %s24
    %p35 = scmp.eq.s32.totalorder %s15, 0
    %p36 = por %p34, %p35
    %p37 = scmp.ne.s32.totalorder %s23, %s24
    %p38 = scmp.eq.s32.totalorder %s16, 1
    %p39 = por %p37, %p38
    %p41 = scmp.ne.s32.totalorder %s24, %s40
    %p42 = scmp.eq.s32.totalorder %s16, 0
    %p43 = por %p41, %p42
    %s45 = sadd.s32 %s44, 1
    %p48 = scmp.eq.s32.totalorder %s10, 1
    %p49 = scmp.ne.s32.totalorder %s44, %s46
    %p50 = scmp.eq.s32.totalorder %s10, 0
    %p51 = por %p49, %p50
    %p52 = scmp.ne.s32.totalorder %s44, %s46
    %p53 = scmp.eq.s32.totalorder %s15, 1
    %p54 = por %p52, %p53
    %p55 = scmp.ne.s32.totalorder %s46, %s47
    %p56 = scmp.eq.s32.totalorder %s15, 0
    %p57 = por %p55, %p56
    %p58 = scmp.ne.s32.totalorder %s46, %s47
    %p59 = scmp.eq.s32.totalorder %s16, 1
    %p60 = por %p58, %p59
    %p62 = scmp.ne.s32.totalorder %s47, %s61
    %p63 = scmp.eq.s32.totalorder %s16, 0
    %p64 = por %p62, %p63
    %s66 = sadd.s32 %s65, 1
    %p69 = scmp.eq.s32.totalorder %s10, 1
    %p70 = scmp.ne.s32.totalorder %s65, %s67
    %p71 = scmp.eq.s32.totalorder %s10, 0
    %p72 = por %p70, %p71
    %p73 = scmp.ne.s32.totalorder %s65, %s67
    %p74 = scmp.eq.s32.totalorder %s15, 1
    %p75 = por %p73, %p74
    %p76 = scmp.ne.s32.totalorder %s67, %s68
    %p77 = scmp.eq.s32.totalorder %s15, 0
    %p78 = por %p76, %p77
    %p79 = scmp.ne.s32.totalorder %s67, %s68
    %p80 = scmp.eq.s32.totalorder %s16, 1
    %p81 = por %p79, %p80
    %p83 = scmp.ne.s32.totalorder %s68, %s82
    %p84 = scmp.eq.s32.totalorder %s16, 0
    %p85 = por %p83, %p84
    %s86 = ssub.s32 %s10, %s17
    %p87 = scmp.eq.s32.totalorder %s86, 0
    %s89 = sadd.s32 %s88, 1
    %s90 = scalar_select %p87, %s88, %s89
    %p93 = pneg %p87
    %p94 = scmp.eq.s32.totalorder %s10, 1
    %p95 = por %p93, %p94
    %p96 = scmp.ne.s32.totalorder %s88, %s91
    %p97 = scmp.eq.s32.totalorder %s10, 0
    %p98 = por %p96, %p97
    %p99 = scmp.ne.s32.totalorder %s88, %s91
    %p100 = scmp.eq.s32.totalorder %s15, 1
    %p101 = por %p99, %p100
    %p102 = scmp.ne.s32.totalorder %s91, %s92
    %p103 = scmp.eq.s32.totalorder %s15, 0
    %p104 = por %p102, %p103
    %p105 = scmp.ne.s32.totalorder %s91, %s92
    %p106 = scmp.eq.s32.totalorder %s16, 1
    %p107 = por %p105, %p106
    %p109 = scmp.ne.s32.totalorder %s92, %s108
    %p110 = scmp.eq.s32.totalorder %s16, 0
    %p111 = por %p109, %p110
    %s112 = ssub.s32 %s10, %s17
    %p113 = scmp.eq.s32.totalorder %s112, 0
    %s115 = sadd.s32 %s114, 1
    %s116 = scalar_select %p113, %s114, %s115
    %p119 = pneg %p113
    %p120 = scmp.eq.s32.totalorder %s10, 1
    %p121 = por %p119, %p120
    %p122 = scmp.ne.s32.totalorder %s114, %s117
    %p123 = scmp.eq.s32.totalorder %s10, 0
    %p124 = por %p122, %p123
    %p125 = scmp.ne.s32.totalorder %s114, %s117
    %p126 = scmp.eq.s32.totalorder %s15, 1
    %p127 = por %p125, %p126
    %p128 = scmp.ne.s32.totalorder %s117, %s118
    %p129 = scmp.eq.s32.totalorder %s15, 0
    %p130 = por %p128, %p129
    %p131 = scmp.ne.s32.totalorder %s117, %s118
    %p132 = scmp.eq.s32.totalorder %s16, 1
    %p133 = por %p131, %p132
    %p135 = scmp.ne.s32.totalorder %s118, %s134
    %p136 = scmp.eq.s32.totalorder %s16, 0
    %p137 = por %p135, %p136
    %p138 = scmp.le.s32.totalorder 1, %s10
    %p139 = scmp.lt.s32.totalorder %s10, 3
    %p140 = pnand %p138, %p139
    %p141 = pneg %p140
    // Predicated region
    $region9: #{bottleneck_forward.7} parent=5 // pred_check
      _
    $region10: #{bottleneck_forward.7} parent=5 // pred_check_branch
      %143 = sbr.rel (%p140) target = $region12
    $region11: #{bottleneck_forward.7} parent=5 // pred_region
      %s144 = ssub.s32 %s10, 1
      // Predicated region
      $region13: #{bottleneck_forward.7} parent=11 // pred_check
        %p145 = pneg %p57
      $region14: #{bottleneck_forward.7} parent=11 // pred_check_branch
        %147 = sbr.rel (%p145) target = $region16
      $region15: #{bottleneck_forward.7} parent=11 // pred_region
        _
      $region16: #{bottleneck_forward.7} parent=11 // pred_fallthru
        _
      // Predicated region
      $region17: #{bottleneck_forward.7} parent=11 // pred_check
        %p148 = pneg %p78
      $region18: #{bottleneck_forward.7} parent=11 // pred_check_branch
        %150 = sbr.rel (%p148) target = $region20
      $region19: #{bottleneck_forward.7} parent=11 // pred_region
        _
      $region20: #{bottleneck_forward.7} parent=11 // pred_fallthru
        _
    $region12: #{bottleneck_forward.7} parent=5 // pred_fallthru
      _
    %p151 = scmp.lt.s32.totalorder %s10, 2
    // Predicated region
    $region21: #{bottleneck_forward.7} parent=5 // pred_check
      %p152 = pneg %p151
    $region22: #{bottleneck_forward.7} parent=5 // pred_check_branch
      %154 = sbr.rel (%p152) target = $region24
    $region23: #{bottleneck_forward.7} parent=5 // pred_region
      // Predicated region
      $region25: #{bottleneck_forward.7} parent=23 // pred_check
        %p155 = pneg %p30
      $region26: #{bottleneck_forward.7} parent=23 // pred_check_branch
        %157 = sbr.rel (%p155) target = $region28
      $region27: #{bottleneck_forward.7} parent=23 // pred_region
        %s158 = smul.u32 8, %s10
        %p159 = scmp.lt.s32.totalorder %s158, 15
        %s160 = scalar_select %p159, %s158, 15
        %s161 = smul.addr %s160, 4
        %s162 = scalar_lea.vmem %s0, %s161
        %s163 = smul.u32 8, %s10
      $region28: #{bottleneck_forward.7} parent=23 // pred_fallthru
        _
      // Predicated region
      $region29: #{bottleneck_forward.7} parent=23 // pred_check
        %p164 = pneg %p98
      $region30: #{bottleneck_forward.7} parent=23 // pred_check_branch
        %166 = sbr.rel (%p164) target = $region32
      $region31: #{bottleneck_forward.7} parent=23 // pred_region
        %s167 = smul.u32 8, %s10
        %p168 = scmp.lt.s32.totalorder %s167, 15
        %s169 = scalar_select %p168, %s167, 15
        %s170 = smul.addr %s169, 4
        %s171 = scalar_lea.vmem %s3, %s170
        %s172 = smul.u32 8, %s10
      $region32: #{bottleneck_forward.7} parent=23 // pred_fallthru
        _
    $region24: #{bottleneck_forward.7} parent=5 // pred_fallthru
      _
    %p173 = scmp.le.s32.totalorder 1, %s10
    %p174 = scmp.lt.s32.totalorder %s10, 3
    %p175 = pnand %p173, %p174
    %p176 = pneg %p175
    // Predicated region
    $region33: #{bottleneck_forward.7} parent=5 // pred_check
      _
    $region34: #{bottleneck_forward.7} parent=5 // pred_check_branch
      %178 = sbr.rel (%p175) target = $region36
    $region35: #{bottleneck_forward.7} parent=5 // pred_region
      %s179 = ssub.s32 %s10, 1
      %s180 = smul.u32 8, %s15
      %p181 = scmp.lt.s32.totalorder %s180, 15
      %s182 = scalar_select %p181, %s180, 15
      %s183 = smul.addr %s182, 4
      %s184 = scalar_lea.vmem %s0, %s183
      %p185 = pneg %p36
      %p186 = pneg %p33
      %p187 = pneg %p57
      %p188 = pneg %p54
      %p189 = pneg %p78
      %p190 = pneg %p75
      %s191 = smul.u32 8, %s15
      %p192 = scmp.lt.s32.totalorder %s191, 15
      %s193 = scalar_select %p192, %s191, 15
      %s194 = smul.addr %s193, 4
      %s195 = scalar_lea.vmem %s3, %s194
      %p196 = pneg %p104
      %p197 = pneg %p101
      %p198 = pneg %p130
      %p199 = pneg %p127
      %s200 = smul.u32 8, %s15
      %p201 = scmp.lt.s32.totalorder %s200, 15
      %s202 = scalar_select %p201, %s200, 15
      %s203 = smul.addr %s202, 4
      %s204 = scalar_lea.vmem %s4, %s203
      %s205 = smul.u32 8, %s15
      %p206 = scmp.lt.s32.totalorder %s205, 15
      %s207 = scalar_select %p206, %s205, 15
      %s208 = smul.addr %s207, 4
      %s209 = scalar_lea.vmem %s0, %s208
      %s210 = smul.u32 8, %s15
      %s211 = smul.u32 8, %s15
      %p212 = scmp.lt.s32.totalorder %s211, 15
      %s213 = scalar_select %p212, %s211, 15
      %s214 = smul.addr %s213, 4
      %s215 = scalar_lea.vmem %s3, %s214
      %s216 = smul.u32 8, %s15
      %s217 = smul.u32 8, %s15
      %p218 = scmp.lt.s32.totalorder %s217, 15
      %s219 = scalar_select %p218, %s217, 15
      %s220 = smul.addr %s219, 4
      %s221 = scalar_lea.vmem %s4, %s220
      %s222 = smul.u32 8, %s15
      %v224 = vld [vmem:[%s209] sm:$0xf]
      %v225 = vld [vmem:[%s209 + $0x4] sm:$0xf]
      %v226 = vld [vmem:[%s209 + $0x8] sm:$0xf]
      %v227 = vld [vmem:[%s209 + $0xc] sm:$0xf]
      %v228 = vld [vmem:[%s209 + $0x10] sm:$0xf]
      %v229 = vld [vmem:[%s209 + $0x14] sm:$0xf]
      %v230 = vld [vmem:[%s209 + $0x18] sm:$0xf]
      %v231 = vld [vmem:[%s209 + $0x1c] sm:$0xf]
      %v232 = vld [vmem:[%s1] sm:$0xf]
      %v233 = vld [vmem:[%s2] sm:$0x1]
      %v235 = vlaneseq
      %v236 = vshrl.u32 %v235, 7
      %v237 = vsub.s32 0, %v236
      %v238 = vrot.slane %v233, %v237
      %v248 = vunpack.c.l.b16 %v224
      %v249 = vunpack.c.l.b16 %v225
      %v250 = vunpack.c.l.b16 %v226
      %v251 = vunpack.c.l.b16 %v227
      %v252 = vunpack.c.l.b16 %v228
      %v253 = vunpack.c.l.b16 %v229
      %v254 = vunpack.c.l.b16 %v230
      %v255 = vunpack.c.l.b16 %v231
      %v256 = vpack.c.b16 %v249, %v248
      %v257 = vpack.c.b16 %v251, %v250
      %v258 = vpack.c.b16 %v253, %v252
      %v259 = vpack.c.b16 %v255, %v254
      %vm260 = vcmask 64512
      %v262 = vsel %vm260, %v256, 0
      %v265 = vsel %vm260, %v257, 0
      %v268 = vsel %vm260, %v258, 0
      %v271 = vsel %vm260, %v259, 0
      %vm273 = vcmask 1043456
      %v275 = vsel %vm273, %v232, 0
      %277 = vmatprep.subr.bf16.mxu0 0
      %278 = vmatpush1.bf16.msra.mxu0 0
      %279 = vmatprep.subr.bf16.mxu0 0
      %280 = vmatpush1.bf16.msra.mxu0 0
      %281 = vmatprep.subr.bf16.mxu0 0
      %282 = vmatpush1.bf16.msra.mxu0 0
      %283 = vmatprep.subr.bf16.mxu0 0
      %284 = vmatpush1.bf16.msra.mxu0 0
      %285 = vmatprep.subr.bf16.mxu0 0
      %286 = vmatpush1.bf16.msra.mxu0 0
      %287 = vmatprep.subr.bf16.mxu0 0
      %288 = vmatpush1.bf16.msra.mxu0 0
      %289 = vmatprep.subr.bf16.mxu0 0
      %290 = vmatpush1.bf16.msra.mxu0 0
      %291 = vmatprep.subr.bf16.mxu0 0
      %292 = vmatpush1.bf16.msra.mxu0 %v275
      %293 = vmatprep.subr.bf16.mxu0 0
      %294 = vmatpush2.bf16.msra.mxu0 0
      %295 = vmatprep.subr.bf16.mxu0 0
      %296 = vmatpush2.bf16.msra.mxu0 0
      %297 = vmatprep.subr.bf16.mxu0 0
      %298 = vmatpush2.bf16.msra.mxu0 0
      %299 = vmatprep.subr.bf16.mxu0 0
      %300 = vmatpush2.bf16.msra.mxu0 0
      %301 = vmatprep.subr.bf16.mxu0 0
      %302 = vmatpush2.bf16.msra.mxu0 0
      %303 = vmatprep.subr.bf16.mxu0 0
      %304 = vmatpush2.bf16.msra.mxu0 0
      %305 = vmatprep.subr.bf16.mxu0 0
      %306 = vmatpush2.bf16.msra.mxu0 0
      %307 = vmatprep.subr.bf16.mxu0 0
      %308 = vmatpush2.bf16.msra.mxu0 0
      %309 = vmatprep.mubr.bf16.mxu0 0
      %310 = vmatmul.mubr.bf16.gmra.mxu0 %v262
      %v311 = vpop.f32.mrf.mxu0
      %v312 = vadd.f32 %v238, %v311
      %v313 = vpop.f32.mrf.mxu0
      %v314 = vpop.f32.mrf.mxu0
      %v315 = vadd.f32 %v238, %v314
      %v316 = vpop.f32.mrf.mxu0
      %317 = vmatprep.mubr.bf16.mxu0 0
      %318 = vmatmul.mubr.bf16.gmra.mxu0 %v265
      %v319 = vpop.f32.mrf.mxu0
      %v320 = vadd.f32 %v238, %v319
      %v321 = vpop.f32.mrf.mxu0
      %v322 = vpop.f32.mrf.mxu0
      %v323 = vadd.f32 %v238, %v322
      %v324 = vpop.f32.mrf.mxu0
      %325 = vmatprep.mubr.bf16.mxu0 0
      %326 = vmatmul.mubr.bf16.gmra.mxu0 %v268
      %v327 = vpop.f32.mrf.mxu0
      %v328 = vadd.f32 %v238, %v327
      %v329 = vpop.f32.mrf.mxu0
      %v330 = vpop.f32.mrf.mxu0
      %v331 = vadd.f32 %v238, %v330
      %v332 = vpop.f32.mrf.mxu0
      %333 = vmatprep.mubr.bf16.mxu0 0
      %334 = vmatmul.mubr.bf16.gmra.mxu0 %v271
      %v335 = vpop.f32.mrf.mxu0
      %v336 = vadd.f32 %v238, %v335
      %v337 = vpop.f32.mrf.mxu0
      %v338 = vpop.f32.mrf.mxu0
      %v339 = vadd.f32 %v238, %v338
      %v340 = vpop.f32.mrf.mxu0
      %341 = vdwg.mxu0
      %v342 = vld [vmem:[%s215] sm:$0xf]
      %v343 = vld [vmem:[%s215 + $0x4] sm:$0xf]
      %v344 = vld [vmem:[%s215 + $0x8] sm:$0xf]
      %v345 = vld [vmem:[%s215 + $0xc] sm:$0xf]
      %v346 = vld [vmem:[%s215 + $0x10] sm:$0xf]
      %v347 = vld [vmem:[%s215 + $0x14] sm:$0xf]
      %v348 = vld [vmem:[%s215 + $0x18] sm:$0xf]
      %v349 = vld [vmem:[%s215 + $0x1c] sm:$0xf]
      %v350 = vunpack.c.l.bf16 %v342
      %v351 = vunpack.c.l.bf16 %v343
      %v352 = vunpack.c.l.bf16 %v344
      %v353 = vunpack.c.l.bf16 %v345
      %v354 = vunpack.c.l.bf16 %v346
      %v355 = vunpack.c.l.bf16 %v347
      %v356 = vunpack.c.l.bf16 %v348
      %v357 = vunpack.c.l.bf16 %v349
      %v358 = vadd.f32 %v312, %v350
      %v359 = vadd.f32 %v315, %v351
      %v360 = vadd.f32 %v320, %v352
      %v361 = vadd.f32 %v323, %v353
      %v362 = vadd.f32 %v328, %v354
      %v363 = vadd.f32 %v331, %v355
      %v364 = vadd.f32 %v336, %v356
      %v365 = vadd.f32 %v339, %v357
      %v366 = vmax.f32 %v358, 0.0
      %v367 = vmax.f32 %v359, 0.0
      %v368 = vmax.f32 %v360, 0.0
      %v369 = vmax.f32 %v361, 0.0
      %v370 = vmax.f32 %v362, 0.0
      %v371 = vmax.f32 %v363, 0.0
      %v372 = vmax.f32 %v364, 0.0
      %v373 = vmax.f32 %v365, 0.0
      %v374 = vpack.c.bf16 %v367, %v366
      %v375 = vpack.c.bf16 %v369, %v368
      %v376 = vpack.c.bf16 %v371, %v370
      %v377 = vpack.c.bf16 %v373, %v372
      %v382 = vunpack.c.l.b16 %v374
      %v383 = vunpack.c.h.b16 %v374
      %v384 = vunpack.c.l.b16 %v375
      %v385 = vunpack.c.h.b16 %v375
      %v386 = vunpack.c.l.b16 %v376
      %v387 = vunpack.c.h.b16 %v376
      %v388 = vunpack.c.l.b16 %v377
      %v389 = vunpack.c.h.b16 %v377
      %v390 = vpack.c.b16 %v382, %v382
      %v391 = vpack.c.b16 %v383, %v383
      %v392 = vpack.c.b16 %v384, %v384
      %v393 = vpack.c.b16 %v385, %v385
      %v394 = vpack.c.b16 %v386, %v386
      %v395 = vpack.c.b16 %v387, %v387
      %v396 = vpack.c.b16 %v388, %v388
      %v397 = vpack.c.b16 %v389, %v389
      %vm406 = vcmask 125952
      %407 = vst.msk [vmem:[%s221] sm:$0xf] %vm406, %v390
      %408 = vst.msk [vmem:[%s221 + $0x4] sm:$0xf] %vm406, %v391
      %409 = vst.msk [vmem:[%s221 + $0x8] sm:$0xf] %vm406, %v392
      %410 = vst.msk [vmem:[%s221 + $0xc] sm:$0xf] %vm406, %v393
      %411 = vst.msk [vmem:[%s221 + $0x10] sm:$0xf] %vm406, %v394
      %412 = vst.msk [vmem:[%s221 + $0x14] sm:$0xf] %vm406, %v395
      %413 = vst.msk [vmem:[%s221 + $0x18] sm:$0xf] %vm406, %v396
      %414 = vst.msk [vmem:[%s221 + $0x1c] sm:$0xf] %vm406, %v397
      %s415 = smul.u32 8, %s15
      %p416 = scmp.lt.s32.totalorder %s415, 15
      %s417 = scalar_select %p416, %s415, 15
      %s418 = smul.addr %s417, 4
      %s419 = scalar_lea.vmem %s4, %s418
      // Predicated region
      $region37: #{bottleneck_forward.7} parent=35 // pred_check
        %p420 = pneg %p127
      $region38: #{bottleneck_forward.7} parent=35 // pred_check_branch
        %422 = sbr.rel (%p420) target = $region40
      $region39: #{bottleneck_forward.7} parent=35 // pred_region
        %s423 = smul.u32 8, %s15
      $region40: #{bottleneck_forward.7} parent=35 // pred_fallthru
        _
    $region36: #{bottleneck_forward.7} parent=5 // pred_fallthru
      _
    %p424 = scmp.le.s32.totalorder 2, %s10
    // Predicated region
    $region41: #{bottleneck_forward.7} parent=5 // pred_check
      %p425 = pneg %p424
    $region42: #{bottleneck_forward.7} parent=5 // pred_check_branch
      %427 = sbr.rel (%p425) target = $region44
    $region43: #{bottleneck_forward.7} parent=5 // pred_region
      %s428 = ssub.s32 %s10, 2
      // Predicated region
      $region45: #{bottleneck_forward.7} parent=43 // pred_check
        %p429 = pneg %p133
      $region46: #{bottleneck_forward.7} parent=43 // pred_check_branch
        %431 = sbr.rel (%p429) target = $region48
      $region47: #{bottleneck_forward.7} parent=43 // pred_region
        %s432 = smul.u32 8, %s16
        %p433 = scmp.lt.s32.totalorder %s432, 15
        %s434 = scalar_select %p433, %s432, 15
        %s435 = smul.addr %s434, 4
        %s436 = scalar_lea.vmem %s4, %s435
      $region48: #{bottleneck_forward.7} parent=43 // pred_fallthru
        _
    $region44: #{bottleneck_forward.7} parent=5 // pred_fallthru
      _
  $region6: #{bottleneck_forward.7} parent=0 // loop_footer
    %s14 = sadd.s32 1, %s10
  $region7: #{bottleneck_forward.7} parent=0 // loop_footer_branch
    %9 = sbr.rel target = $region3
  $region8: #{bottleneck_forward.7} parent=0 // loop_exit
    _

// kernel: bottleneck_forward.6
$region0: #{bottleneck_forward.6}
  #allocation0 [shape = 'u32[]', space=smem, size = 0x4, offset = 0x4, fixed_abs, tag = 'smem constant byte address 0x4 - core index']
  #allocation1 [shape = 'u32[144,128]{1,0:T(1,128)}', space=vmem, size = 0x12000, scoped, tag = 'internal scratch']
  %s0 = inlined_call_operand.vmem [shape: bf16[128,4], index: 0, kind: input, shape index: {}]
  %s1 = inlined_call_operand.vmem [shape: bf16[4,16], index: 1, kind: input, shape index: {}]
  %s2 = inlined_call_operand.vmem [shape: f32[1,16], index: 2, kind: input, shape index: {}]
  %s3 = inlined_call_operand.vmem [shape: bf16[128,16], index: 3, kind: output, shape index: {}]
  %s4 = sld [smem:[#allocation0]]
  $region45: #{bottleneck_forward.6} parent=0
    _
  %s6 = ssub.s32 1, %s4
  %s7 = scalar_select 0, %s6, %s4
  loop: start=0, step=1, limit=4
  $region2: #{bottleneck_forward.6} parent=0 // loop_pre_header
    _
  $region3: #{bottleneck_forward.6} parent=0 // loop_header
    %s9 = sphi 0, %s13
    %p10 = scmp.ge.s32.totalorder %s9, 4
    %s19 = sphi 0, %s21
    %s22 = sphi 0, %s19
    %s23 = sphi 0, %s22
    %s39 = sphi 0, %s23
    %s43 = sphi 0, %s43
    %s45 = sphi 0, %s43
    %s46 = sphi 0, %s45
    %s60 = sphi 0, %s46
    %s64 = sphi 0, %s64
    %s66 = sphi 0, %s64
    %s67 = sphi 0, %s66
    %s81 = sphi 0, %s67
    %s87 = sphi 0, %s89
    %s90 = sphi 0, %s87
    %s91 = sphi 0, %s90
    %s107 = sphi 0, %s91
  $region4: #{bottleneck_forward.6} parent=0 // loop_header_branch
    %12 = sbr.rel (%p10) target = $region8
  $region5: #{bottleneck_forward.6} parent=0 // loop_body
    %s14 = ssub.s32 %s9, 1
    %s15 = ssub.s32 %s9, 2
    %s16 = sadd.s32 %s9, 1
    %s17 = ssub.s32 %s9, %s16
    %p18 = scmp.eq.s32.totalorder %s17, 0
    %s20 = sadd.s32 %s19, 1
    %s21 = scalar_select %p18, %s19, %s20
    %p24 = pneg %p18
    %p25 = scmp.eq.s32.totalorder %s9, 1
    %p26 = por %p24, %p25
    %p27 = scmp.ne.s32.totalorder %s19, %s22
    %p28 = scmp.eq.s32.totalorder %s9, 0
    %p29 = por %p27, %p28
    %p30 = scmp.ne.s32.totalorder %s19, %s22
    %p31 = scmp.eq.s32.totalorder %s14, 1
    %p32 = por %p30, %p31
    %p33 = scmp.ne.s32.totalorder %s22, %s23
    %p34 = scmp.eq.s32.totalorder %s14, 0
    %p35 = por %p33, %p34
    %p36 = scmp.ne.s32.totalorder %s22, %s23
    %p37 = scmp.eq.s32.totalorder %s15, 1
    %p38 = por %p36, %p37
    %p40 = scmp.ne.s32.totalorder %s23, %s39
    %p41 = scmp.eq.s32.totalorder %s15, 0
    %p42 = por %p40, %p41
    %s44 = sadd.s32 %s43, 1
    %p47 = scmp.eq.s32.totalorder %s9, 1
    %p48 = scmp.ne.s32.totalorder %s43, %s45
    %p49 = scmp.eq.s32.totalorder %s9, 0
    %p50 = por %p48, %p49
    %p51 = scmp.ne.s32.totalorder %s43, %s45
    %p52 = scmp.eq.s32.totalorder %s14, 1
    %p53 = por %p51, %p52
    %p54 = scmp.ne.s32.totalorder %s45, %s46
    %p55 = scmp.eq.s32.totalorder %s14, 0
    %p56 = por %p54, %p55
    %p57 = scmp.ne.s32.totalorder %s45, %s46
    %p58 = scmp.eq.s32.totalorder %s15, 1
    %p59 = por %p57, %p58
    %p61 = scmp.ne.s32.totalorder %s46, %s60
    %p62 = scmp.eq.s32.totalorder %s15, 0
    %p63 = por %p61, %p62
    %s65 = sadd.s32 %s64, 1
    %p68 = scmp.eq.s32.totalorder %s9, 1
    %p69 = scmp.ne.s32.totalorder %s64, %s66
    %p70 = scmp.eq.s32.totalorder %s9, 0
    %p71 = por %p69, %p70
    %p72 = scmp.ne.s32.totalorder %s64, %s66
    %p73 = scmp.eq.s32.totalorder %s14, 1
    %p74 = por %p72, %p73
    %p75 = scmp.ne.s32.totalorder %s66, %s67
    %p76 = scmp.eq.s32.totalorder %s14, 0
    %p77 = por %p75, %p76
    %p78 = scmp.ne.s32.totalorder %s66, %s67
    %p79 = scmp.eq.s32.totalorder %s15, 1
    %p80 = por %p78, %p79
    %p82 = scmp.ne.s32.totalorder %s67, %s81
    %p83 = scmp.eq.s32.totalorder %s15, 0
    %p84 = por %p82, %p83
    %s85 = ssub.s32 %s9, %s16
    %p86 = scmp.eq.s32.totalorder %s85, 0
    %s88 = sadd.s32 %s87, 1
    %s89 = scalar_select %p86, %s87, %s88
    %p92 = pneg %p86
    %p93 = scmp.eq.s32.totalorder %s9, 1
    %p94 = por %p92, %p93
    %p95 = scmp.ne.s32.totalorder %s87, %s90
    %p96 = scmp.eq.s32.totalorder %s9, 0
    %p97 = por %p95, %p96
    %p98 = scmp.ne.s32.totalorder %s87, %s90
    %p99 = scmp.eq.s32.totalorder %s14, 1
    %p100 = por %p98, %p99
    %p101 = scmp.ne.s32.totalorder %s90, %s91
    %p102 = scmp.eq.s32.totalorder %s14, 0
    %p103 = por %p101, %p102
    %p104 = scmp.ne.s32.totalorder %s90, %s91
    %p105 = scmp.eq.s32.totalorder %s15, 1
    %p106 = por %p104, %p105
    %p108 = scmp.ne.s32.totalorder %s91, %s107
    %p109 = scmp.eq.s32.totalorder %s15, 0
    %p110 = por %p108, %p109
    %p111 = scmp.le.s32.totalorder 1, %s9
    %p112 = scmp.lt.s32.totalorder %s9, 3
    %p113 = pnand %p111, %p112
    %p114 = pneg %p113
    // Predicated region
    $region9: #{bottleneck_forward.6} parent=5 // pred_check
      _
    $region10: #{bottleneck_forward.6} parent=5 // pred_check_branch
      %116 = sbr.rel (%p113) target = $region12
    $region11: #{bottleneck_forward.6} parent=5 // pred_region
      %s117 = ssub.s32 %s9, 1
      // Predicated region
      $region13: #{bottleneck_forward.6} parent=11 // pred_check
        %p118 = pneg %p56
      $region14: #{bottleneck_forward.6} parent=11 // pred_check_branch
        %120 = sbr.rel (%p118) target = $region16
      $region15: #{bottleneck_forward.6} parent=11 // pred_region
        _
      $region16: #{bottleneck_forward.6} parent=11 // pred_fallthru
        _
      // Predicated region
      $region17: #{bottleneck_forward.6} parent=11 // pred_check
        %p121 = pneg %p77
      $region18: #{bottleneck_forward.6} parent=11 // pred_check_branch
        %123 = sbr.rel (%p121) target = $region20
      $region19: #{bottleneck_forward.6} parent=11 // pred_region
        _
      $region20: #{bottleneck_forward.6} parent=11 // pred_fallthru
        _
    $region12: #{bottleneck_forward.6} parent=5 // pred_fallthru
      _
    %p124 = scmp.lt.s32.totalorder %s9, 2
    // Predicated region
    $region21: #{bottleneck_forward.6} parent=5 // pred_check
      %p125 = pneg %p124
    $region22: #{bottleneck_forward.6} parent=5 // pred_check_branch
      %127 = sbr.rel (%p125) target = $region24
    $region23: #{bottleneck_forward.6} parent=5 // pred_region
      // Predicated region
      $region25: #{bottleneck_forward.6} parent=23 // pred_check
        %p128 = pneg %p29
      $region26: #{bottleneck_forward.6} parent=23 // pred_check_branch
        %130 = sbr.rel (%p128) target = $region28
      $region27: #{bottleneck_forward.6} parent=23 // pred_region
        %s131 = smul.u32 8, %s9
        %p132 = scmp.lt.s32.totalorder %s131, 15
        %s133 = scalar_select %p132, %s131, 15
        %s134 = smul.addr %s133, 4
        %s135 = scalar_lea.vmem %s0, %s134
        %s136 = smul.u32 8, %s9
      $region28: #{bottleneck_forward.6} parent=23 // pred_fallthru
        _
    $region24: #{bottleneck_forward.6} parent=5 // pred_fallthru
      _
    %p137 = scmp.le.s32.totalorder 1, %s9
    %p138 = scmp.lt.s32.totalorder %s9, 3
    %p139 = pnand %p137, %p138
    %p140 = pneg %p139
    // Predicated region
    $region29: #{bottleneck_forward.6} parent=5 // pred_check
      _
    $region30: #{bottleneck_forward.6} parent=5 // pred_check_branch
      %142 = sbr.rel (%p139) target = $region32
    $region31: #{bottleneck_forward.6} parent=5 // pred_region
      %s143 = ssub.s32 %s9, 1
      %s144 = smul.u32 8, %s14
      %p145 = scmp.lt.s32.totalorder %s144, 15
      %s146 = scalar_select %p145, %s144, 15
      %s147 = smul.addr %s146, 4
      %s148 = scalar_lea.vmem %s0, %s147
      %p149 = pneg %p35
      %p150 = pneg %p32
      %p151 = pneg %p56
      %p152 = pneg %p53
      %p153 = pneg %p77
      %p154 = pneg %p74
      %p155 = pneg %p103
      %p156 = pneg %p100
      %s157 = smul.u32 8, %s14
      %p158 = scmp.lt.s32.totalorder %s157, 15
      %s159 = scalar_select %p158, %s157, 15
      %s160 = smul.addr %s159, 4
      %s161 = scalar_lea.vmem %s3, %s160
      %s162 = smul.u32 8, %s14
      %p163 = scmp.lt.s32.totalorder %s162, 15
      %s164 = scalar_select %p163, %s162, 15
      %s165 = smul.addr %s164, 4
      %s166 = scalar_lea.vmem %s0, %s165
      %s167 = smul.u32 8, %s14
      %s168 = smul.u32 8, %s14
      %p169 = scmp.lt.s32.totalorder %s168, 15
      %s170 = scalar_select %p169, %s168, 15
      %s171 = smul.addr %s170, 4
      %s172 = scalar_lea.vmem %s3, %s171
      %s173 = smul.u32 8, %s14
      %v175 = vld [vmem:[%s166] sm:$0xf]
      %v176 = vld [vmem:[%s166 + $0x4] sm:$0xf]
      %v177 = vld [vmem:[%s166 + $0x8] sm:$0xf]
      %v178 = vld [vmem:[%s166 + $0xc] sm:$0xf]
      %v179 = vld [vmem:[%s166 + $0x10] sm:$0xf]
      %v180 = vld [vmem:[%s166 + $0x14] sm:$0xf]
      %v181 = vld [vmem:[%s166 + $0x18] sm:$0xf]
      %v182 = vld [vmem:[%s166 + $0x1c] sm:$0xf]
      %v183 = vld [vmem:[%s1] sm:$0x3]
      %v184 = vld [vmem:[%s2] sm:$0x1]
      %v186 = vlaneseq
      %v187 = vshrl.u32 %v186, 7
      %v188 = vsub.s32 0, %v187
      %v189 = vrot.slane %v184, %v188
      %v199 = vunpack.c.l.b16 %v175
      %v200 = vunpack.c.l.b16 %v176
      %v201 = vunpack.c.l.b16 %v177
      %v202 = vunpack.c.l.b16 %v178
      %v203 = vunpack.c.l.b16 %v179
      %v204 = vunpack.c.l.b16 %v180
      %v205 = vunpack.c.l.b16 %v181
      %v206 = vunpack.c.l.b16 %v182
      %v207 = vpack.c.b16 %v200, %v199
      %v208 = vpack.c.b16 %v202, %v201
      %v209 = vpack.c.b16 %v204, %v203
      %v210 = vpack.c.b16 %v206, %v205
      %vm211 = vcmask 31744
      %v213 = vsel %vm211, %v207, 0
      %v216 = vsel %vm211, %v208, 0
      %v219 = vsel %vm211, %v209, 0
      %v222 = vsel %vm211, %v210, 0
      %vm224 = vcmask 1041408
      %v226 = vsel %vm224, %v183, 0
      %228 = vmatprep.subr.bf16.mxu0 0
      %229 = vmatpush1.bf16.msra.mxu0 0
      %230 = vmatprep.subr.bf16.mxu0 0
      %231 = vmatpush1.bf16.msra.mxu0 0
      %232 = vmatprep.subr.bf16.mxu0 0
      %233 = vmatpush1.bf16.msra.mxu0 0
      %234 = vmatprep.subr.bf16.mxu0 0
      %235 = vmatpush1.bf16.msra.mxu0 0
      %236 = vmatprep.subr.bf16.mxu0 0
      %237 = vmatpush1.bf16.msra.mxu0 0
      %238 = vmatprep.subr.bf16.mxu0 0
      %239 = vmatpush1.bf16.msra.mxu0 0
      %240 = vmatprep.subr.bf16.mxu0 0
      %241 = vmatpush1.bf16.msra.mxu0 0
      %242 = vmatprep.subr.bf16.mxu0 0
      %243 = vmatpush1.bf16.msra.mxu0 %v226
      %244 = vmatprep.subr.bf16.mxu0 0
      %245 = vmatpush2.bf16.msra.mxu0 0
      %246 = vmatprep.subr.bf16.mxu0 0
      %247 = vmatpush2.bf16.msra.mxu0 0
      %248 = vmatprep.subr.bf16.mxu0 0
      %249 = vmatpush2.bf16.msra.mxu0 0
      %250 = vmatprep.subr.bf16.mxu0 0
      %251 = vmatpush2.bf16.msra.mxu0 0
      %252 = vmatprep.subr.bf16.mxu0 0
      %253 = vmatpush2.bf16.msra.mxu0 0
      %254 = vmatprep.subr.bf16.mxu0 0
      %255 = vmatpush2.bf16.msra.mxu0 0
      %256 = vmatprep.subr.bf16.mxu0 0
      %257 = vmatpush2.bf16.msra.mxu0 0
      %258 = vmatprep.subr.bf16.mxu0 0
      %259 = vmatpush2.bf16.msra.mxu0 0
      %260 = vmatprep.mubr.bf16.mxu0 0
      %261 = vmatmul.mubr.bf16.gmra.mxu0 %v213
      %v262 = vpop.f32.mrf.mxu0
      %v263 = vadd.f32 %v189, %v262
      %v264 = vpop.f32.mrf.mxu0
      %v265 = vpop.f32.mrf.mxu0
      %v266 = vadd.f32 %v189, %v265
      %v267 = vpop.f32.mrf.mxu0
      %268 = vmatprep.mubr.bf16.mxu0 0
      %269 = vmatmul.mubr.bf16.gmra.mxu0 %v216
      %v270 = vpop.f32.mrf.mxu0
      %v271 = vadd.f32 %v189, %v270
      %v272 = vpop.f32.mrf.mxu0
      %v273 = vpop.f32.mrf.mxu0
      %v274 = vadd.f32 %v189, %v273
      %v275 = vpop.f32.mrf.mxu0
      %276 = vmatprep.mubr.bf16.mxu0 0
      %277 = vmatmul.mubr.bf16.gmra.mxu0 %v219
      %v278 = vpop.f32.mrf.mxu0
      %v279 = vadd.f32 %v189, %v278
      %v280 = vpop.f32.mrf.mxu0
      %v281 = vpop.f32.mrf.mxu0
      %v282 = vadd.f32 %v189, %v281
      %v283 = vpop.f32.mrf.mxu0
      %284 = vmatprep.mubr.bf16.mxu0 0
      %285 = vmatmul.mubr.bf16.gmra.mxu0 %v222
      %v286 = vpop.f32.mrf.mxu0
      %v287 = vadd.f32 %v189, %v286
      %v288 = vpop.f32.mrf.mxu0
      %v289 = vpop.f32.mrf.mxu0
      %v290 = vadd.f32 %v189, %v289
      %v291 = vpop.f32.mrf.mxu0
      %292 = vdwg.mxu0
      %v293 = vpack.c.bf16 %v266, %v263
      %v294 = vpack.c.bf16 %v274, %v271
      %v295 = vpack.c.bf16 %v282, %v279
      %v296 = vpack.c.bf16 %v290, %v287
      %v301 = vunpack.c.l.b16 %v293
      %v302 = vunpack.c.h.b16 %v293
      %v303 = vunpack.c.l.b16 %v294
      %v304 = vunpack.c.h.b16 %v294
      %v305 = vunpack.c.l.b16 %v295
      %v306 = vunpack.c.h.b16 %v295
      %v307 = vunpack.c.l.b16 %v296
      %v308 = vunpack.c.h.b16 %v296
      %v309 = vpack.c.b16 %v301, %v301
      %v310 = vpack.c.b16 %v302, %v302
      %v311 = vpack.c.b16 %v303, %v303
      %v312 = vpack.c.b16 %v304, %v304
      %v313 = vpack.c.b16 %v305, %v305
      %v314 = vpack.c.b16 %v306, %v306
      %v315 = vpack.c.b16 %v307, %v307
      %v316 = vpack.c.b16 %v308, %v308
      %vm325 = vcmask 125952
      %326 = vst.msk [vmem:[%s172] sm:$0xf] %vm325, %v309
      %327 = vst.msk [vmem:[%s172 + $0x4] sm:$0xf] %vm325, %v310
      %328 = vst.msk [vmem:[%s172 + $0x8] sm:$0xf] %vm325, %v311
      %329 = vst.msk [vmem:[%s172 + $0xc] sm:$0xf] %vm325, %v312
      %330 = vst.msk [vmem:[%s172 + $0x10] sm:$0xf] %vm325, %v313
      %331 = vst.msk [vmem:[%s172 + $0x14] sm:$0xf] %vm325, %v314
      %332 = vst.msk [vmem:[%s172 + $0x18] sm:$0xf] %vm325, %v315
      %333 = vst.msk [vmem:[%s172 + $0x1c] sm:$0xf] %vm325, %v316
      %s334 = smul.u32 8, %s14
      %p335 = scmp.lt.s32.totalorder %s334, 15
      %s336 = scalar_select %p335, %s334, 15
      %s337 = smul.addr %s336, 4
      %s338 = scalar_lea.vmem %s3, %s337
      // Predicated region
      $region33: #{bottleneck_forward.6} parent=31 // pred_check
        %p339 = pneg %p100
      $region34: #{bottleneck_forward.6} parent=31 // pred_check_branch
        %341 = sbr.rel (%p339) target = $region36
      $region35: #{bottleneck_forward.6} parent=31 // pred_region
        %s342 = smul.u32 8, %s14
      $region36: #{bottleneck_forward.6} parent=31 // pred_fallthru
        _
    $region32: #{bottleneck_forward.6} parent=5 // pred_fallthru
      _
    %p343 = scmp.le.s32.totalorder 2, %s9
    // Predicated region
    $region37: #{bottleneck_forward.6} parent=5 // pred_check
      %p344 = pneg %p343
    $region38: #{bottleneck_forward.6} parent=5 // pred_check_branch
      %346 = sbr.rel (%p344) target = $region40
    $region39: #{bottleneck_forward.6} parent=5 // pred_region
      %s347 = ssub.s32 %s9, 2
      // Predicated region
      $region41: #{bottleneck_forward.6} parent=39 // pred_check
        %p348 = pneg %p106
      $region42: #{bottleneck_forward.6} parent=39 // pred_check_branch
        %350 = sbr.rel (%p348) target = $region44
      $region43: #{bottleneck_forward.6} parent=39 // pred_region
        %s351 = smul.u32 8, %s15
        %p352 = scmp.lt.s32.totalorder %s351, 15
        %s353 = scalar_select %p352, %s351, 15
        %s354 = smul.addr %s353, 4
        %s355 = scalar_lea.vmem %s3, %s354
      $region44: #{bottleneck_forward.6} parent=39 // pred_fallthru
        _
    $region40: #{bottleneck_forward.6} parent=5 // pred_fallthru
      _
  $region6: #{bottleneck_forward.6} parent=0 // loop_footer
    %s13 = sadd.s32 1, %s9
  $region7: #{bottleneck_forward.6} parent=0 // loop_footer_branch
    %8 = sbr.rel target = $region3
  $region8: #{bottleneck_forward.6} parent=0 // loop_exit
    _

// kernel: bottleneck_forward.5
$region0: #{bottleneck_forward.5}
  #allocation0 [shape = 'u32[]', space=smem, size = 0x4, offset = 0x4, fixed_abs, tag = 'smem constant byte address 0x4 - core index']
  #allocation1 [shape = 'u32[144,128]{1,0:T(1,128)}', space=vmem, size = 0x12000, scoped, tag = 'internal scratch']
  %s0 = inlined_call_operand.vmem [shape: bf16[4,2,90,8], index: 0, kind: input, shape index: {}]
  %s1 = inlined_call_operand.vmem [shape: bf16[1,9,8,8], index: 1, kind: input, shape index: {}]
  %s2 = inlined_call_operand.vmem [shape: f32[1,1,8], index: 2, kind: input, shape index: {}]
  %s3 = inlined_call_operand.vmem [shape: bf16[2,72,8], index: 3, kind: output, shape index: {}]
  %s4 = sld [smem:[#allocation0]]
  $region86: #{bottleneck_forward.5} parent=0
    _
  %s6 = ssub.s32 1, %s4
  %s7 = scalar_select 0, %s6, %s4
  $region1: #{bottleneck_forward.5} parent=0
    #allocation2 [shape = 'u8[196608]{0}', space=vmem, size = 0x30000, scoped, tag = 'input window, operand 0']
    loop: start=0, step=1, limit=4
    $region2: #{bottleneck_forward.5} parent=1 // loop_pre_header
      _
    $region3: #{bottleneck_forward.5} parent=1 // loop_header
      %s9 = sphi 0, %s13
      %p10 = scmp.ge.s32.totalorder %s9, 4
      %s16 = sphi 0, %s28
      %s17 = sphi 0, %s24
      %s18 = sphi 0, %s16
      %s19 = sphi 0, %s17
      %s20 = sphi 0, %s18
      %s21 = sphi 0, %s19
      %s33 = sphi 0, %s35
      %s36 = sphi 0, %s33
      %s37 = sphi 0, %s36
      %s53 = sphi 0, %s37
      %s59 = sphi 0, %s61
      %s62 = sphi 0, %s59
      %s63 = sphi 0, %s62
      %s79 = sphi 0, %s63
      %s85 = sphi 0, %s87
      %s88 = sphi 0, %s85
      %s89 = sphi 0, %s88
      %s105 = sphi 0, %s89
      %s113 = sphi 0, %s115
      %s116 = sphi 0, %s113
      %s117 = sphi 0, %s116
      %s133 = sphi 0, %s117
    $region4: #{bottleneck_forward.5} parent=1 // loop_header_branch
      %12 = sbr.rel (%p10) target = $region8
    $region5: #{bottleneck_forward.5} parent=1 // loop_body
      %s14 = ssub.s32 %s9, 1
      %s15 = ssub.s32 %s9, 2
      %s22 = sadd.s32 1, %s17
      %p23 = scmp.ge.s32.totalorder %s22, 1
      %s24 = scalar_select %p23, 0, %s22
      %s25 = sadd.s32 1, %s16
      %s26 = scalar_select %p23, %s25, %s16
      %p27 = scmp.ge.s32.totalorder %s26, 2
      %s28 = scalar_select %p27, 0, %s26
      %s29 = ssub.s32 %s16, %s28
      %s30 = ssub.s32 %s17, %s24
      %s31 = sor.u32 %s29, %s30
      %p32 = scmp.eq.s32.totalorder %s31, 0
      %s34 = sadd.s32 %s33, 1
      %s35 = scalar_select %p32, %s33, %s34
      %p38 = pneg %p32
      %p39 = scmp.eq.s32.totalorder %s9, 1
      %p40 = por %p38, %p39
      %p41 = scmp.ne.s32.totalorder %s33, %s36
      %p42 = scmp.eq.s32.totalorder %s9, 0
      %p43 = por %p41, %p42
      %p44 = scmp.ne.s32.totalorder %s33, %s36
      %p45 = scmp.eq.s32.totalorder %s14, 1
      %p46 = por %p44, %p45
      %p47 = scmp.ne.s32.totalorder %s36, %s37
      %p48 = scmp.eq.s32.totalorder %s14, 0
      %p49 = por %p47, %p48
      %p50 = scmp.ne.s32.totalorder %s36, %s37
      %p51 = scmp.eq.s32.totalorder %s15, 1
      %p52 = por %p50, %p51
      %p54 = scmp.ne.s32.totalorder %s37, %s53
      %p55 = scmp.eq.s32.totalorder %s15, 0
      %p56 = por %p54, %p55
      %s57 = ssub.s32 %s17, %s24
      %p58 = scmp.eq.s32.totalorder %s57, 0
      %s60 = sadd.s32 %s59, 1
      %s61 = scalar_select %p58, %s59, %s60
      %p64 = pneg %p58
      %p65 = scmp.eq.s32.totalorder %s9, 1
      %p66 = por %p64, %p65
      %p67 = scmp.ne.s32.totalorder %s59, %s62
      %p68 = scmp.eq.s32.totalorder %s9, 0
      %p69 = por %p67, %p68
      %p70 = scmp.ne.s32.totalorder %s59, %s62
      %p71 = scmp.eq.s32.totalorder %s14, 1
      %p72 = por %p70, %p71
      %p73 = scmp.ne.s32.totalorder %s62, %s63
      %p74 = scmp.eq.s32.totalorder %s14, 0
      %p75 = por %p73, %p74
      %p76 = scmp.ne.s32.totalorder %s62, %s63
      %p77 = scmp.eq.s32.totalorder %s15, 1
      %p78 = por %p76, %p77
      %p80 = scmp.ne.s32.totalorder %s63, %s79
      %p81 = scmp.eq.s32.totalorder %s15, 0
      %p82 = por %p80, %p81
      %s83 = ssub.s32 %s17, %s24
      %p84 = scmp.eq.s32.totalorder %s83, 0
      %s86 = sadd.s32 %s85, 1
      %s87 = scalar_select %p84, %s85, %s86
      %p90 = pneg %p84
      %p91 = scmp.eq.s32.totalorder %s9, 1
      %p92 = por %p90, %p91
      %p93 = scmp.ne.s32.totalorder %s85, %s88
      %p94 = scmp.eq.s32.totalorder %s9, 0
      %p95 = por %p93, %p94
      %p96 = scmp.ne.s32.totalorder %s85, %s88
      %p97 = scmp.eq.s32.totalorder %s14, 1
      %p98 = por %p96, %p97
      %p99 = scmp.ne.s32.totalorder %s88, %s89
      %p100 = scmp.eq.s32.totalorder %s14, 0
      %p101 = por %p99, %p100
      %p102 = scmp.ne.s32.totalorder %s88, %s89
      %p103 = scmp.eq.s32.totalorder %s15, 1
      %p104 = por %p102, %p103
      %p106 = scmp.ne.s32.totalorder %s89, %s105
      %p107 = scmp.eq.s32.totalorder %s15, 0
      %p108 = por %p106, %p107
      %s109 = ssub.s32 %s16, %s28
      %s110 = ssub.s32 %s17, %s24
      %s111 = sor.u32 %s109, %s110
      %p112 = scmp.eq.s32.totalorder %s111, 0
      %s114 = sadd.s32 %s113, 1
      %s115 = scalar_select %p112, %s113, %s114
      %p118 = pneg %p112
      %p119 = scmp.eq.s32.totalorder %s9, 1
      %p120 = por %p118, %p119
      %p121 = scmp.ne.s32.totalorder %s113, %s116
      %p122 = scmp.eq.s32.totalorder %s9, 0
      %p123 = por %p121, %p122
      %p124 = scmp.ne.s32.totalorder %s113, %s116
      %p125 = scmp.eq.s32.totalorder %s14, 1
      %p126 = por %p124, %p125
      %p127 = scmp.ne.s32.totalorder %s116, %s117
      %p128 = scmp.eq.s32.totalorder %s14, 0
      %p129 = por %p127, %p128
      %p130 = scmp.ne.s32.totalorder %s116, %s117
      %p131 = scmp.eq.s32.totalorder %s15, 1
      %p132 = por %p130, %p131
      %p134 = scmp.ne.s32.totalorder %s117, %s133
      %p135 = scmp.eq.s32.totalorder %s15, 0
      %p136 = por %p134, %p135
      %p137 = scmp.le.s32.totalorder 1, %s9
      %p138 = scmp.lt.s32.totalorder %s9, 3
      %p139 = pnand %p137, %p138
      %p140 = pneg %p139
      // Predicated region
      $region9: #{bottleneck_forward.5} parent=5 // pred_check
        _
      $region10: #{bottleneck_forward.5} parent=5 // pred_check_branch
        %142 = sbr.rel (%p139) target = $region12
      $region11: #{bottleneck_forward.5} parent=5 // pred_region
        %s143 = ssub.s32 %s9, 1
        // Predicated region
        $region13: #{bottleneck_forward.5} parent=11 // pred_check
          %p144 = pneg %p75
        $region14: #{bottleneck_forward.5} parent=11 // pred_check_branch
          %146 = sbr.rel (%p144) target = $region16
        $region15: #{bottleneck_forward.5} parent=11 // pred_region
          %p147 = scmp.lt.s32.totalorder %s19, 0
          %s148 = scalar_select %p147, %s19, 0
          %s149 = smul.addr %s148, 9
          %s150 = smul.addr %s149, 4
          %s151 = scalar_lea.vmem %s1, %s150
        $region16: #{bottleneck_forward.5} parent=11 // pred_fallthru
          _
        // Predicated region
        $region17: #{bottleneck_forward.5} parent=11 // pred_check
          %p152 = pneg %p101
        $region18: #{bottleneck_forward.5} parent=11 // pred_check_branch
          %154 = sbr.rel (%p152) target = $region20
        $region19: #{bottleneck_forward.5} parent=11 // pred_region
          %p155 = scmp.lt.s32.totalorder %s19, 0
          %s156 = scalar_select %p155, %s19, 0
          %s157 = scalar_lea.vmem %s2, %s156
        $region20: #{bottleneck_forward.5} parent=11 // pred_fallthru
          _
      $region12: #{bottleneck_forward.5} parent=5 // pred_fallthru
        _
      %p158 = scmp.lt.s32.totalorder %s9, 2
      // Predicated region
      $region21: #{bottleneck_forward.5} parent=5 // pred_check
        %p159 = pneg %p158
      $region22: #{bottleneck_forward.5} parent=5 // pred_check_branch
        %161 = sbr.rel (%p159) target = $region24
      $region23: #{bottleneck_forward.5} parent=5 // pred_region
        // Predicated region
        $region25: #{bottleneck_forward.5} parent=23 // pred_check
          %p162 = pneg %p43
        $region26: #{bottleneck_forward.5} parent=23 // pred_check_branch
          %164 = sbr.rel (%p162) target = $region28
        $region27: #{bottleneck_forward.5} parent=23 // pred_region
          %s165 = sand.u32 %s33, 1
          %s166 = sand.u32 %s33, 1
          %s167 = smul.addr %s166, 192
          %s168 = scalar_lea.vmem [#allocation2], %s167
          %s169 = smul.addr %s16, 12
          %s170 = sadd.s32 %s17, %s169
          %s171 = smul.addr %s170, 4
          %s172 = scalar_lea.vmem %s0, %s171
          // Predicated region
          $region29: #{bottleneck_forward.5} parent=27 // pred_check
            _
          $region30: #{bottleneck_forward.5} parent=27 // pred_check_branch
            %174 = sbr.rel (0) target = $region32
          $region31: #{bottleneck_forward.5} parent=27 // pred_region
            // Predicated region
            $region33: #{bottleneck_forward.5} parent=31 // pred_check
              _
            $region34: #{bottleneck_forward.5} parent=31 // pred_check_branch
              %176 = sbr.rel target = $region36
            $region35: #{bottleneck_forward.5} parent=31 // pred_region
              // Predicated region
              $region48: #{bottleneck_forward.5} parent=35 // pred_check
                _
              $region49: #{bottleneck_forward.5} parent=35 // pred_check_branch
                %286 = sbr.rel (0) target = $region51
              $region50: #{bottleneck_forward.5} parent=35 // pred_region
                loop: start=0, step=1, limit=1
                $region52: #{bottleneck_forward.5} parent=50 // loop_pre_header
                  _
                $region53: #{bottleneck_forward.5} parent=50 // loop_header
                  %s288 = sphi 0, %s292
                  %p289 = scmp.ge.s32.totalorder %s288, 1
                  %s293 = sphi %s172, %s172
                  %s294 = sphi %s168, %s168
                $region54: #{bottleneck_forward.5} parent=50 // loop_header_branch
                  %291 = sbr.rel (%p289) target = $region58
                $region55: #{bottleneck_forward.5} parent=50 // loop_body
                  _
                $region56: #{bottleneck_forward.5} parent=50 // loop_footer
                  %s292 = sadd.s32 1, %s288
                $region57: #{bottleneck_forward.5} parent=50 // loop_footer_branch
                  %287 = sbr.rel target = $region53
                $region58: #{bottleneck_forward.5} parent=50 // loop_exit
                  _
                %s296 = ssub.s32 16, 1
                loop: start=0, step=1, limit=1
                $region59: #{bottleneck_forward.5} parent=50 // loop_pre_header
                  _
                $region60: #{bottleneck_forward.5} parent=50 // loop_header
                  %s298 = sphi 0, %s302
                  %p299 = scmp.ge.s32.totalorder %s298, 1
                  %s303 = sphi %s172, %s172
                  %s304 = sphi %s168, %s168
                $region61: #{bottleneck_forward.5} parent=50 // loop_header_branch
                  %301 = sbr.rel (%p299) target = $region65
                $region62: #{bottleneck_forward.5} parent=50 // loop_body
                  %v305 = vld [vmem:[%s303] sm:%s296]
                  %306 = vst [vmem:[%s304] sm:%s296] %v305
                  %v307 = vld [vmem:[%s303 + $0x4] sm:%s296]
                  %308 = vst [vmem:[%s304 + $0x4] sm:%s296] %v307
                  %v309 = vld [vmem:[%s303 + $0x8] sm:%s296]
                  %310 = vst [vmem:[%s304 + $0x8] sm:%s296] %v309
                  %v311 = vld [vmem:[%s303 + $0xc] sm:%s296]
                  %312 = vst [vmem:[%s304 + $0xc] sm:%s296] %v311
                  %v313 = vld [vmem:[%s303 + $0x10] sm:%s296]
                  %314 = vst [vmem:[%s304 + $0x10] sm:%s296] %v313
                  %v315 = vld [vmem:[%s303 + $0x14] sm:%s296]
                  %316 = vst [vmem:[%s304 + $0x14] sm:%s296] %v315
                  %v317 = vld [vmem:[%s303 + $0x18] sm:%s296]
                  %318 = vst [vmem:[%s304 + $0x18] sm:%s296] %v317
                  %v319 = vld [vmem:[%s303 + $0x1c] sm:%s296]
                  %320 = vst [vmem:[%s304 + $0x1c] sm:%s296] %v319
                  %v321 = vld [vmem:[%s303 + $0x20] sm:%s296]
                  %322 = vst [vmem:[%s304 + $0x20] sm:%s296] %v321
                  %v323 = vld [vmem:[%s303 + $0x24] sm:%s296]
                  %324 = vst [vmem:[%s304 + $0x24] sm:%s296] %v323
                  %v325 = vld [vmem:[%s303 + $0x28] sm:%s296]
                  %326 = vst [vmem:[%s304 + $0x28] sm:%s296] %v325
                  %v327 = vld [vmem:[%s303 + $0x2c] sm:%s296]
                  %328 = vst [vmem:[%s304 + $0x2c] sm:%s296] %v327
                  %v329 = vld [vmem:[%s303 + $0x60] sm:%s296]
                  %330 = vst [vmem:[%s304 + $0x30] sm:%s296] %v329
                  %v331 = vld [vmem:[%s303 + $0x64] sm:%s296]
                  %332 = vst [vmem:[%s304 + $0x34] sm:%s296] %v331
                  %v333 = vld [vmem:[%s303 + $0x68] sm:%s296]
                  %334 = vst [vmem:[%s304 + $0x38] sm:%s296] %v333
                  %v335 = vld [vmem:[%s303 + $0x6c] sm:%s296]
                  %336 = vst [vmem:[%s304 + $0x3c] sm:%s296] %v335
                  %v337 = vld [vmem:[%s303 + $0x70] sm:%s296]
                  %338 = vst [vmem:[%s304 + $0x40] sm:%s296] %v337
                  %v339 = vld [vmem:[%s303 + $0x74] sm:%s296]
                  %340 = vst [vmem:[%s304 + $0x44] sm:%s296] %v339
                  %v341 = vld [vmem:[%s303 + $0x78] sm:%s296]
                  %342 = vst [vmem:[%s304 + $0x48] sm:%s296] %v341
                  %v343 = vld [vmem:[%s303 + $0x7c] sm:%s296]
                  %344 = vst [vmem:[%s304 + $0x4c] sm:%s296] %v343
                  %v345 = vld [vmem:[%s303 + $0x80] sm:%s296]
                  %346 = vst [vmem:[%s304 + $0x50] sm:%s296] %v345
                  %v347 = vld [vmem:[%s303 + $0x84] sm:%s296]
                  %348 = vst [vmem:[%s304 + $0x54] sm:%s296] %v347
                  %v349 = vld [vmem:[%s303 + $0x88] sm:%s296]
                  %350 = vst [vmem:[%s304 + $0x58] sm:%s296] %v349
                  %v351 = vld [vmem:[%s303 + $0x8c] sm:%s296]
                  %352 = vst [vmem:[%s304 + $0x5c] sm:%s296] %v351
                  %v353 = vld [vmem:[%s303 + $0xc0] sm:%s296]
                  %354 = vst [vmem:[%s304 + $0x60] sm:%s296] %v353
                  %v355 = vld [vmem:[%s303 + $0xc4] sm:%s296]
                  %356 = vst [vmem:[%s304 + $0x64] sm:%s296] %v355
                  %v357 = vld [vmem:[%s303 + $0xc8] sm:%s296]
                  %358 = vst [vmem:[%s304 + $0x68] sm:%s296] %v357
                  %v359 = vld [vmem:[%s303 + $0xcc] sm:%s296]
                  %360 = vst [vmem:[%s304 + $0x6c] sm:%s296] %v359
                  %v361 = vld [vmem:[%s303 + $0xd0] sm:%s296]
                  %362 = vst [vmem:[%s304 + $0x70] sm:%s296] %v361
                  %v363 = vld [vmem:[%s303 + $0xd4] sm:%s296]
                  %364 = vst [vmem:[%s304 + $0x74] sm:%s296] %v363
                  %v365 = vld [vmem:[%s303 + $0xd8] sm:%s296]
                  %366 = vst [vmem:[%s304 + $0x78] sm:%s296] %v365
                  %v367 = vld [vmem:[%s303 + $0xdc] sm:%s296]
                  %368 = vst [vmem:[%s304 + $0x7c] sm:%s296] %v367
                  %v369 = vld [vmem:[%s303 + $0xe0] sm:%s296]
                  %370 = vst [vmem:[%s304 + $0x80] sm:%s296] %v369
                  %v371 = vld [vmem:[%s303 + $0xe4] sm:%s296]
                  %372 = vst [vmem:[%s304 + $0x84] sm:%s296] %v371
                  %v373 = vld [vmem:[%s303 + $0xe8] sm:%s296]
                  %374 = vst [vmem:[%s304 + $0x88] sm:%s296] %v373
                  %v375 = vld [vmem:[%s303 + $0xec] sm:%s296]
                  %376 = vst [vmem:[%s304 + $0x8c] sm:%s296] %v375
                  %v377 = vld [vmem:[%s303 + $0x120] sm:%s296]
                  %378 = vst [vmem:[%s304 + $0x90] sm:%s296] %v377
                  %v379 = vld [vmem:[%s303 + $0x124] sm:%s296]
                  %380 = vst [vmem:[%s304 + $0x94] sm:%s296] %v379
                  %v381 = vld [vmem:[%s303 + $0x128] sm:%s296]
                  %382 = vst [vmem:[%s304 + $0x98] sm:%s296] %v381
                  %v383 = vld [vmem:[%s303 + $0x12c] sm:%s296]
                  %384 = vst [vmem:[%s304 + $0x9c] sm:%s296] %v383
                  %v385 = vld [vmem:[%s303 + $0x130] sm:%s296]
                  %386 = vst [vmem:[%s304 + $0xa0] sm:%s296] %v385
                  %v387 = vld [vmem:[%s303 + $0x134] sm:%s296]
                  %388 = vst [vmem:[%s304 + $0xa4] sm:%s296] %v387
                  %v389 = vld [vmem:[%s303 + $0x138] sm:%s296]
                  %390 = vst [vmem:[%s304 + $0xa8] sm:%s296] %v389
                  %v391 = vld [vmem:[%s303 + $0x13c] sm:%s296]
                  %392 = vst [vmem:[%s304 + $0xac] sm:%s296] %v391
                  %v393 = vld [vmem:[%s303 + $0x140] sm:%s296]
                  %394 = vst [vmem:[%s304 + $0xb0] sm:%s296] %v393
                  %v395 = vld [vmem:[%s303 + $0x144] sm:%s296]
                  %396 = vst [vmem:[%s304 + $0xb4] sm:%s296] %v395
                  %v397 = vld [vmem:[%s303 + $0x148] sm:%s296]
                  %398 = vst [vmem:[%s304 + $0xb8] sm:%s296] %v397
                  %v399 = vld [vmem:[%s303 + $0x14c] sm:%s296]
                  %400 = vst [vmem:[%s304 + $0xbc] sm:%s296] %v399
                $region63: #{bottleneck_forward.5} parent=50 // loop_footer
                  %s302 = sadd.s32 1, %s298
                $region64: #{bottleneck_forward.5} parent=50 // loop_footer_branch
                  %297 = sbr.rel target = $region60
                $region65: #{bottleneck_forward.5} parent=50 // loop_exit
                  _
              $region51: #{bottleneck_forward.5} parent=35 // pred_fallthru
                _
            $region36: #{bottleneck_forward.5} parent=31 // pred_fallthru
              _
            // Predicated region
            $region37: #{bottleneck_forward.5} parent=31 // pred_check
              _
            $region38: #{bottleneck_forward.5} parent=31 // pred_check_branch
              %178 = sbr.rel (0) target = $region40
            $region39: #{bottleneck_forward.5} parent=31 // pred_region
              %s180 = ssub.s32 16, 1
              loop: start=0, step=1, limit=1
              $region41: #{bottleneck_forward.5} parent=39 // loop_pre_header
                _
              $region42: #{bottleneck_forward.5} parent=39 // loop_header
                %s182 = sphi 0, %s186
                %p183 = scmp.ge.s32.totalorder %s182, 1
                %s187 = sphi %s172, %s172
                %s188 = sphi %s168, %s168
              $region43: #{bottleneck_forward.5} parent=39 // loop_header_branch
                %185 = sbr.rel (%p183) target = $region47
              $region44: #{bottleneck_forward.5} parent=39 // loop_body
                %v189 = vld [vmem:[%s187] sm:%s180]
                %190 = vst [vmem:[%s188] sm:%s180] %v189
                %v191 = vld [vmem:[%s187 + $0x4] sm:%s180]
                %192 = vst [vmem:[%s188 + $0x4] sm:%s180] %v191
                %v193 = vld [vmem:[%s187 + $0x8] sm:%s180]
                %194 = vst [vmem:[%s188 + $0x8] sm:%s180] %v193
                %v195 = vld [vmem:[%s187 + $0xc] sm:%s180]
                %196 = vst [vmem:[%s188 + $0xc] sm:%s180] %v195
                %v197 = vld [vmem:[%s187 + $0x10] sm:%s180]
                %198 = vst [vmem:[%s188 + $0x10] sm:%s180] %v197
                %v199 = vld [vmem:[%s187 + $0x14] sm:%s180]
                %200 = vst [vmem:[%s188 + $0x14] sm:%s180] %v199
                %v201 = vld [vmem:[%s187 + $0x18] sm:%s180]
                %202 = vst [vmem:[%s188 + $0x18] sm:%s180] %v201
                %v203 = vld [vmem:[%s187 + $0x1c] sm:%s180]
                %204 = vst [vmem:[%s188 + $0x1c] sm:%s180] %v203
                %v205 = vld [vmem:[%s187 + $0x20] sm:%s180]
                %206 = vst [vmem:[%s188 + $0x20] sm:%s180] %v205
                %v207 = vld [vmem:[%s187 + $0x24] sm:%s180]
                %208 = vst [vmem:[%s188 + $0x24] sm:%s180] %v207
                %v209 = vld [vmem:[%s187 + $0x28] sm:%s180]
                %210 = vst [vmem:[%s188 + $0x28] sm:%s180] %v209
                %v211 = vld [vmem:[%s187 + $0x2c] sm:%s180]
                %212 = vst [vmem:[%s188 + $0x2c] sm:%s180] %v211
                %v213 = vld [vmem:[%s187 + $0x60] sm:%s180]
                %214 = vst [vmem:[%s188 + $0x30] sm:%s180] %v213
                %v215 = vld [vmem:[%s187 + $0x64] sm:%s180]
                %216 = vst [vmem:[%s188 + $0x34] sm:%s180] %v215
                %v217 = vld [vmem:[%s187 + $0x68] sm:%s180]
                %218 = vst [vmem:[%s188 + $0x38] sm:%s180] %v217
                %v219 = vld [vmem:[%s187 + $0x6c] sm:%s180]
                %220 = vst [vmem:[%s188 + $0x3c] sm:%s180] %v219
                %v221 = vld [vmem:[%s187 + $0x70] sm:%s180]
                %222 = vst [vmem:[%s188 + $0x40] sm:%s180] %v221
                %v223 = vld [vmem:[%s187 + $0x74] sm:%s180]
                %224 = vst [vmem:[%s188 + $0x44] sm:%s180] %v223
                %v225 = vld [vmem:[%s187 + $0x78] sm:%s180]
                %226 = vst [vmem:[%s188 + $0x48] sm:%s180] %v225
                %v227 = vld [vmem:[%s187 + $0x7c] sm:%s180]
                %228 = vst [vmem:[%s188 + $0x4c] sm:%s180] %v227
                %v229 = vld [vmem:[%s187 + $0x80] sm:%s180]
                %230 = vst [vmem:[%s188 + $0x50] sm:%s180] %v229
                %v231 = vld [vmem:[%s187 + $0x84] sm:%s180]
                %232 = vst [vmem:[%s188 + $0x54] sm:%s180] %v231
                %v233 = vld [vmem:[%s187 + $0x88] sm:%s180]
                %234 = vst [vmem:[%s188 + $0x58] sm:%s180] %v233
                %v235 = vld [vmem:[%s187 + $0x8c] sm:%s180]
                %236 = vst [vmem:[%s188 + $0x5c] sm:%s180] %v235
                %v237 = vld [vmem:[%s187 + $0xc0] sm:%s180]
                %238 = vst [vmem:[%s188 + $0x60] sm:%s180] %v237
                %v239 = vld [vmem:[%s187 + $0xc4] sm:%s180]
                %240 = vst [vmem:[%s188 + $0x64] sm:%s180] %v239
                %v241 = vld [vmem:[%s187 + $0xc8] sm:%s180]
                %242 = vst [vmem:[%s188 + $0x68] sm:%s180] %v241
                %v243 = vld [vmem:[%s187 + $0xcc] sm:%s180]
                %244 = vst [vmem:[%s188 + $0x6c] sm:%s180] %v243
                %v245 = vld [vmem:[%s187 + $0xd0] sm:%s180]
                %246 = vst [vmem:[%s188 + $0x70] sm:%s180] %v245
                %v247 = vld [vmem:[%s187 + $0xd4] sm:%s180]
                %248 = vst [vmem:[%s188 + $0x74] sm:%s180] %v247
                %v249 = vld [vmem:[%s187 + $0xd8] sm:%s180]
                %250 = vst [vmem:[%s188 + $0x78] sm:%s180] %v249
                %v251 = vld [vmem:[%s187 + $0xdc] sm:%s180]
                %252 = vst [vmem:[%s188 + $0x7c] sm:%s180] %v251
                %v253 = vld [vmem:[%s187 + $0xe0] sm:%s180]
                %254 = vst [vmem:[%s188 + $0x80] sm:%s180] %v253
                %v255 = vld [vmem:[%s187 + $0xe4] sm:%s180]
                %256 = vst [vmem:[%s188 + $0x84] sm:%s180] %v255
                %v257 = vld [vmem:[%s187 + $0xe8] sm:%s180]
                %258 = vst [vmem:[%s188 + $0x88] sm:%s180] %v257
                %v259 = vld [vmem:[%s187 + $0xec] sm:%s180]
                %260 = vst [vmem:[%s188 + $0x8c] sm:%s180] %v259
                %v261 = vld [vmem:[%s187 + $0x120] sm:%s180]
                %262 = vst [vmem:[%s188 + $0x90] sm:%s180] %v261
                %v263 = vld [vmem:[%s187 + $0x124] sm:%s180]
                %264 = vst [vmem:[%s188 + $0x94] sm:%s180] %v263
                %v265 = vld [vmem:[%s187 + $0x128] sm:%s180]
                %266 = vst [vmem:[%s188 + $0x98] sm:%s180] %v265
                %v267 = vld [vmem:[%s187 + $0x12c] sm:%s180]
                %268 = vst [vmem:[%s188 + $0x9c] sm:%s180] %v267
                %v269 = vld [vmem:[%s187 + $0x130] sm:%s180]
                %270 = vst [vmem:[%s188 + $0xa0] sm:%s180] %v269
                %v271 = vld [vmem:[%s187 + $0x134] sm:%s180]
                %272 = vst [vmem:[%s188 + $0xa4] sm:%s180] %v271
                %v273 = vld [vmem:[%s187 + $0x138] sm:%s180]
                %274 = vst [vmem:[%s188 + $0xa8] sm:%s180] %v273
                %v275 = vld [vmem:[%s187 + $0x13c] sm:%s180]
                %276 = vst [vmem:[%s188 + $0xac] sm:%s180] %v275
                %v277 = vld [vmem:[%s187 + $0x140] sm:%s180]
                %278 = vst [vmem:[%s188 + $0xb0] sm:%s180] %v277
                %v279 = vld [vmem:[%s187 + $0x144] sm:%s180]
                %280 = vst [vmem:[%s188 + $0xb4] sm:%s180] %v279
                %v281 = vld [vmem:[%s187 + $0x148] sm:%s180]
                %282 = vst [vmem:[%s188 + $0xb8] sm:%s180] %v281
                %v283 = vld [vmem:[%s187 + $0x14c] sm:%s180]
                %284 = vst [vmem:[%s188 + $0xbc] sm:%s180] %v283
              $region45: #{bottleneck_forward.5} parent=39 // loop_footer
                %s186 = sadd.s32 1, %s182
              $region46: #{bottleneck_forward.5} parent=39 // loop_footer_branch
                %181 = sbr.rel target = $region42
              $region47: #{bottleneck_forward.5} parent=39 // loop_exit
                _
            $region40: #{bottleneck_forward.5} parent=31 // pred_fallthru
              _
          $region32: #{bottleneck_forward.5} parent=27 // pred_fallthru
            _
          %401 = vnop
        $region28: #{bottleneck_forward.5} parent=23 // pred_fallthru
          _
      $region24: #{bottleneck_forward.5} parent=5 // pred_fallthru
        _
      %p402 = scmp.le.s32.totalorder 1, %s9
      %p403 = scmp.lt.s32.totalorder %s9, 3
      %p404 = pnand %p402, %p403
      %p405 = pneg %p404
      // Predicated region
      $region66: #{bottleneck_forward.5} parent=5 // pred_check
        _
      $region67: #{bottleneck_forward.5} parent=5 // pred_check_branch
        %407 = sbr.rel (%p404) target = $region69
      $region68: #{bottleneck_forward.5} parent=5 // pred_region
        %s408 = ssub.s32 %s9, 1
        %s409 = sand.u32 %s36, 1
        %s410 = sand.u32 %s36, 1
        %s411 = smul.addr %s410, 192
        %s412 = scalar_lea.vmem [#allocation2], %s411
        // Predicated region
        $region70: #{bottleneck_forward.5} parent=68 // pred_check
          %p413 = pneg %p49
        $region71: #{bottleneck_forward.5} parent=68 // pred_check_branch
          %415 = sbr.rel (%p413) target = $region73
        $region72: #{bottleneck_forward.5} parent=68 // pred_region
          _
        $region73: #{bottleneck_forward.5} parent=68 // pred_fallthru
          _
        %s416 = sand.u32 %s36, 1
        %s417 = sand.u32 %s36, 1
        %s418 = smul.addr %s417, 192
        %s419 = scalar_lea.vmem [#allocation2], %s418
        %p420 = pneg %p49
        %p421 = pneg %p46
        %p422 = scmp.lt.s32.totalorder %s19, 0
        %s423 = scalar_select %p422, %s19, 0
        %s424 = smul.addr %s423, 9
        %s425 = smul.addr %s424, 4
        %s426 = scalar_lea.vmem %s1, %s425
        %p427 = pneg %p75
        %p428 = pneg %p72
        %p429 = scmp.lt.s32.totalorder %s19, 0
        %s430 = scalar_select %p429, %s19, 0
        %s431 = scalar_lea.vmem %s2, %s430
        %p432 = pneg %p101
        %p433 = pneg %p98
        %p434 = pneg %p129
        %p435 = pneg %p126
        %p436 = scmp.lt.s32.totalorder %s18, 1
        %s437 = scalar_select %p436, %s18, 1
        %p438 = scmp.lt.s32.totalorder %s19, 0
        %s439 = scalar_select %p438, %s19, 0
        %s440 = smul.addr %s437, 9
        %s441 = sadd.s32 %s439, %s440
        %s442 = smul.addr %s441, 4
        %s443 = scalar_lea.vmem %s3, %s442
        %p444 = scmp.lt.s32.totalorder %s19, 0
        %s445 = scalar_select %p444, %s19, 0
        %s446 = smul.addr %s445, 9
        %s447 = smul.addr %s446, 4
        %s448 = scalar_lea.vmem %s1, %s447
        %p449 = scmp.lt.s32.totalorder %s19, 0
        %s450 = scalar_select %p449, %s19, 0
        %s451 = scalar_lea.vmem %s2, %s450
        %p452 = scmp.lt.s32.totalorder %s18, 1
        %s453 = scalar_select %p452, %s18, 1
        %p454 = scmp.lt.s32.totalorder %s19, 0
        %s455 = scalar_select %p454, %s19, 0
        %s456 = smul.addr %s453, 9
        %s457 = sadd.s32 %s455, %s456
        %s458 = smul.addr %s457, 4
        %s459 = scalar_lea.vmem %s3, %s458
        %v461 = vld [vmem:[%s412] sm:$0xf]
        %v462 = vld [vmem:[%s412 + $0x4] sm:$0xf]
        %v463 = vld [vmem:[%s412 + $0x8] sm:$0xf]
        %v464 = vld [vmem:[%s412 + $0xc] sm:$0xf]
        %v465 = vld [vmem:[%s412 + $0x10] sm:$0xf]
        %v466 = vld [vmem:[%s412 + $0x14] sm:$0xf]
        %v467 = vld [vmem:[%s412 + $0x18] sm:$0xf]
        %v468 = vld [vmem:[%s412 + $0x1c] sm:$0xf]
        %v469 = vld [vmem:[%s412 + $0x20] sm:$0xf]
        %v470 = vld [vmem:[%s448] sm:$0xf]
        %s471 = scalar_lea.vmem %s412, 48 [#allocation2]
        %v472 = vld [vmem:[%s471] sm:$0xf]
        %v473 = vld [vmem:[%s471 + $0x4] sm:$0xf]
        %v474 = vld [vmem:[%s471 + $0x8] sm:$0xf]
        %v475 = vld [vmem:[%s471 + $0xc] sm:$0xf]
        %v476 = vld [vmem:[%s471 + $0x10] sm:$0xf]
        %v477 = vld [vmem:[%s471 + $0x14] sm:$0xf]
        %v478 = vld [vmem:[%s471 + $0x18] sm:$0xf]
        %v479 = vld [vmem:[%s471 + $0x1c] sm:$0xf]
        %v480 = vld [vmem:[%s471 + $0x20] sm:$0xf]
        %s481 = scalar_lea.vmem %s448, 4
        %v482 = vld [vmem:[%s481] sm:$0xf]
        %v492 = vunpack.c.l.b16 %v472
        %v493 = vunpack.c.l.b16 %v473
        %v494 = vunpack.c.l.b16 %v474
        %v495 = vunpack.c.l.b16 %v475
        %v496 = vunpack.c.l.b16 %v476
        %v497 = vunpack.c.l.b16 %v477
        %v498 = vunpack.c.l.b16 %v478
        %v499 = vunpack.c.l.b16 %v479
        %v500 = vunpack.c.l.b16 %v480
        %v501 = vpack.c.b16 %v493, %v492
        %v502 = vpack.c.b16 %v495, %v494
        %v503 = vpack.c.b16 %v497, %v496
        %v504 = vpack.c.b16 %v499, %v498
        %v505 = vpack.c.b16 %v500, %v500
        %vm506 = vcmask 64512
        %v508 = vsel %vm506, %v501, 0
        %v511 = vsel %vm506, %v502, 0
        %v514 = vsel %vm506, %v503, 0
        %v517 = vsel %vm506, %v504, 0
        %v520 = vsel %vm506, %v505, 0
        %vm522 = vcmask 1043456
        %v524 = vsel %vm522, %v482, 0
        %526 = vmatprep.subr.bf16.mxu0 0
        %527 = vmatpush1.bf16.msra.mxu0 0
        %528 = vmatprep.subr.bf16.mxu0 0
        %529 = vmatpush1.bf16.msra.mxu0 0
        %530 = vmatprep.subr.bf16.mxu0 0
        %531 = vmatpush1.bf16.msra.mxu0 0
        %532 = vmatprep.subr.bf16.mxu0 0
        %533 = vmatpush1.bf16.msra.mxu0 0
        %534 = vmatprep.subr.bf16.mxu0 0
        %535 = vmatpush1.bf16.msra.mxu0 0
        %536 = vmatprep.subr.bf16.mxu0 0
        %537 = vmatpush1.bf16.msra.mxu0 0
        %538 = vmatprep.subr.bf16.mxu0 0
        %539 = vmatpush1.bf16.msra.mxu0 0
        %540 = vmatprep.subr.bf16.mxu0 0
        %541 = vmatpush1.bf16.msra.mxu0 %v524
        %542 = vmatprep.subr.bf16.mxu0 0
        %543 = vmatpush2.bf16.msra.mxu0 0
        %544 = vmatprep.subr.bf16.mxu0 0
        %545 = vmatpush2.bf16.msra.mxu0 0
        %546 = vmatprep.subr.bf16.mxu0 0
        %547 = vmatpush2.bf16.msra.mxu0 0
        %548 = vmatprep.subr.bf16.mxu0 0
        %549 = vmatpush2.bf16.msra.mxu0 0
        %550 = vmatprep.subr.bf16.mxu0 0
        %551 = vmatpush2.bf16.msra.mxu0 0
        %552 = vmatprep.subr.bf16.mxu0 0
        %553 = vmatpush2.bf16.msra.mxu0 0
        %554 = vmatprep.subr.bf16.mxu0 0
        %555 = vmatpush2.bf16.msra.mxu0 0
        %556 = vmatprep.subr.bf16.mxu0 0
        %557 = vmatpush2.bf16.msra.mxu0 0
        %558 = vmatprep.mubr.bf16.mxu0 0
        %559 = vmatmul.mubr.bf16.gmra.mxu0 %v508
        %v560 = vpop.f32.mrf.mxu0
        %v561 = vadd.f32 0.0, %v560
        %v562 = vpop.f32.mrf.mxu0
        %v563 = vpop.f32.mrf.mxu0
        %v564 = vadd.f32 0.0, %v563
        %v565 = vpop.f32.mrf.mxu0
        %566 = vmatprep.mubr.bf16.mxu0 0
        %567 = vmatmul.mubr.bf16.gmra.mxu0 %v511
        %v568 = vpop.f32.mrf.mxu0
        %v569 = vadd.f32 0.0, %v568
        %v570 = vpop.f32.mrf.mxu0
        %v571 = vpop.f32.mrf.mxu0
        %v572 = vadd.f32 0.0, %v571
        %v573 = vpop.f32.mrf.mxu0
        %574 = vmatprep.mubr.bf16.mxu0 0
        %575 = vmatmul.mubr.bf16.gmra.mxu0 %v514
        %v576 = vpop.f32.mrf.mxu0
        %v577 = vadd.f32 0.0, %v576
        %v578 = vpop.f32.mrf.mxu0
        %v579 = vpop.f32.mrf.mxu0
        %v580 = vadd.f32 0.0, %v579
        %v581 = vpop.f32.mrf.mxu0
        %582 = vmatprep.mubr.bf16.mxu0 0
        %583 = vmatmul.mubr.bf16.gmra.mxu0 %v517
        %v584 = vpop.f32.mrf.mxu0
        %v585 = vadd.f32 0.0, %v584
        %v586 = vpop.f32.mrf.mxu0
        %v587 = vpop.f32.mrf.mxu0
        %v588 = vadd.f32 0.0, %v587
        %v589 = vpop.f32.mrf.mxu0
        %590 = vmatprep.mubr.bf16.mxu0 0
        %591 = vmatmul.mubr.bf16.gmra.mxu0 %v520
        %v592 = vpop.f32.mrf.mxu0
        %v593 = vadd.f32 0.0, %v592
        %v594 = vpop.f32.mrf.mxu0
        %v595 = vpop.f32.mrf.mxu0
        %v596 = vpop.f32.mrf.mxu0
        %597 = vdwg.mxu0
        %v607 = vunpack.c.l.b16 %v461
        %v608 = vunpack.c.l.b16 %v462
        %v609 = vunpack.c.l.b16 %v463
        %v610 = vunpack.c.l.b16 %v464
        %v611 = vunpack.c.l.b16 %v465
        %v612 = vunpack.c.l.b16 %v466
        %v613 = vunpack.c.l.b16 %v467
        %v614 = vunpack.c.l.b16 %v468
        %v615 = vunpack.c.l.b16 %v469
        %v616 = vpack.c.b16 %v608, %v607
        %v617 = vpack.c.b16 %v610, %v609
        %v618 = vpack.c.b16 %v612, %v611
        %v619 = vpack.c.b16 %v614, %v613
        %v620 = vpack.c.b16 %v615, %v615
        %v622 = vsel %vm506, %v616, 0
        %v625 = vsel %vm506, %v617, 0
        %v628 = vsel %vm506, %v618, 0
        %v631 = vsel %vm506, %v619, 0
        %v634 = vsel %vm506, %v620, 0
        %v637 = vsel %vm522, %v470, 0
        %639 = vmatprep.subr.bf16.mxu0 0
        %640 = vmatpush1.bf16.msra.mxu0 0
        %641 = vmatprep.subr.bf16.mxu0 0
        %642 = vmatpush1.bf16.msra.mxu0 0
        %643 = vmatprep.subr.bf16.mxu0 0
        %644 = vmatpush1.bf16.msra.mxu0 0
        %645 = vmatprep.subr.bf16.mxu0 0
        %646 = vmatpush1.bf16.msra.mxu0 0
        %647 = vmatprep.subr.bf16.mxu0 0
        %648 = vmatpush1.bf16.msra.mxu0 0
        %649 = vmatprep.subr.bf16.mxu0 0
        %650 = vmatpush1.bf16.msra.mxu0 0
        %651 = vmatprep.subr.bf16.mxu0 0
        %652 = vmatpush1.bf16.msra.mxu0 0
        %653 = vmatprep.subr.bf16.mxu0 0
        %654 = vmatpush1.bf16.msra.mxu0 %v637
        %655 = vmatprep.subr.bf16.mxu0 0
        %656 = vmatpush2.bf16.msra.mxu0 0
        %657 = vmatprep.subr.bf16.mxu0 0
        %658 = vmatpush2.bf16.msra.mxu0 0
        %659 = vmatprep.subr.bf16.mxu0 0
        %660 = vmatpush2.bf16.msra.mxu0 0
        %661 = vmatprep.subr.bf16.mxu0 0
        %662 = vmatpush2.bf16.msra.mxu0 0
        %663 = vmatprep.subr.bf16.mxu0 0
        %664 = vmatpush2.bf16.msra.mxu0 0
        %665 = vmatprep.subr.bf16.mxu0 0
        %666 = vmatpush2.bf16.msra.mxu0 0
        %667 = vmatprep.subr.bf16.mxu0 0
        %668 = vmatpush2.bf16.msra.mxu0 0
        %669 = vmatprep.subr.bf16.mxu0 0
        %670 = vmatpush2.bf16.msra.mxu0 0
        %671 = vmatprep.mubr.bf16.mxu0 0
        %672 = vmatmul.mubr.bf16.gmra.mxu0 %v622
        %v673 = vpop.f32.mrf.mxu0
        %v674 = vadd.f32 %v561, %v673
        %v675 = vpop.f32.mrf.mxu0
        %v676 = vpop.f32.mrf.mxu0
        %v677 = vadd.f32 %v564, %v676
        %v678 = vpop.f32.mrf.mxu0
        %679 = vmatprep.mubr.bf16.mxu0 0
        %680 = vmatmul.mubr.bf16.gmra.mxu0 %v625
        %v681 = vpop.f32.mrf.mxu0
        %v682 = vadd.f32 %v569, %v681
        %v683 = vpop.f32.mrf.mxu0
        %v684 = vpop.f32.mrf.mxu0
        %v685 = vadd.f32 %v572, %v684
        %v686 = vpop.f32.mrf.mxu0
        %687 = vmatprep.mubr.bf16.mxu0 0
        %688 = vmatmul.mubr.bf16.gmra.mxu0 %v628
        %v689 = vpop.f32.mrf.mxu0
        %v690 = vadd.f32 %v577, %v689
        %v691 = vpop.f32.mrf.mxu0
        %v692 = vpop.f32.mrf.mxu0
        %v693 = vadd.f32 %v580, %v692
        %v694 = vpop.f32.mrf.mxu0
        %695 = vmatprep.mubr.bf16.mxu0 0
        %696 = vmatmul.mubr.bf16.gmra.mxu0 %v631
        %v697 = vpop.f32.mrf.mxu0
        %v698 = vadd.f32 %v585, %v697
        %v699 = vpop.f32.mrf.mxu0
        %v700 = vpop.f32.mrf.mxu0
        %v701 = vadd.f32 %v588, %v700
        %v702 = vpop.f32.mrf.mxu0
        %703 = vmatprep.mubr.bf16.mxu0 0
        %704 = vmatmul.mubr.bf16.gmra.mxu0 %v634
        %v705 = vpop.f32.mrf.mxu0
        %v706 = vadd.f32 %v593, %v705
        %v707 = vpop.f32.mrf.mxu0
        %v708 = vpop.f32.mrf.mxu0
        %v709 = vpop.f32.mrf.mxu0
        %710 = vdwg.mxu0
        %v711 = vld [vmem:[%s412] sm:$0xf]
        %v712 = vld [vmem:[%s412 + $0x4] sm:$0xf]
        %v713 = vld [vmem:[%s412 + $0x8] sm:$0xf]
        %v714 = vld [vmem:[%s412 + $0xc] sm:$0xf]
        %v715 = vld [vmem:[%s412 + $0x10] sm:$0xf]
        %v716 = vld [vmem:[%s412 + $0x14] sm:$0xf]
        %v717 = vld [vmem:[%s412 + $0x18] sm:$0xf]
        %v718 = vld [vmem:[%s412 + $0x1c] sm:$0xf]
        %v719 = vld [vmem:[%s412 + $0x20] sm:$0xf]
        %v720 = vld [vmem:[%s412 + $0x24] sm:$0x1]
        %s721 = scalar_lea.vmem %s448, 8
        %v722 = vld [vmem:[%s721] sm:$0xf]
        %v733 = vunpack.c.l.b16 %v711
        %v734 = vunpack.c.l.b16 %v712
        %v735 = vunpack.c.l.b16 %v713
        %v736 = vunpack.c.l.b16 %v714
        %v737 = vunpack.c.l.b16 %v715
        %v738 = vunpack.c.l.b16 %v716
        %v739 = vunpack.c.l.b16 %v717
        %v740 = vunpack.c.l.b16 %v718
        %v741 = vunpack.c.l.b16 %v719
        %v742 = vunpack.c.l.b16 %v720
        %v743 = vpack.c.b16 %v734, %v733
        %v744 = vpack.c.b16 %v736, %v735
        %v745 = vpack.c.b16 %v738, %v737
        %v746 = vpack.c.b16 %v740, %v739
        %v747 = vpack.c.b16 %v742, %v741
        %vm748 = vsmask.f32 7424
        %v750 = vshrl.u32 %v743, 16
        %v752 = vshll.u32 %v743, 16
        %v754 = vrot.slane %v752, 1
        %v755 = vor.u32 %v750, %v754
        %v757 = vshll.u32 %v744, 16
        %v759 = vrot.slane %v757, 1
        %v760 = vsel %vm748, %v755, %v759
        %v761 = vshrl.u32 %v744, 16
        %v763 = vor.u32 %v761, %v759
        %v765 = vshll.u32 %v745, 16
        %v767 = vrot.slane %v765, 1
        %v768 = vsel %vm748, %v763, %v767
        %v769 = vshrl.u32 %v745, 16
        %v771 = vor.u32 %v769, %v767
        %v773 = vshll.u32 %v746, 16
        %v775 = vrot.slane %v773, 1
        %v776 = vsel %vm748, %v771, %v775
        %v777 = vshrl.u32 %v746, 16
        %v779 = vor.u32 %v777, %v775
        %v781 = vshll.u32 %v747, 16
        %v783 = vrot.slane %v781, 1
        %v784 = vsel %vm748, %v779, %v783
        %v785 = vshrl.u32 %v747, 16
        %v787 = vor.u32 %v785, %v783
        %v789 = vsel %vm506, %v760, 0
        %v792 = vsel %vm506, %v768, 0
        %v795 = vsel %vm506, %v776, 0
        %v798 = vsel %vm506, %v784, 0
        %v801 = vsel %vm506, %v787, 0
        %v804 = vsel %vm522, %v722, 0
        %806 = vmatprep.subr.bf16.mxu0 0
        %807 = vmatpush1.bf16.msra.mxu0 0
        %808 = vmatprep.subr.bf16.mxu0 0
        %809 = vmatpush1.bf16.msra.mxu0 0
        %810 = vmatprep.subr.bf16.mxu0 0
        %811 = vmatpush1.bf16.msra.mxu0 0
        %812 = vmatprep.subr.bf16.mxu0 0
        %813 = vmatpush1.bf16.msra.mxu0 0
        %814 = vmatprep.subr.bf16.mxu0 0
        %815 = vmatpush1.bf16.msra.mxu0 0
        %816 = vmatprep.subr.bf16.mxu0 0
        %817 = vmatpush1.bf16.msra.mxu0 0
        %818 = vmatprep.subr.bf16.mxu0 0
        %819 = vmatpush1.bf16.msra.mxu0 0
        %820 = vmatprep.subr.bf16.mxu0 0
        %821 = vmatpush1.bf16.msra.mxu0 %v804
        %822 = vmatprep.subr.bf16.mxu0 0
        %823 = vmatpush2.bf16.msra.mxu0 0
        %824 = vmatprep.subr.bf16.mxu0 0
        %825 = vmatpush2.bf16.msra.mxu0 0
        %826 = vmatprep.subr.bf16.mxu0 0
        %827 = vmatpush2.bf16.msra.mxu0 0
        %828 = vmatprep.subr.bf16.mxu0 0
        %829 = vmatpush2.bf16.msra.mxu0 0
        %830 = vmatprep.subr.bf16.mxu0 0
        %831 = vmatpush2.bf16.msra.mxu0 0
        %832 = vmatprep.subr.bf16.mxu0 0
        %833 = vmatpush2.bf16.msra.mxu0 0
        %834 = vmatprep.subr.bf16.mxu0 0
        %835 = vmatpush2.bf16.msra.mxu0 0
        %836 = vmatprep.subr.bf16.mxu0 0
        %837 = vmatpush2.bf16.msra.mxu0 0
        %838 = vmatprep.mubr.bf16.mxu0 0
        %839 = vmatmul.mubr.bf16.gmra.mxu0 %v789
        %v840 = vpop.f32.mrf.mxu0
        %v841 = vadd.f32 0.0, %v840
        %v842 = vpop.f32.mrf.mxu0
        %v843 = vpop.f32.mrf.mxu0
        %v844 = vadd.f32 0.0, %v843
        %v845 = vpop.f32.mrf.mxu0
        %846 = vmatprep.mubr.bf16.mxu0 0
        %847 = vmatmul.mubr.bf16.gmra.mxu0 %v792
        %v848 = vpop.f32.mrf.mxu0
        %v849 = vadd.f32 0.0, %v848
        %v850 = vpop.f32.mrf.mxu0
        %v851 = vpop.f32.mrf.mxu0
        %v852 = vadd.f32 0.0, %v851
        %v853 = vpop.f32.mrf.mxu0
        %854 = vmatprep.mubr.bf16.mxu0 0
        %855 = vmatmul.mubr.bf16.gmra.mxu0 %v795
        %v856 = vpop.f32.mrf.mxu0
        %v857 = vadd.f32 0.0, %v856
        %v858 = vpop.f32.mrf.mxu0
        %v859 = vpop.f32.mrf.mxu0
        %v860 = vadd.f32 0.0, %v859
        %v861 = vpop.f32.mrf.mxu0
        %862 = vmatprep.mubr.bf16.mxu0 0
        %863 = vmatmul.mubr.bf16.gmra.mxu0 %v798
        %v864 = vpop.f32.mrf.mxu0
        %v865 = vadd.f32 0.0, %v864
        %v866 = vpop.f32.mrf.mxu0
        %v867 = vpop.f32.mrf.mxu0
        %v868 = vadd.f32 0.0, %v867
        %v869 = vpop.f32.mrf.mxu0
        %870 = vmatprep.mubr.bf16.mxu0 0
        %871 = vmatmul.mubr.bf16.gmra.mxu0 %v801
        %v872 = vpop.f32.mrf.mxu0
        %v873 = vadd.f32 0.0, %v872
        %v874 = vpop.f32.mrf.mxu0
        %v875 = vpop.f32.mrf.mxu0
        %v876 = vpop.f32.mrf.mxu0
        %877 = vdwg.mxu0
        %v878 = vadd.f32 %v674, %v841
        %v879 = vadd.f32 %v677, %v844
        %v880 = vadd.f32 %v682, %v849
        %v881 = vadd.f32 %v685, %v852
        %v882 = vadd.f32 %v690, %v857
        %v883 = vadd.f32 %v693, %v860
        %v884 = vadd.f32 %v698, %v865
        %v885 = vadd.f32 %v701, %v868
        %v886 = vadd.f32 %v706, %v873
        %s887 = scalar_lea.vmem %s412, 96 [#allocation2]
        %v888 = vld [vmem:[%s887] sm:$0xf]
        %v889 = vld [vmem:[%s887 + $0x4] sm:$0xf]
        %v890 = vld [vmem:[%s887 + $0x8] sm:$0xf]
        %v891 = vld [vmem:[%s887 + $0xc] sm:$0xf]
        %v892 = vld [vmem:[%s887 + $0x10] sm:$0xf]
        %v893 = vld [vmem:[%s887 + $0x14] sm:$0xf]
        %v894 = vld [vmem:[%s887 + $0x18] sm:$0xf]
        %v895 = vld [vmem:[%s887 + $0x1c] sm:$0xf]
        %v896 = vld [vmem:[%s887 + $0x20] sm:$0xf]
        %s897 = scalar_lea.vmem %s448, 12
        %v898 = vld [vmem:[%s897] sm:$0xf]
        %v908 = vunpack.c.l.b16 %v888
        %v909 = vunpack.c.l.b16 %v889
        %v910 = vunpack.c.l.b16 %v890
        %v911 = vunpack.c.l.b16 %v891
        %v912 = vunpack.c.l.b16 %v892
        %v913 = vunpack.c.l.b16 %v893
        %v914 = vunpack.c.l.b16 %v894
        %v915 = vunpack.c.l.b16 %v895
        %v916 = vunpack.c.l.b16 %v896
        %v917 = vpack.c.b16 %v909, %v908
        %v918 = vpack.c.b16 %v911, %v910
        %v919 = vpack.c.b16 %v913, %v912
        %v920 = vpack.c.b16 %v915, %v914
        %v921 = vpack.c.b16 %v916, %v916
        %v923 = vsel %vm506, %v917, 0
        %v926 = vsel %vm506, %v918, 0
        %v929 = vsel %vm506, %v919, 0
        %v932 = vsel %vm506, %v920, 0
        %v935 = vsel %vm506, %v921, 0
        %v938 = vsel %vm522, %v898, 0
        %940 = vmatprep.subr.bf16.mxu0 0
        %941 = vmatpush1.bf16.msra.mxu0 0
        %942 = vmatprep.subr.bf16.mxu0 0
        %943 = vmatpush1.bf16.msra.mxu0 0
        %944 = vmatprep.subr.bf16.mxu0 0
        %945 = vmatpush1.bf16.msra.mxu0 0
        %946 = vmatprep.subr.bf16.mxu0 0
        %947 = vmatpush1.bf16.msra.mxu0 0
        %948 = vmatprep.subr.bf16.mxu0 0
        %949 = vmatpush1.bf16.msra.mxu0 0
        %950 = vmatprep.subr.bf16.mxu0 0
        %951 = vmatpush1.bf16.msra.mxu0 0
        %952 = vmatprep.subr.bf16.mxu0 0
        %953 = vmatpush1.bf16.msra.mxu0 0
        %954 = vmatprep.subr.bf16.mxu0 0
        %955 = vmatpush1.bf16.msra.mxu0 %v938
        %956 = vmatprep.subr.bf16.mxu0 0
        %957 = vmatpush2.bf16.msra.mxu0 0
        %958 = vmatprep.subr.bf16.mxu0 0
        %959 = vmatpush2.bf16.msra.mxu0 0
        %960 = vmatprep.subr.bf16.mxu0 0
        %961 = vmatpush2.bf16.msra.mxu0 0
        %962 = vmatprep.subr.bf16.mxu0 0
        %963 = vmatpush2.bf16.msra.mxu0 0
        %964 = vmatprep.subr.bf16.mxu0 0
        %965 = vmatpush2.bf16.msra.mxu0 0
        %966 = vmatprep.subr.bf16.mxu0 0
        %967 = vmatpush2.bf16.msra.mxu0 0
        %968 = vmatprep.subr.bf16.mxu0 0
        %969 = vmatpush2.bf16.msra.mxu0 0
        %970 = vmatprep.subr.bf16.mxu0 0
        %971 = vmatpush2.bf16.msra.mxu0 0
        %972 = vmatprep.mubr.bf16.mxu0 0
        %973 = vmatmul.mubr.bf16.gmra.mxu0 %v923
        %v974 = vpop.f32.mrf.mxu0
        %v975 = vadd.f32 0.0, %v974
        %v976 = vpop.f32.mrf.mxu0
        %v977 = vpop.f32.mrf.mxu0
        %v978 = vadd.f32 0.0, %v977
        %v979 = vpop.f32.mrf.mxu0
        %980 = vmatprep.mubr.bf16.mxu0 0
        %981 = vmatmul.mubr.bf16.gmra.mxu0 %v926
        %v982 = vpop.f32.mrf.mxu0
        %v983 = vadd.f32 0.0, %v982
        %v984 = vpop.f32.mrf.mxu0
        %v985 = vpop.f32.mrf.mxu0
        %v986 = vadd.f32 0.0, %v985
        %v987 = vpop.f32.mrf.mxu0
        %988 = vmatprep.mubr.bf16.mxu0 0
        %989 = vmatmul.mubr.bf16.gmra.mxu0 %v929
        %v990 = vpop.f32.mrf.mxu0
        %v991 = vadd.f32 0.0, %v990
        %v992 = vpop.f32.mrf.mxu0
        %v993 = vpop.f32.mrf.mxu0
        %v994 = vadd.f32 0.0, %v993
        %v995 = vpop.f32.mrf.mxu0
        %996 = vmatprep.mubr.bf16.mxu0 0
        %997 = vmatmul.mubr.bf16.gmra.mxu0 %v932
        %v998 = vpop.f32.mrf.mxu0
        %v999 = vadd.f32 0.0, %v998
        %v1000 = vpop.f32.mrf.mxu0
        %v1001 = vpop.f32.mrf.mxu0
        %v1002 = vadd.f32 0.0, %v1001
        %v1003 = vpop.f32.mrf.mxu0
        %1004 = vmatprep.mubr.bf16.mxu0 0
        %1005 = vmatmul.mubr.bf16.gmra.mxu0 %v935
        %v1006 = vpop.f32.mrf.mxu0
        %v1007 = vadd.f32 0.0, %v1006
        %v1008 = vpop.f32.mrf.mxu0
        %v1009 = vpop.f32.mrf.mxu0
        %v1010 = vpop.f32.mrf.mxu0
        %1011 = vdwg.mxu0
        %v1012 = vadd.f32 %v878, %v975
        %v1013 = vadd.f32 %v879, %v978
        %v1014 = vadd.f32 %v880, %v983
        %v1015 = vadd.f32 %v881, %v986
        %v1016 = vadd.f32 %v882, %v991
        %v1017 = vadd.f32 %v883, %v994
        %v1018 = vadd.f32 %v884, %v999
        %v1019 = vadd.f32 %v885, %v1002
        %v1020 = vadd.f32 %v886, %v1007
        %s1021 = scalar_lea.vmem %s412, 144 [#allocation2]
        %v1022 = vld [vmem:[%s1021] sm:$0xf]
        %v1023 = vld [vmem:[%s1021 + $0x4] sm:$0xf]
        %v1024 = vld [vmem:[%s1021 + $0x8] sm:$0xf]
        %v1025 = vld [vmem:[%s1021 + $0xc] sm:$0xf]
        %v1026 = vld [vmem:[%s1021 + $0x10] sm:$0xf]
        %v1027 = vld [vmem:[%s1021 + $0x14] sm:$0xf]
        %v1028 = vld [vmem:[%s1021 + $0x18] sm:$0xf]
        %v1029 = vld [vmem:[%s1021 + $0x1c] sm:$0xf]
        %v1030 = vld [vmem:[%s1021 + $0x20] sm:$0xf]
        %s1031 = scalar_lea.vmem %s448, 16
        %v1032 = vld [vmem:[%s1031] sm:$0xf]
        %v1042 = vunpack.c.l.b16 %v1022
        %v1043 = vunpack.c.l.b16 %v1023
        %v1044 = vunpack.c.l.b16 %v1024
        %v1045 = vunpack.c.l.b16 %v1025
        %v1046 = vunpack.c.l.b16 %v1026
        %v1047 = vunpack.c.l.b16 %v1027
        %v1048 = vunpack.c.l.b16 %v1028
        %v1049 = vunpack.c.l.b16 %v1029
        %v1050 = vunpack.c.l.b16 %v1030
        %v1051 = vpack.c.b16 %v1043, %v1042
        %v1052 = vpack.c.b16 %v1045, %v1044
        %v1053 = vpack.c.b16 %v1047, %v1046
        %v1054 = vpack.c.b16 %v1049, %v1048
        %v1055 = vpack.c.b16 %v1050, %v1050
        %v1057 = vsel %vm506, %v1051, 0
        %v1060 = vsel %vm506, %v1052, 0
        %v1063 = vsel %vm506, %v1053, 0
        %v1066 = vsel %vm506, %v1054, 0
        %v1069 = vsel %vm506, %v1055, 0
        %v1072 = vsel %vm522, %v1032, 0
        %1074 = vmatprep.subr.bf16.mxu0 0
        %1075 = vmatpush1.bf16.msra.mxu0 0
        %1076 = vmatprep.subr.bf16.mxu0 0
        %1077 = vmatpush1.bf16.msra.mxu0 0
        %1078 = vmatprep.subr.bf16.mxu0 0
        %1079 = vmatpush1.bf16.msra.mxu0 0
        %1080 = vmatprep.subr.bf16.mxu0 0
        %1081 = vmatpush1.bf16.msra.mxu0 0
        %1082 = vmatprep.subr.bf16.mxu0 0
        %1083 = vmatpush1.bf16.msra.mxu0 0
        %1084 = vmatprep.subr.bf16.mxu0 0
        %1085 = vmatpush1.bf16.msra.mxu0 0
        %1086 = vmatprep.subr.bf16.mxu0 0
        %1087 = vmatpush1.bf16.msra.mxu0 0
        %1088 = vmatprep.subr.bf16.mxu0 0
        %1089 = vmatpush1.bf16.msra.mxu0 %v1072
        %1090 = vmatprep.subr.bf16.mxu0 0
        %1091 = vmatpush2.bf16.msra.mxu0 0
        %1092 = vmatprep.subr.bf16.mxu0 0
        %1093 = vmatpush2.bf16.msra.mxu0 0
        %1094 = vmatprep.subr.bf16.mxu0 0
        %1095 = vmatpush2.bf16.msra.mxu0 0
        %1096 = vmatprep.subr.bf16.mxu0 0
        %1097 = vmatpush2.bf16.msra.mxu0 0
        %1098 = vmatprep.subr.bf16.mxu0 0
        %1099 = vmatpush2.bf16.msra.mxu0 0
        %1100 = vmatprep.subr.bf16.mxu0 0
        %1101 = vmatpush2.bf16.msra.mxu0 0
        %1102 = vmatprep.subr.bf16.mxu0 0
        %1103 = vmatpush2.bf16.msra.mxu0 0
        %1104 = vmatprep.subr.bf16.mxu0 0
        %1105 = vmatpush2.bf16.msra.mxu0 0
        %1106 = vmatprep.mubr.bf16.mxu0 0
        %1107 = vmatmul.mubr.bf16.gmra.mxu0 %v1057
        %v1108 = vpop.f32.mrf.mxu0
        %v1109 = vadd.f32 0.0, %v1108
        %v1110 = vpop.f32.mrf.mxu0
        %v1111 = vpop.f32.mrf.mxu0
        %v1112 = vadd.f32 0.0, %v1111
        %v1113 = vpop.f32.mrf.mxu0
        %1114 = vmatprep.mubr.bf16.mxu0 0
        %1115 = vmatmul.mubr.bf16.gmra.mxu0 %v1060
        %v1116 = vpop.f32.mrf.mxu0
        %v1117 = vadd.f32 0.0, %v1116
        %v1118 = vpop.f32.mrf.mxu0
        %v1119 = vpop.f32.mrf.mxu0
        %v1120 = vadd.f32 0.0, %v1119
        %v1121 = vpop.f32.mrf.mxu0
        %1122 = vmatprep.mubr.bf16.mxu0 0
        %1123 = vmatmul.mubr.bf16.gmra.mxu0 %v1063
        %v1124 = vpop.f32.mrf.mxu0
        %v1125 = vadd.f32 0.0, %v1124
        %v1126 = vpop.f32.mrf.mxu0
        %v1127 = vpop.f32.mrf.mxu0
        %v1128 = vadd.f32 0.0, %v1127
        %v1129 = vpop.f32.mrf.mxu0
        %1130 = vmatprep.mubr.bf16.mxu0 0
        %1131 = vmatmul.mubr.bf16.gmra.mxu0 %v1066
        %v1132 = vpop.f32.mrf.mxu0
        %v1133 = vadd.f32 0.0, %v1132
        %v1134 = vpop.f32.mrf.mxu0
        %v1135 = vpop.f32.mrf.mxu0
        %v1136 = vadd.f32 0.0, %v1135
        %v1137 = vpop.f32.mrf.mxu0
        %1138 = vmatprep.mubr.bf16.mxu0 0
        %1139 = vmatmul.mubr.bf16.gmra.mxu0 %v1069
        %v1140 = vpop.f32.mrf.mxu0
        %v1141 = vadd.f32 0.0, %v1140
        %v1142 = vpop.f32.mrf.mxu0
        %v1143 = vpop.f32.mrf.mxu0
        %v1144 = vpop.f32.mrf.mxu0
        %1145 = vdwg.mxu0
        %v1146 = vadd.f32 %v1012, %v1109
        %v1147 = vadd.f32 %v1013, %v1112
        %v1148 = vadd.f32 %v1014, %v1117
        %v1149 = vadd.f32 %v1015, %v1120
        %v1150 = vadd.f32 %v1016, %v1125
        %v1151 = vadd.f32 %v1017, %v1128
        %v1152 = vadd.f32 %v1018, %v1133
        %v1153 = vadd.f32 %v1019, %v1136
        %v1154 = vadd.f32 %v1020, %v1141
        %v1155 = vld [vmem:[%s887] sm:$0xf]
        %v1156 = vld [vmem:[%s887 + $0x4] sm:$0xf]
        %v1157 = vld [vmem:[%s887 + $0x8] sm:$0xf]
        %v1158 = vld [vmem:[%s887 + $0xc] sm:$0xf]
        %v1159 = vld [vmem:[%s887 + $0x10] sm:$0xf]
        %v1160 = vld [vmem:[%s887 + $0x14] sm:$0xf]
        %v1161 = vld [vmem:[%s887 + $0x18] sm:$0xf]
        %v1162 = vld [vmem:[%s887 + $0x1c] sm:$0xf]
        %v1163 = vld [vmem:[%s887 + $0x20] sm:$0xf]
        %v1164 = vld [vmem:[%s887 + $0x24] sm:$0x1]
        %s1165 = scalar_lea.vmem %s448, 20
        %v1166 = vld [vmem:[%s1165] sm:$0xf]
        %v1177 = vunpack.c.l.b16 %v1155
        %v1178 = vunpack.c.l.b16 %v1156
        %v1179 = vunpack.c.l.b16 %v1157
        %v1180 = vunpack.c.l.b16 %v1158
        %v1181 = vunpack.c.l.b16 %v1159
        %v1182 = vunpack.c.l.b16 %v1160
        %v1183 = vunpack.c.l.b16 %v1161
        %v1184 = vunpack.c.l.b16 %v1162
        %v1185 = vunpack.c.l.b16 %v1163
        %v1186 = vunpack.c.l.b16 %v1164
        %v1187 = vpack.c.b16 %v1178, %v1177
        %v1188 = vpack.c.b16 %v1180, %v1179
        %v1189 = vpack.c.b16 %v1182, %v1181
        %v1190 = vpack.c.b16 %v1184, %v1183
        %v1191 = vpack.c.b16 %v1186, %v1185
        %v1193 = vshrl.u32 %v1187, 16
        %v1195 = vshll.u32 %v1187, 16
        %v1197 = vrot.slane %v1195, 1
        %v1198 = vor.u32 %v1193, %v1197
        %v1200 = vshll.u32 %v1188, 16
        %v1202 = vrot.slane %v1200, 1
        %v1203 = vsel %vm748, %v1198, %v1202
        %v1204 = vshrl.u32 %v1188, 16
        %v1206 = vor.u32 %v1204, %v1202
        %v1208 = vshll.u32 %v1189, 16
        %v1210 = vrot.slane %v1208, 1
        %v1211 = vsel %vm748, %v1206, %v1210
        %v1212 = vshrl.u32 %v1189, 16
        %v1214 = vor.u32 %v1212, %v1210
        %v1216 = vshll.u32 %v1190, 16
        %v1218 = vrot.slane %v1216, 1
        %v1219 = vsel %vm748, %v1214, %v1218
        %v1220 = vshrl.u32 %v1190, 16
        %v1222 = vor.u32 %v1220, %v1218
        %v1224 = vshll.u32 %v1191, 16
        %v1226 = vrot.slane %v1224, 1
        %v1227 = vsel %vm748, %v1222, %v1226
        %v1228 = vshrl.u32 %v1191, 16
        %v1230 = vor.u32 %v1228, %v1226
        %v1232 = vsel %vm506, %v1203, 0
        %v1235 = vsel %vm506, %v1211, 0
        %v1238 = vsel %vm506, %v1219, 0
        %v1241 = vsel %vm506, %v1227, 0
        %v1244 = vsel %vm506, %v1230, 0
        %v1247 = vsel %vm522, %v1166, 0
        %1249 = vmatprep.subr.bf16.mxu0 0
        %1250 = vmatpush1.bf16.msra.mxu0 0
        %1251 = vmatprep.subr.bf16.mxu0 0
        %1252 = vmatpush1.bf16.msra.mxu0 0
        %1253 = vmatprep.subr.bf16.mxu0 0
        %1254 = vmatpush1.bf16.msra.mxu0 0
        %1255 = vmatprep.subr.bf16.mxu0 0
        %1256 = vmatpush1.bf16.msra.mxu0 0
        %1257 = vmatprep.subr.bf16.mxu0 0
        %1258 = vmatpush1.bf16.msra.mxu0 0
        %1259 = vmatprep.subr.bf16.mxu0 0
        %1260 = vmatpush1.bf16.msra.mxu0 0
        %1261 = vmatprep.subr.bf16.mxu0 0
        %1262 = vmatpush1.bf16.msra.mxu0 0
        %1263 = vmatprep.subr.bf16.mxu0 0
        %1264 = vmatpush1.bf16.msra.mxu0 %v1247
        %1265 = vmatprep.subr.bf16.mxu0 0
        %1266 = vmatpush2.bf16.msra.mxu0 0
        %1267 = vmatprep.subr.bf16.mxu0 0
        %1268 = vmatpush2.bf16.msra.mxu0 0
        %1269 = vmatprep.subr.bf16.mxu0 0
        %1270 = vmatpush2.bf16.msra.mxu0 0
        %1271 = vmatprep.subr.bf16.mxu0 0
        %1272 = vmatpush2.bf16.msra.mxu0 0
        %1273 = vmatprep.subr.bf16.mxu0 0
        %1274 = vmatpush2.bf16.msra.mxu0 0
        %1275 = vmatprep.subr.bf16.mxu0 0
        %1276 = vmatpush2.bf16.msra.mxu0 0
        %1277 = vmatprep.subr.bf16.mxu0 0
        %1278 = vmatpush2.bf16.msra.mxu0 0
        %1279 = vmatprep.subr.bf16.mxu0 0
        %1280 = vmatpush2.bf16.msra.mxu0 0
        %1281 = vmatprep.mubr.bf16.mxu0 0
        %1282 = vmatmul.mubr.bf16.gmra.mxu0 %v1232
        %v1283 = vpop.f32.mrf.mxu0
        %v1284 = vadd.f32 0.0, %v1283
        %v1285 = vpop.f32.mrf.mxu0
        %v1286 = vpop.f32.mrf.mxu0
        %v1287 = vadd.f32 0.0, %v1286
        %v1288 = vpop.f32.mrf.mxu0
        %1289 = vmatprep.mubr.bf16.mxu0 0
        %1290 = vmatmul.mubr.bf16.gmra.mxu0 %v1235
        %v1291 = vpop.f32.mrf.mxu0
        %v1292 = vadd.f32 0.0, %v1291
        %v1293 = vpop.f32.mrf.mxu0
        %v1294 = vpop.f32.mrf.mxu0
        %v1295 = vadd.f32 0.0, %v1294
        %v1296 = vpop.f32.mrf.mxu0
        %1297 = vmatprep.mubr.bf16.mxu0 0
        %1298 = vmatmul.mubr.bf16.gmra.mxu0 %v1238
        %v1299 = vpop.f32.mrf.mxu0
        %v1300 = vadd.f32 0.0, %v1299
        %v1301 = vpop.f32.mrf.mxu0
        %v1302 = vpop.f32.mrf.mxu0
        %v1303 = vadd.f32 0.0, %v1302
        %v1304 = vpop.f32.mrf.mxu0
        %1305 = vmatprep.mubr.bf16.mxu0 0
        %1306 = vmatmul.mubr.bf16.gmra.mxu0 %v1241
        %v1307 = vpop.f32.mrf.mxu0
        %v1308 = vadd.f32 0.0, %v1307
        %v1309 = vpop.f32.mrf.mxu0
        %v1310 = vpop.f32.mrf.mxu0
        %v1311 = vadd.f32 0.0, %v1310
        %v1312 = vpop.f32.mrf.mxu0
        %1313 = vmatprep.mubr.bf16.mxu0 0
        %1314 = vmatmul.mubr.bf16.gmra.mxu0 %v1244
        %v1315 = vpop.f32.mrf.mxu0
        %v1316 = vadd.f32 0.0, %v1315
        %v1317 = vpop.f32.mrf.mxu0
        %v1318 = vpop.f32.mrf.mxu0
        %v1319 = vpop.f32.mrf.mxu0
        %1320 = vdwg.mxu0
        %v1321 = vadd.f32 %v1146, %v1284
        %v1322 = vadd.f32 %v1147, %v1287
        %v1323 = vadd.f32 %v1148, %v1292
        %v1324 = vadd.f32 %v1149, %v1295
        %v1325 = vadd.f32 %v1150, %v1300
        %v1326 = vadd.f32 %v1151, %v1303
        %v1327 = vadd.f32 %v1152, %v1308
        %v1328 = vadd.f32 %v1153, %v1311
        %v1329 = vadd.f32 %v1154, %v1316
        %v1330 = vld [vmem:[%s412 + $0x4] sm:$0xf]
        %v1331 = vld [vmem:[%s412 + $0x8] sm:$0xf]
        %v1332 = vld [vmem:[%s412 + $0xc] sm:$0xf]
        %v1333 = vld [vmem:[%s412 + $0x10] sm:$0xf]
        %v1334 = vld [vmem:[%s412 + $0x14] sm:$0xf]
        %v1335 = vld [vmem:[%s412 + $0x18] sm:$0xf]
        %v1336 = vld [vmem:[%s412 + $0x1c] sm:$0xf]
        %v1337 = vld [vmem:[%s412 + $0x20] sm:$0xf]
        %v1338 = vld [vmem:[%s412 + $0x24] sm:$0xf]
        %v1339 = vld [vmem:[%s412 + $0x28] sm:$0x1]
        %s1340 = scalar_lea.vmem %s448, 24
        %v1341 = vld [vmem:[%s1340] sm:$0xf]
        %v1352 = vunpack.c.l.b16 %v1330
        %v1353 = vunpack.c.l.b16 %v1331
        %v1354 = vunpack.c.l.b16 %v1332
        %v1355 = vunpack.c.l.b16 %v1333
        %v1356 = vunpack.c.l.b16 %v1334
        %v1357 = vunpack.c.l.b16 %v1335
        %v1358 = vunpack.c.l.b16 %v1336
        %v1359 = vunpack.c.l.b16 %v1337
        %v1360 = vunpack.c.l.b16 %v1338
        %v1361 = vunpack.c.l.b16 %v1339
        %v1362 = vpack.c.b16 %v1353, %v1352
        %v1363 = vpack.c.b16 %v1355, %v1354
        %v1364 = vpack.c.b16 %v1357, %v1356
        %v1365 = vpack.c.b16 %v1359, %v1358
        %v1366 = vpack.c.b16 %v1361, %v1360
        %v1368 = vshrl.u32 %v1362, 16
        %v1370 = vshll.u32 %v1362, 16
        %v1372 = vrot.slane %v1370, 1
        %v1373 = vor.u32 %v1368, %v1372
        %v1375 = vshll.u32 %v1363, 16
        %v1377 = vrot.slane %v1375, 1
        %v1378 = vsel %vm748, %v1373, %v1377
        %v1379 = vshrl.u32 %v1363, 16
        %v1381 = vor.u32 %v1379, %v1377
        %v1383 = vshll.u32 %v1364, 16
        %v1385 = vrot.slane %v1383, 1
        %v1386 = vsel %vm748, %v1381, %v1385
        %v1387 = vshrl.u32 %v1364, 16
        %v1389 = vor.u32 %v1387, %v1385
        %v1391 = vshll.u32 %v1365, 16
        %v1393 = vrot.slane %v1391, 1
        %v1394 = vsel %vm748, %v1389, %v1393
        %v1395 = vshrl.u32 %v1365, 16
        %v1397 = vor.u32 %v1395, %v1393
        %v1399 = vshll.u32 %v1366, 16
        %v1401 = vrot.slane %v1399, 1
        %v1402 = vsel %vm748, %v1397, %v1401
        %v1403 = vshrl.u32 %v1366, 16
        %v1405 = vor.u32 %v1403, %v1401
        %v1407 = vsel %vm506, %v1378, 0
        %v1410 = vsel %vm506, %v1386, 0
        %v1413 = vsel %vm506, %v1394, 0
        %v1416 = vsel %vm506, %v1402, 0
        %v1419 = vsel %vm506, %v1405, 0
        %v1422 = vsel %vm522, %v1341, 0
        %1424 = vmatprep.subr.bf16.mxu0 0
        %1425 = vmatpush1.bf16.msra.mxu0 0
        %1426 = vmatprep.subr.bf16.mxu0 0
        %1427 = vmatpush1.bf16.msra.mxu0 0
        %1428 = vmatprep.subr.bf16.mxu0 0
        %1429 = vmatpush1.bf16.msra.mxu0 0
        %1430 = vmatprep.subr.bf16.mxu0 0
        %1431 = vmatpush1.bf16.msra.mxu0 0
        %1432 = vmatprep.subr.bf16.mxu0 0
        %1433 = vmatpush1.bf16.msra.mxu0 0
        %1434 = vmatprep.subr.bf16.mxu0 0
        %1435 = vmatpush1.bf16.msra.mxu0 0
        %1436 = vmatprep.subr.bf16.mxu0 0
        %1437 = vmatpush1.bf16.msra.mxu0 0
        %1438 = vmatprep.subr.bf16.mxu0 0
        %1439 = vmatpush1.bf16.msra.mxu0 %v1422
        %1440 = vmatprep.subr.bf16.mxu0 0
        %1441 = vmatpush2.bf16.msra.mxu0 0
        %1442 = vmatprep.subr.bf16.mxu0 0
        %1443 = vmatpush2.bf16.msra.mxu0 0
        %1444 = vmatprep.subr.bf16.mxu0 0
        %1445 = vmatpush2.bf16.msra.mxu0 0
        %1446 = vmatprep.subr.bf16.mxu0 0
        %1447 = vmatpush2.bf16.msra.mxu0 0
        %1448 = vmatprep.subr.bf16.mxu0 0
        %1449 = vmatpush2.bf16.msra.mxu0 0
        %1450 = vmatprep.subr.bf16.mxu0 0
        %1451 = vmatpush2.bf16.msra.mxu0 0
        %1452 = vmatprep.subr.bf16.mxu0 0
        %1453 = vmatpush2.bf16.msra.mxu0 0
        %1454 = vmatprep.subr.bf16.mxu0 0
        %1455 = vmatpush2.bf16.msra.mxu0 0
        %1456 = vmatprep.mubr.bf16.mxu0 0
        %1457 = vmatmul.mubr.bf16.gmra.mxu0 %v1407
        %v1458 = vpop.f32.mrf.mxu0
        %v1459 = vadd.f32 0.0, %v1458
        %v1460 = vpop.f32.mrf.mxu0
        %v1461 = vpop.f32.mrf.mxu0
        %v1462 = vadd.f32 0.0, %v1461
        %v1463 = vpop.f32.mrf.mxu0
        %1464 = vmatprep.mubr.bf16.mxu0 0
        %1465 = vmatmul.mubr.bf16.gmra.mxu0 %v1410
        %v1466 = vpop.f32.mrf.mxu0
        %v1467 = vadd.f32 0.0, %v1466
        %v1468 = vpop.f32.mrf.mxu0
        %v1469 = vpop.f32.mrf.mxu0
        %v1470 = vadd.f32 0.0, %v1469
        %v1471 = vpop.f32.mrf.mxu0
        %1472 = vmatprep.mubr.bf16.mxu0 0
        %1473 = vmatmul.mubr.bf16.gmra.mxu0 %v1413
        %v1474 = vpop.f32.mrf.mxu0
        %v1475 = vadd.f32 0.0, %v1474
        %v1476 = vpop.f32.mrf.mxu0
        %v1477 = vpop.f32.mrf.mxu0
        %v1478 = vadd.f32 0.0, %v1477
        %v1479 = vpop.f32.mrf.mxu0
        %1480 = vmatprep.mubr.bf16.mxu0 0
        %1481 = vmatmul.mubr.bf16.gmra.mxu0 %v1416
        %v1482 = vpop.f32.mrf.mxu0
        %v1483 = vadd.f32 0.0, %v1482
        %v1484 = vpop.f32.mrf.mxu0
        %v1485 = vpop.f32.mrf.mxu0
        %v1486 = vadd.f32 0.0, %v1485
        %v1487 = vpop.f32.mrf.mxu0
        %1488 = vmatprep.mubr.bf16.mxu0 0
        %1489 = vmatmul.mubr.bf16.gmra.mxu0 %v1419
        %v1490 = vpop.f32.mrf.mxu0
        %v1491 = vadd.f32 0.0, %v1490
        %v1492 = vpop.f32.mrf.mxu0
        %v1493 = vpop.f32.mrf.mxu0
        %v1494 = vpop.f32.mrf.mxu0
        %1495 = vdwg.mxu0
        %v1496 = vadd.f32 %v1321, %v1459
        %v1497 = vadd.f32 %v1322, %v1462
        %v1498 = vadd.f32 %v1323, %v1467
        %v1499 = vadd.f32 %v1324, %v1470
        %v1500 = vadd.f32 %v1325, %v1475
        %v1501 = vadd.f32 %v1326, %v1478
        %v1502 = vadd.f32 %v1327, %v1483
        %v1503 = vadd.f32 %v1328, %v1486
        %v1504 = vadd.f32 %v1329, %v1491
        %v1505 = vld [vmem:[%s471 + $0x4] sm:$0xf]
        %v1506 = vld [vmem:[%s471 + $0x8] sm:$0xf]
        %v1507 = vld [vmem:[%s471 + $0xc] sm:$0xf]
        %v1508 = vld [vmem:[%s471 + $0x10] sm:$0xf]
        %v1509 = vld [vmem:[%s471 + $0x14] sm:$0xf]
        %v1510 = vld [vmem:[%s471 + $0x18] sm:$0xf]
        %v1511 = vld [vmem:[%s471 + $0x1c] sm:$0xf]
        %v1512 = vld [vmem:[%s471 + $0x20] sm:$0xf]
        %v1513 = vld [vmem:[%s471 + $0x24] sm:$0xf]
        %v1514 = vld [vmem:[%s471 + $0x28] sm:$0x1]
        %s1515 = scalar_lea.vmem %s448, 28
        %v1516 = vld [vmem:[%s1515] sm:$0xf]
        %v1527 = vunpack.c.l.b16 %v1505
        %v1528 = vunpack.c.l.b16 %v1506
        %v1529 = vunpack.c.l.b16 %v1507
        %v1530 = vunpack.c.l.b16 %v1508
        %v1531 = vunpack.c.l.b16 %v1509
        %v1532 = vunpack.c.l.b16 %v1510
        %v1533 = vunpack.c.l.b16 %v1511
        %v1534 = vunpack.c.l.b16 %v1512
        %v1535 = vunpack.c.l.b16 %v1513
        %v1536 = vunpack.c.l.b16 %v1514
        %v1537 = vpack.c.b16 %v1528, %v1527
        %v1538 = vpack.c.b16 %v1530, %v1529
        %v1539 = vpack.c.b16 %v1532, %v1531
        %v1540 = vpack.c.b16 %v1534, %v1533
        %v1541 = vpack.c.b16 %v1536, %v1535
        %v1543 = vshrl.u32 %v1537, 16
        %v1545 = vshll.u32 %v1537, 16
        %v1547 = vrot.slane %v1545, 1
        %v1548 = vor.u32 %v1543, %v1547
        %v1550 = vshll.u32 %v1538, 16
        %v1552 = vrot.slane %v1550, 1
        %v1553 = vsel %vm748, %v1548, %v1552
        %v1554 = vshrl.u32 %v1538, 16
        %v1556 = vor.u32 %v1554, %v1552
        %v1558 = vshll.u32 %v1539, 16
        %v1560 = vrot.slane %v1558, 1
        %v1561 = vsel %vm748, %v1556, %v1560
        %v1562 = vshrl.u32 %v1539, 16
        %v1564 = vor.u32 %v1562, %v1560
        %v1566 = vshll.u32 %v1540, 16
        %v1568 = vrot.slane %v1566, 1
        %v1569 = vsel %vm748, %v1564, %v1568
        %v1570 = vshrl.u32 %v1540, 16
        %v1572 = vor.u32 %v1570, %v1568
        %v1574 = vshll.u32 %v1541, 16
        %v1576 = vrot.slane %v1574, 1
        %v1577 = vsel %vm748, %v1572, %v1576
        %v1578 = vshrl.u32 %v1541, 16
        %v1580 = vor.u32 %v1578, %v1576
        %v1582 = vsel %vm506, %v1553, 0
        %v1585 = vsel %vm506, %v1561, 0
        %v1588 = vsel %vm506, %v1569, 0
        %v1591 = vsel %vm506, %v1577, 0
        %v1594 = vsel %vm506, %v1580, 0
        %v1597 = vsel %vm522, %v1516, 0
        %1599 = vmatprep.subr.bf16.mxu0 0
        %1600 = vmatpush1.bf16.msra.mxu0 0
        %1601 = vmatprep.subr.bf16.mxu0 0
        %1602 = vmatpush1.bf16.msra.mxu0 0
        %1603 = vmatprep.subr.bf16.mxu0 0
        %1604 = vmatpush1.bf16.msra.mxu0 0
        %1605 = vmatprep.subr.bf16.mxu0 0
        %1606 = vmatpush1.bf16.msra.mxu0 0
        %1607 = vmatprep.subr.bf16.mxu0 0
        %1608 = vmatpush1.bf16.msra.mxu0 0
        %1609 = vmatprep.subr.bf16.mxu0 0
        %1610 = vmatpush1.bf16.msra.mxu0 0
        %1611 = vmatprep.subr.bf16.mxu0 0
        %1612 = vmatpush1.bf16.msra.mxu0 0
        %1613 = vmatprep.subr.bf16.mxu0 0
        %1614 = vmatpush1.bf16.msra.mxu0 %v1597
        %1615 = vmatprep.subr.bf16.mxu0 0
        %1616 = vmatpush2.bf16.msra.mxu0 0
        %1617 = vmatprep.subr.bf16.mxu0 0
        %1618 = vmatpush2.bf16.msra.mxu0 0
        %1619 = vmatprep.subr.bf16.mxu0 0
        %1620 = vmatpush2.bf16.msra.mxu0 0
        %1621 = vmatprep.subr.bf16.mxu0 0
        %1622 = vmatpush2.bf16.msra.mxu0 0
        %1623 = vmatprep.subr.bf16.mxu0 0
        %1624 = vmatpush2.bf16.msra.mxu0 0
        %1625 = vmatprep.subr.bf16.mxu0 0
        %1626 = vmatpush2.bf16.msra.mxu0 0
        %1627 = vmatprep.subr.bf16.mxu0 0
        %1628 = vmatpush2.bf16.msra.mxu0 0
        %1629 = vmatprep.subr.bf16.mxu0 0
        %1630 = vmatpush2.bf16.msra.mxu0 0
        %1631 = vmatprep.mubr.bf16.mxu0 0
        %1632 = vmatmul.mubr.bf16.gmra.mxu0 %v1582
        %v1633 = vpop.f32.mrf.mxu0
        %v1634 = vadd.f32 0.0, %v1633
        %v1635 = vpop.f32.mrf.mxu0
        %v1636 = vpop.f32.mrf.mxu0
        %v1637 = vadd.f32 0.0, %v1636
        %v1638 = vpop.f32.mrf.mxu0
        %1639 = vmatprep.mubr.bf16.mxu0 0
        %1640 = vmatmul.mubr.bf16.gmra.mxu0 %v1585
        %v1641 = vpop.f32.mrf.mxu0
        %v1642 = vadd.f32 0.0, %v1641
        %v1643 = vpop.f32.mrf.mxu0
        %v1644 = vpop.f32.mrf.mxu0
        %v1645 = vadd.f32 0.0, %v1644
        %v1646 = vpop.f32.mrf.mxu0
        %1647 = vmatprep.mubr.bf16.mxu0 0
        %1648 = vmatmul.mubr.bf16.gmra.mxu0 %v1588
        %v1649 = vpop.f32.mrf.mxu0
        %v1650 = vadd.f32 0.0, %v1649
        %v1651 = vpop.f32.mrf.mxu0
        %v1652 = vpop.f32.mrf.mxu0
        %v1653 = vadd.f32 0.0, %v1652
        %v1654 = vpop.f32.mrf.mxu0
        %1655 = vmatprep.mubr.bf16.mxu0 0
        %1656 = vmatmul.mubr.bf16.gmra.mxu0 %v1591
        %v1657 = vpop.f32.mrf.mxu0
        %v1658 = vadd.f32 0.0, %v1657
        %v1659 = vpop.f32.mrf.mxu0
        %v1660 = vpop.f32.mrf.mxu0
        %v1661 = vadd.f32 0.0, %v1660
        %v1662 = vpop.f32.mrf.mxu0
        %1663 = vmatprep.mubr.bf16.mxu0 0
        %1664 = vmatmul.mubr.bf16.gmra.mxu0 %v1594
        %v1665 = vpop.f32.mrf.mxu0
        %v1666 = vadd.f32 0.0, %v1665
        %v1667 = vpop.f32.mrf.mxu0
        %v1668 = vpop.f32.mrf.mxu0
        %v1669 = vpop.f32.mrf.mxu0
        %1670 = vdwg.mxu0
        %v1671 = vadd.f32 %v1496, %v1634
        %v1672 = vadd.f32 %v1497, %v1637
        %v1673 = vadd.f32 %v1498, %v1642
        %v1674 = vadd.f32 %v1499, %v1645
        %v1675 = vadd.f32 %v1500, %v1650
        %v1676 = vadd.f32 %v1501, %v1653
        %v1677 = vadd.f32 %v1502, %v1658
        %v1678 = vadd.f32 %v1503, %v1661
        %v1679 = vadd.f32 %v1504, %v1666
        %v1680 = vld [vmem:[%s412 + $0x4] sm:$0xe]
        %s1681 = scalar_lea.vmem %s448, 32
        %v1682 = vld [vmem:[%s1681] sm:$0xf]
        %v1684 = vunpack.c.l.b16 %v1680
        %v1685 = vpack.c.b16 %v1353, %v1684
        %vm1686 = vcmask 1046528
        %v1687 = vrot.slane %v1685, 1
        %v1688 = vrot.slane %v1363, 1
        %v1689 = vsel %vm1686, %v1687, %v1688
        %v1690 = vrot.slane %v1364, 1
        %v1691 = vsel %vm1686, %v1688, %v1690
        %v1692 = vrot.slane %v1365, 1
        %v1693 = vsel %vm1686, %v1690, %v1692
        %v1694 = vrot.slane %v1366, 1
        %v1695 = vsel %vm1686, %v1692, %v1694
        %v1697 = vsel %vm506, %v1689, 0
        %v1700 = vsel %vm506, %v1691, 0
        %v1703 = vsel %vm506, %v1693, 0
        %v1706 = vsel %vm506, %v1695, 0
        %v1709 = vsel %vm506, %v1694, 0
        %v1712 = vsel %vm522, %v1682, 0
        %1714 = vmatprep.subr.bf16.mxu0 0
        %1715 = vmatpush1.bf16.msra.mxu0 0
        %1716 = vmatprep.subr.bf16.mxu0 0
        %1717 = vmatpush1.bf16.msra.mxu0 0
        %1718 = vmatprep.subr.bf16.mxu0 0
        %1719 = vmatpush1.bf16.msra.mxu0 0
        %1720 = vmatprep.subr.bf16.mxu0 0
        %1721 = vmatpush1.bf16.msra.mxu0 0
        %1722 = vmatprep.subr.bf16.mxu0 0
        %1723 = vmatpush1.bf16.msra.mxu0 0
        %1724 = vmatprep.subr.bf16.mxu0 0
        %1725 = vmatpush1.bf16.msra.mxu0 0
        %1726 = vmatprep.subr.bf16.mxu0 0
        %1727 = vmatpush1.bf16.msra.mxu0 0
        %1728 = vmatprep.subr.bf16.mxu0 0
        %1729 = vmatpush1.bf16.msra.mxu0 %v1712
        %1730 = vmatprep.subr.bf16.mxu0 0
        %1731 = vmatpush2.bf16.msra.mxu0 0
        %1732 = vmatprep.subr.bf16.mxu0 0
        %1733 = vmatpush2.bf16.msra.mxu0 0
        %1734 = vmatprep.subr.bf16.mxu0 0
        %1735 = vmatpush2.bf16.msra.mxu0 0
        %1736 = vmatprep.subr.bf16.mxu0 0
        %1737 = vmatpush2.bf16.msra.mxu0 0
        %1738 = vmatprep.subr.bf16.mxu0 0
        %1739 = vmatpush2.bf16.msra.mxu0 0
        %1740 = vmatprep.subr.bf16.mxu0 0
        %1741 = vmatpush2.bf16.msra.mxu0 0
        %1742 = vmatprep.subr.bf16.mxu0 0
        %1743 = vmatpush2.bf16.msra.mxu0 0
        %1744 = vmatprep.subr.bf16.mxu0 0
        %1745 = vmatpush2.bf16.msra.mxu0 0
        %1746 = vmatprep.mubr.bf16.mxu0 0
        %1747 = vmatmul.mubr.bf16.gmra.mxu0 %v1697
        %v1748 = vpop.f32.mrf.mxu0
        %v1749 = vadd.f32 0.0, %v1748
        %v1750 = vpop.f32.mrf.mxu0
        %v1751 = vpop.f32.mrf.mxu0
        %v1752 = vadd.f32 0.0, %v1751
        %v1753 = vpop.f32.mrf.mxu0
        %1754 = vmatprep.mubr.bf16.mxu0 0
        %1755 = vmatmul.mubr.bf16.gmra.mxu0 %v1700
        %v1756 = vpop.f32.mrf.mxu0
        %v1757 = vadd.f32 0.0, %v1756
        %v1758 = vpop.f32.mrf.mxu0
        %v1759 = vpop.f32.mrf.mxu0
        %v1760 = vadd.f32 0.0, %v1759
        %v1761 = vpop.f32.mrf.mxu0
        %1762 = vmatprep.mubr.bf16.mxu0 0
        %1763 = vmatmul.mubr.bf16.gmra.mxu0 %v1703
        %v1764 = vpop.f32.mrf.mxu0
        %v1765 = vadd.f32 0.0, %v1764
        %v1766 = vpop.f32.mrf.mxu0
        %v1767 = vpop.f32.mrf.mxu0
        %v1768 = vadd.f32 0.0, %v1767
        %v1769 = vpop.f32.mrf.mxu0
        %1770 = vmatprep.mubr.bf16.mxu0 0
        %1771 = vmatmul.mubr.bf16.gmra.mxu0 %v1706
        %v1772 = vpop.f32.mrf.mxu0
        %v1773 = vadd.f32 0.0, %v1772
        %v1774 = vpop.f32.mrf.mxu0
        %v1775 = vpop.f32.mrf.mxu0
        %v1776 = vadd.f32 0.0, %v1775
        %v1777 = vpop.f32.mrf.mxu0
        %1778 = vmatprep.mubr.bf16.mxu0 0
        %1779 = vmatmul.mubr.bf16.gmra.mxu0 %v1709
        %v1780 = vpop.f32.mrf.mxu0
        %v1781 = vadd.f32 0.0, %v1780
        %v1782 = vpop.f32.mrf.mxu0
        %v1783 = vpop.f32.mrf.mxu0
        %v1784 = vpop.f32.mrf.mxu0
        %1785 = vdwg.mxu0
        %v1786 = vadd.f32 %v1671, %v1749
        %v1787 = vadd.f32 %v1672, %v1752
        %v1788 = vadd.f32 %v1673, %v1757
        %v1789 = vadd.f32 %v1674, %v1760
        %v1790 = vadd.f32 %v1675, %v1765
        %v1791 = vadd.f32 %v1676, %v1768
        %v1792 = vadd.f32 %v1677, %v1773
        %v1793 = vadd.f32 %v1678, %v1776
        %v1794 = vadd.f32 %v1679, %v1781
        %v1795 = vld [vmem:[%s451] sm:$0x1]
        %v1797 = vlaneseq
        %v1798 = vshrl.u32 %v1797, 7
        %v1799 = vsub.s32 0, %v1798
        %v1800 = vrot.slane %v1795, %v1799
        %v1802 = vadd.f32 %v1786, %v1800
        %v1803 = vadd.f32 %v1787, %v1800
        %v1804 = vadd.f32 %v1788, %v1800
        %v1805 = vadd.f32 %v1789, %v1800
        %v1806 = vadd.f32 %v1790, %v1800
        %v1807 = vadd.f32 %v1791, %v1800
        %v1808 = vadd.f32 %v1792, %v1800
        %v1809 = vadd.f32 %v1793, %v1800
        %v1810 = vadd.f32 %v1794, %v1800
        %v1811 = vmax.f32 %v1802, 0.0
        %v1812 = vmax.f32 %v1803, 0.0
        %v1813 = vmax.f32 %v1804, 0.0
        %v1814 = vmax.f32 %v1805, 0.0
        %v1815 = vmax.f32 %v1806, 0.0
        %v1816 = vmax.f32 %v1807, 0.0
        %v1817 = vmax.f32 %v1808, 0.0
        %v1818 = vmax.f32 %v1809, 0.0
        %v1819 = vmax.f32 %v1810, 0.0
        %v1820 = vpack.c.bf16 %v1812, %v1811
        %v1821 = vpack.c.bf16 %v1814, %v1813
        %v1822 = vpack.c.bf16 %v1816, %v1815
        %v1823 = vpack.c.bf16 %v1818, %v1817
        %v1824 = vpack.c.bf16 %v1819, %v1819
        %v1830 = vunpack.c.l.b16 %v1820
        %v1831 = vunpack.c.h.b16 %v1820
        %v1832 = vunpack.c.l.b16 %v1821
        %v1833 = vunpack.c.h.b16 %v1821
        %v1834 = vunpack.c.l.b16 %v1822
        %v1835 = vunpack.c.h.b16 %v1822
        %v1836 = vunpack.c.l.b16 %v1823
        %v1837 = vunpack.c.h.b16 %v1823
        %v1838 = vunpack.c.l.b16 %v1824
        %v1839 = vpack.c.b16 %v1830, %v1830
        %v1840 = vpack.c.b16 %v1831, %v1831
        %v1841 = vpack.c.b16 %v1832, %v1832
        %v1842 = vpack.c.b16 %v1833, %v1833
        %v1843 = vpack.c.b16 %v1834, %v1834
        %v1844 = vpack.c.b16 %v1835, %v1835
        %v1845 = vpack.c.b16 %v1836, %v1836
        %v1846 = vpack.c.b16 %v1837, %v1837
        %v1847 = vpack.c.b16 %v1838, %v1838
        %vm1857 = vcmask 60416
        %1858 = vst.msk [vmem:[%s459] sm:$0xf] %vm1857, %v1839
        %1859 = vst.msk [vmem:[%s459 + $0x4] sm:$0xf] %vm1857, %v1840
        %1860 = vst.msk [vmem:[%s459 + $0x8] sm:$0xf] %vm1857, %v1841
        %1861 = vst.msk [vmem:[%s459 + $0xc] sm:$0xf] %vm1857, %v1842
        %1862 = vst.msk [vmem:[%s459 + $0x10] sm:$0xf] %vm1857, %v1843
        %1863 = vst.msk [vmem:[%s459 + $0x14] sm:$0xf] %vm1857, %v1844
        %1864 = vst.msk [vmem:[%s459 + $0x18] sm:$0xf] %vm1857, %v1845
        %1865 = vst.msk [vmem:[%s459 + $0x1c] sm:$0xf] %vm1857, %v1846
        %1866 = vst.msk [vmem:[%s459 + $0x20] sm:$0xf] %vm1857, %v1847
        %p1867 = scmp.lt.s32.totalorder %s18, 1
        %s1868 = scalar_select %p1867, %s18, 1
        %p1869 = scmp.lt.s32.totalorder %s19, 0
        %s1870 = scalar_select %p1869, %s19, 0
        %s1871 = smul.addr %s1868, 9
        %s1872 = sadd.s32 %s1870, %s1871
        %s1873 = smul.addr %s1872, 4
        %s1874 = scalar_lea.vmem %s3, %s1873
        // Predicated region
        $region74: #{bottleneck_forward.5} parent=68 // pred_check
          %p1875 = pneg %p126
        $region75: #{bottleneck_forward.5} parent=68 // pred_check_branch
          %1877 = sbr.rel (%p1875) target = $region77
        $region76: #{bottleneck_forward.5} parent=68 // pred_region
          _
        $region77: #{bottleneck_forward.5} parent=68 // pred_fallthru
          _
      $region69: #{bottleneck_forward.5} parent=5 // pred_fallthru
        _
      %p1878 = scmp.le.s32.totalorder 2, %s9
      // Predicated region
      $region78: #{bottleneck_forward.5} parent=5 // pred_check
        %p1879 = pneg %p1878
      $region79: #{bottleneck_forward.5} parent=5 // pred_check_branch
        %1881 = sbr.rel (%p1879) target = $region81
      $region80: #{bottleneck_forward.5} parent=5 // pred_region
        %s1882 = ssub.s32 %s9, 2
        // Predicated region
        $region82: #{bottleneck_forward.5} parent=80 // pred_check
          %p1883 = pneg %p132
        $region83: #{bottleneck_forward.5} parent=80 // pred_check_branch
          %1885 = sbr.rel (%p1883) target = $region85
        $region84: #{bottleneck_forward.5} parent=80 // pred_region
          %p1886 = scmp.lt.s32.totalorder %s20, 1
          %s1887 = scalar_select %p1886, %s20, 1
          %p1888 = scmp.lt.s32.totalorder %s21, 0
          %s1889 = scalar_select %p1888, %s21, 0
          %s1890 = smul.addr %s1887, 9
          %s1891 = sadd.s32 %s1889, %s1890
          %s1892 = smul.addr %s1891, 4
          %s1893 = scalar_lea.vmem %s3, %s1892
        $region85: #{bottleneck_forward.5} parent=80 // pred_fallthru
          _
      $region81: #{bottleneck_forward.5} parent=5 // pred_fallthru
        _
    $region6: #{bottleneck_forward.5} parent=1 // loop_footer
      %s13 = sadd.s32 1, %s9
    $region7: #{bottleneck_forward.5} parent=1 // loop_footer_branch
      %8 = sbr.rel target = $region3
    $region8: #{bottleneck_forward.5} parent=1 // loop_exit
      _

</llo_original>
